<compile_context>
chip_gen: v7x
topology: tpu7x:2x2x1
jax: 0.10.0
libtpu: 0.0.40
codegen_flags: <defaults>
</compile_context>

<pallas_src>
import functools
import numpy as np
import jax
import jax.numpy as jnp
from jax import lax
from jax.experimental import pallas as pl
from jax.experimental.pallas import tpu as pltpu


def _silu(x):
    return x * jax.nn.sigmoid(x)


def _psa_kernel(x_ref, wcv1_ref, wqk_ref, wvp_ref, wf1_ref, wf2_ref, wcv2_ref,
                wpe_ref, hmask_ref, bias_ref, o_ref, *, W, num_heads):
    bt, N, C1 = x_ref.shape
    c = wcv1_ref.shape[2]
    nh = num_heads
    nh_kd = wqk_ref.shape[2]
    kd = nh_kd // nh
    hd = c // nh
    M = bt * N
    f32 = jnp.float32
    bf16 = jnp.bfloat16

    def bias(row, width):
        return bias_ref[row:row + 1, :width]                         # (1, width) f32

    x = x_ref[...].reshape(M, C1)                                    # bf16, free reshape

    # ---- cv1 (1x1 + BN + SiLU); weights pre-split into a / b halves --------
    a = _silu(jnp.dot(x, wcv1_ref[0], preferred_element_type=f32) + bias(0, c))
    b0 = _silu(jnp.dot(x, wcv1_ref[1], preferred_element_type=f32) + bias(1, c))

    # ---- attention inputs: q / k / v as lane-contiguous matmuls ------------
    # (the softmax scale is folded into the q weights/bias on the host)
    b0b = b0.astype(bf16)
    q = jnp.dot(b0b, wqk_ref[0], preferred_element_type=f32) + bias(2, nh_kd)
    k = jnp.dot(b0b, wqk_ref[1], preferred_element_type=f32) + bias(3, nh_kd)
    v = jnp.dot(b0b, wvp_ref[0], preferred_element_type=f32) + bias(4, c)

    q3 = q.reshape(bt, N, nh_kd).astype(bf16)
    k3 = k.reshape(bt, N, nh_kd).astype(bf16)
    v3 = v.reshape(bt, N, c)                                         # f32 (pe needs it)

    # Per-tap row masks for the depthwise 3x3 "pe" conv (shared by all images):
    # vertical / image bounds from an in-kernel iota, horizontal (left / right
    # image edge) from the tiny host-provided hmask.
    n_loc = lax.broadcasted_iota(jnp.int32, (N, 1), 0)
    wpe = wpe_ref[...]                                               # (9, c) f32
    ml = hmask_ref[0]                                                # (N, 1): w != 0
    mr = hmask_ref[1]                                                # (N, 1): w != W-1
    taps = []
    for dy in range(3):
        for dx in range(3):
            s_off = (dy - 1) * W + (dx - 1)
            m = ((n_loc + s_off >= 0) & (n_loc + s_off < N)).astype(f32)
            if dx == 0:
                m = m * ml
            elif dx == 2:
                m = m * mr
            taps.append((s_off, m))

    parts = []
    for b in range(bt):                                              # bt is small & static
        qb, kb, vb = q3[b], k3[b], v3[b]

        # -- per-head softmax attention (per image) --
        houts = []
        for h in range(nh):
            qh = qb[:, h * kd:(h + 1) * kd]
            k_h = kb[:, h * kd:(h + 1) * kd]
            vh = vb[:, h * hd:(h + 1) * hd].astype(bf16)
            s = lax.dot_general(qh, k_h, (((1,), (1,)), ((), ())),
                                preferred_element_type=f32)          # (N, N)
            s = s - jnp.max(s, axis=-1, keepdims=True)
            p = jnp.exp(s)
            p = p * pl.reciprocal(jnp.sum(p, axis=-1, keepdims=True), approx=True)
            houts.append(jnp.dot(p.astype(bf16), vh, preferred_element_type=f32))
        attn_b = houts[0] if nh == 1 else jnp.concatenate(houts, axis=-1)   # (N, c)

        # -- pe: depthwise 3x3 on v via XLU rolls + masked taps (no scratch) --
        pe_b = jnp.zeros((N, c), f32)
        for t, (s_off, m) in enumerate(taps):
            tap = vb if s_off == 0 else pltpu.roll(vb, (-s_off) % N, axis=0)
            pe_b = pe_b + tap * m * wpe[t]

        parts.append(attn_b + pe_b)

    attpe = parts[0] if bt == 1 else jnp.concatenate(parts, axis=0)  # (M, c)
    attpe = attpe + bias(5, c)                                       # pe BN bias

    # ---- proj (1x1, no act) and first residual ------------------------------
    att = jnp.dot(attpe.astype(bf16), wvp_ref[1], preferred_element_type=f32) + bias(6, c)
    b1 = b0 + att

    # ---- FFN: 1x1 (SiLU) -> 1x1 (no act), second residual -------------------
    f = _silu(jnp.dot(b1.astype(bf16), wf1_ref[...], preferred_element_type=f32)
              + bias(7, 2 * c))
    f = jnp.dot(f.astype(bf16), wf2_ref[...], preferred_element_type=f32) + bias(8, c)
    b2 = b1 + f

    # ---- cv2 on [a | b2]: two K=c matmuls (avoids the lane concat) + SiLU ---
    out = (jnp.dot(a.astype(bf16), wcv2_ref[0], preferred_element_type=f32)
           + jnp.dot(b2.astype(bf16), wcv2_ref[1], preferred_element_type=f32)
           + bias(9, C1))
    out = _silu(out)
    o_ref[...] = out.reshape(bt, N, C1)


def psa_forward(x_nchw, P):
    B, C1, H, W = x_nchw.shape
    c = C1 // 2
    N = H * W
    assert c % 64 == 0, "PSA requires c = c1 // 2 to be a multiple of 64"
    nh = c // 64
    hd = c // nh
    kd = hd // 2
    nh_kd = nh * kd
    scale = float(kd) ** -0.5
    eps = 1e-5
    f32 = jnp.float32
    bf16 = jnp.bfloat16

    def fold_1x1(name):
        w, g, beta, m, var = (P[name + "_w"], P[name + "_g"], P[name + "_beta"],
                              P[name + "_m"], P[name + "_v"])
        s = g / jnp.sqrt(var + eps)
        wm = (w[:, :, 0, 0] * s[:, None]).T                          # (Cin, Cout)
        return wm.astype(f32), (beta - m * s).astype(f32)

    w_cv1, b_cv1 = fold_1x1("cv1")
    w_qkv, b_qkv = fold_1x1("qkv")
    w_proj, b_proj = fold_1x1("proj")
    w_f1, b_f1 = fold_1x1("ffn1")
    w_f2, b_f2 = fold_1x1("ffn2")
    w_cv2, b_cv2 = fold_1x1("cv2")

    s_pe = P["pe_g"] / jnp.sqrt(P["pe_v"] + eps)
    w_pe = (P["pe_w"][:, 0].reshape(c, 9) * s_pe[:, None]).T         # (9, c)
    b_pe = P["pe_beta"] - P["pe_m"] * s_pe

    # qkv output channels are per-head [q(kd) | k(kd) | v(hd)]; regroup them
    # head-major on the host so the kernel gets three lane-contiguous matmuls.
    per = 2 * kd + hd
    q_cols = np.concatenate([np.arange(h * per, h * per + kd) for h in range(nh)])
    k_cols = q_cols + kd
    v_cols = np.concatenate([np.arange(h * per + 2 * kd, (h + 1) * per) for h in range(nh)])

    # Packed bf16 weights (f32 folding done above, cast once here).
    wcv1 = jnp.stack([w_cv1[:, :c], w_cv1[:, c:]]).astype(bf16)             # (2, C1, c)
    wqk = jnp.stack([w_qkv[:, q_cols] * scale, w_qkv[:, k_cols]]).astype(bf16)  # (2, c, nh_kd)
    wvp = jnp.stack([w_qkv[:, v_cols], w_proj]).astype(bf16)                # (2, c, c)
    wf1 = w_f1.astype(bf16)                                                 # (c, 2c)
    wf2 = w_f2.astype(bf16)                                                 # (2c, c)
    wcv2 = jnp.stack([w_cv2[:c], w_cv2[c:]]).astype(bf16)                   # (2, c, C1)
    wpe = w_pe.astype(f32)                                                  # (9, c)

    # All biases packed into one (10, width) f32 matrix (rows zero-padded).
    bias_w = max(2 * c, C1)

    def pad_row(bv):
        bv = bv.astype(f32).reshape(-1)
        return jnp.pad(bv, (0, bias_w - bv.shape[0]))

    biases = jnp.stack([pad_row(bv) for bv in
                        (b_cv1[:c], b_cv1[c:], b_qkv[q_cols] * scale, b_qkv[k_cols],
                         b_qkv[v_cols], b_pe, b_proj, b_f1, b_f2, b_cv2)])   # (10, bias_w)

    # Horizontal-boundary masks for the depthwise 3x3 (left / right image edge).
    w_of_n = np.arange(N) % W
    hmask = jnp.asarray(np.stack([(w_of_n != 0), (w_of_n != W - 1)])
                        .astype(np.float32)[:, :, None])                    # (2, N, 1)

    # Fold batch elements into the matmul rows: largest divisor of B with
    # bt*N <= 512 rows.  Keeps the MXU fed and amortizes per-step overhead;
    # for larger B the grid still has several "parallel" steps (megacore /
    # v7x dual-TC).  At B=2, N=64 the whole problem is one small step.
    bt = 1
    for d in range(1, B + 1):
        if B % d == 0 and d * N <= 512:
            bt = d
    grid = (B // bt,)

    x = jnp.transpose(x_nchw, (0, 2, 3, 1)).reshape(B, N, C1).astype(bf16)

    kernel = functools.partial(_psa_kernel, W=W, num_heads=nh)

    def bcast(arr):
        return pl.BlockSpec(arr.shape, lambda i, _nd=arr.ndim: (0,) * _nd)

    out = pl.pallas_call(
        kernel,
        out_shape=jax.ShapeDtypeStruct((B, N, C1), f32),
        grid=grid,
        in_specs=[
            pl.BlockSpec((bt, N, C1), lambda i: (i, 0, 0)),                 # x
            bcast(wcv1), bcast(wqk), bcast(wvp), bcast(wf1), bcast(wf2),
            bcast(wcv2), bcast(wpe), bcast(hmask), bcast(biases),
        ],
        out_specs=pl.BlockSpec((bt, N, C1), lambda i: (i, 0, 0)),
        compiler_params=pltpu.CompilerParams(
            dimension_semantics=("parallel",)),
    )(x, wcv1, wqk, wvp, wf1, wf2, wcv2, wpe, hmask, biases)

    return jnp.transpose(out.reshape(B, H, W, C1), (0, 3, 1, 2))            # back to NCHW


# ----------------------------------------------------------------------------
# Pure-JAX reference (mirrors the PyTorch forward, eval-mode BatchNorm)
# ----------------------------------------------------------------------------
def reference(x, P):
    eps = 1e-5
    hp = lax.Precision.HIGHEST
    dn = ("NCHW", "OIHW", "NCHW")

    def conv_bn(x, name, groups=1, pad=0, silu=False):
        w, g, beta, m, v = (P[name + "_w"], P[name + "_g"], P[name + "_beta"],
                            P[name + "_m"], P[name + "_v"])
        y = lax.conv_general_dilated(x, w, (1, 1), ((pad, pad), (pad, pad)),
                                     feature_group_count=groups,
                                     dimension_numbers=dn, precision=hp)
        sh = (1, -1, 1, 1)
        y = (y - m.reshape(sh)) / jnp.sqrt(v.reshape(sh) + eps) * g.reshape(sh) + beta.reshape(sh)
        if silu:
            y = y * jax.nn.sigmoid(y)
        return y

    B, C1, H, W = x.shape
    c = C1 // 2
    N = H * W
    nh = c // 64
    hd = c // nh
    kd = hd // 2
    scale = float(kd) ** -0.5

    y = conv_bn(x, "cv1", silu=True)
    a, b = y[:, :c], y[:, c:]

    qkv = conv_bn(b, "qkv").reshape(B, nh, 2 * kd + hd, N)
    q, k, v = qkv[:, :, :kd], qkv[:, :, kd:2 * kd], qkv[:, :, 2 * kd:]
    attn = jnp.einsum("bhdi,bhdj->bhij", q, k, precision=hp) * scale
    attn = jax.nn.softmax(attn, axis=-1)
    o = jnp.einsum("bhdj,bhij->bhdi", v, attn, precision=hp).reshape(B, c, H, W)
    o = o + conv_bn(v.reshape(B, c, H, W), "pe", groups=c, pad=1)
    o = conv_bn(o, "proj")
    b = b + o

    f = conv_bn(b, "ffn1", silu=True)
    f = conv_bn(f, "ffn2")
    b = b + f

    return conv_bn(jnp.concatenate([a, b], axis=1), "cv2", silu=True)


# ----------------------------------------------------------------------------
if __name__ == "__main__":
    # PSA needs c = c1 * 0.5 divisible by 64 (num_heads = c // 64) -> c1 = 128.
    B, C1, H, W = 2, 128, 8, 8
    c = C1 // 2

    key = jax.random.PRNGKey(0)
    keys = iter(jax.random.split(key, 64))

    def nrm(shape, s=0.1):
        return (jax.random.normal(next(keys), shape) * s).astype(jnp.float32)

    P = {}

    def add_conv(name, cout, cin, k=1):
        P[name + "_w"] = nrm((cout, cin, k, k))
        P[name + "_g"] = 1.0 + nrm((cout,))
        P[name + "_beta"] = nrm((cout,))
        P[name + "_m"] = nrm((cout,))
        P[name + "_v"] = jax.random.uniform(next(keys), (cout,),
                                            minval=0.5, maxval=1.5).astype(jnp.float32)

    add_conv("cv1", 2 * c, C1)          # Conv(c1, 2c, 1) + BN + SiLU
    add_conv("qkv", 2 * c, c)           # Attention.qkv (no act)
    add_conv("pe", c, 1, k=3)           # Attention.pe depthwise 3x3 (no act)
    add_conv("proj", c, c)              # Attention.proj (no act)
    add_conv("ffn1", 2 * c, c)          # ffn[0] + SiLU
    add_conv("ffn2", c, 2 * c)          # ffn[1] (no act)
    add_conv("cv2", C1, 2 * c)          # Conv(2c, c1, 1) + BN + SiLU

    x = jax.random.normal(next(keys), (B, C1, H, W), jnp.float32)

    out = jax.block_until_ready(jax.jit(psa_forward)(x, P))
    ref = jax.block_until_ready(reference(x, P))

    assert out.shape == (B, C1, H, W)
    # bf16 MXU operands (f32 accumulation) -> tolerance slightly looser than f32.
    np.testing.assert_allclose(np.asarray(out), np.asarray(ref), rtol=3e-2, atol=3e-2)

    # TODO(synk): BatchNorm is reproduced in eval mode (running stats folded);
    # training-mode batch statistics are not computed in-kernel.
    print("KERNEL_OK")
</pallas_src>

<mosaic_0001>
module attributes {stable_mosaic.version = 11 : i64} {
  func.func @_psa_kernel(%arg0: i32, %arg1: memref<2x64x128xbf16, #tpu.memory_space<vmem>>, %arg2: memref<2x128x64xbf16, #tpu.memory_space<vmem>>, %arg3: memref<2x64x32xbf16, #tpu.memory_space<vmem>>, %arg4: memref<2x64x64xbf16, #tpu.memory_space<vmem>>, %arg5: memref<64x128xbf16, #tpu.memory_space<vmem>>, %arg6: memref<128x64xbf16, #tpu.memory_space<vmem>>, %arg7: memref<2x64x128xbf16, #tpu.memory_space<vmem>>, %arg8: memref<9x64xf32, #tpu.memory_space<vmem>>, %arg9: memref<2x64x1xf32, #tpu.memory_space<vmem>>, %arg10: memref<10x128xf32, #tpu.memory_space<vmem>>, %arg11: memref<2x64x128xf32, #tpu.memory_space<vmem>>) attributes {dimension_semantics = [#tpu.dimension_semantics<parallel>], iteration_bounds = array<i64: 1>, scalar_prefetch = 0 : i64, scratch_operands = 0 : i64, tpu.core_type = #tpu.core_type<tc>, window_params = [{transform_indices = @transform_0, window_bounds = array<i64: 2, 64, 128>}, {pipeline_mode = #tpu.pipeline_mode<synchronous>, transform_indices = @transform_1, window_bounds = array<i64: 2, 128, 64>}, {pipeline_mode = #tpu.pipeline_mode<synchronous>, transform_indices = @transform_2, window_bounds = array<i64: 2, 64, 32>}, {pipeline_mode = #tpu.pipeline_mode<synchronous>, transform_indices = @transform_3, window_bounds = array<i64: 2, 64, 64>}, {pipeline_mode = #tpu.pipeline_mode<synchronous>, transform_indices = @transform_4, window_bounds = array<i64: 64, 128>}, {pipeline_mode = #tpu.pipeline_mode<synchronous>, transform_indices = @transform_5, window_bounds = array<i64: 128, 64>}, {pipeline_mode = #tpu.pipeline_mode<synchronous>, transform_indices = @transform_6, window_bounds = array<i64: 2, 64, 128>}, {pipeline_mode = #tpu.pipeline_mode<synchronous>, transform_indices = @transform_7, window_bounds = array<i64: 9, 64>}, {pipeline_mode = #tpu.pipeline_mode<synchronous>, transform_indices = @transform_8, window_bounds = array<i64: 2, 64, 1>}, {pipeline_mode = #tpu.pipeline_mode<synchronous>, transform_indices = @transform_9, window_bounds = array<i64: 10, 128>}, {transform_indices = @transform_10, window_bounds = array<i64: 2, 64, 128>}]} {
    %c0 = arith.constant 0 : index
    %c0_0 = arith.constant 0 : index
    %c0_1 = arith.constant 0 : index
    %0 = vector.load %arg1[%c0, %c0_0, %c0_1] : memref<2x64x128xbf16, #tpu.memory_space<vmem>>, vector<2x64x128xbf16>
    %1 = vector.shape_cast %0 : vector<2x64x128xbf16> to vector<128x128xbf16>
    %c0_2 = arith.constant 0 : index
    %c0_3 = arith.constant 0 : index
    %c0_4 = arith.constant 0 : index
    %2 = vector.load %arg2[%c0_2, %c0_3, %c0_4] : memref<2x128x64xbf16, #tpu.memory_space<vmem>>, vector<1x128x64xbf16>
    %3 = vector.shape_cast %2 : vector<1x128x64xbf16> to vector<128x64xbf16>
    %cst = arith.constant dense<0.000000e+00> : vector<128x64xf32>
    %4 = tpu.matmul %1, %3, %cst {dimension_numbers = #tpu.dot_dimension_numbers<[1], [0], [0], [1], [0, 0, 1, 1], [], []>} : vector<128x128xbf16>, vector<128x64xbf16>, vector<128x64xf32> -> vector<128x64xf32>
    %c0_5 = arith.constant 0 : index
    %c0_6 = arith.constant 0 : index
    %5 = vector.load %arg10[%c0_5, %c0_6] : memref<10x128xf32, #tpu.memory_space<vmem>>, vector<1x64xf32>
    %6 = vector.broadcast %5 : vector<1x64xf32> to vector<128x64xf32>
    %7 = arith.addf %4, %6 : vector<128x64xf32>
    %8 = arith.negf %7 : vector<128x64xf32>
    %9 = math.exp %8 : vector<128x64xf32>
    %cst_7 = arith.constant 1.000000e+00 : f32
    %10 = vector.broadcast %cst_7 : f32 to vector<128x64xf32>
    %11 = arith.addf %10, %9 : vector<128x64xf32>
    %12 = arith.divf %10, %11 : vector<128x64xf32>
    %13 = arith.mulf %7, %12 : vector<128x64xf32>
    %c1 = arith.constant 1 : index
    %c0_8 = arith.constant 0 : index
    %c0_9 = arith.constant 0 : index
    %14 = vector.load %arg2[%c1, %c0_8, %c0_9] : memref<2x128x64xbf16, #tpu.memory_space<vmem>>, vector<1x128x64xbf16>
    %15 = vector.shape_cast %14 : vector<1x128x64xbf16> to vector<128x64xbf16>
    %cst_10 = arith.constant dense<0.000000e+00> : vector<128x64xf32>
    %16 = tpu.matmul %1, %15, %cst_10 {dimension_numbers = #tpu.dot_dimension_numbers<[1], [0], [0], [1], [0, 0, 1, 1], [], []>} : vector<128x128xbf16>, vector<128x64xbf16>, vector<128x64xf32> -> vector<128x64xf32>
    %c1_11 = arith.constant 1 : index
    %c0_12 = arith.constant 0 : index
    %17 = vector.load %arg10[%c1_11, %c0_12] : memref<10x128xf32, #tpu.memory_space<vmem>>, vector<1x64xf32>
    %18 = vector.broadcast %17 : vector<1x64xf32> to vector<128x64xf32>
    %19 = arith.addf %16, %18 : vector<128x64xf32>
    %20 = arith.negf %19 : vector<128x64xf32>
    %21 = math.exp %20 : vector<128x64xf32>
    %cst_13 = arith.constant 1.000000e+00 : f32
    %22 = vector.broadcast %cst_13 : f32 to vector<128x64xf32>
    %23 = arith.addf %22, %21 : vector<128x64xf32>
    %24 = arith.divf %22, %23 : vector<128x64xf32>
    %25 = arith.mulf %19, %24 : vector<128x64xf32>
    %26 = arith.truncf %25 : vector<128x64xf32> to vector<128x64xbf16>
    %c0_14 = arith.constant 0 : index
    %c0_15 = arith.constant 0 : index
    %c0_16 = arith.constant 0 : index
    %27 = vector.load %arg3[%c0_14, %c0_15, %c0_16] : memref<2x64x32xbf16, #tpu.memory_space<vmem>>, vector<1x64x32xbf16>
    %28 = vector.shape_cast %27 : vector<1x64x32xbf16> to vector<64x32xbf16>
    %cst_17 = arith.constant dense<0.000000e+00> : vector<128x32xf32>
    %29 = tpu.matmul %26, %28, %cst_17 {dimension_numbers = #tpu.dot_dimension_numbers<[1], [0], [0], [1], [0, 0, 1, 1], [], []>} : vector<128x64xbf16>, vector<64x32xbf16>, vector<128x32xf32> -> vector<128x32xf32>
    %c2 = arith.constant 2 : index
    %c0_18 = arith.constant 0 : index
    %30 = vector.load %arg10[%c2, %c0_18] : memref<10x128xf32, #tpu.memory_space<vmem>>, vector<1x32xf32>
    %31 = vector.broadcast %30 : vector<1x32xf32> to vector<128x32xf32>
    %32 = arith.addf %29, %31 : vector<128x32xf32>
    %c1_19 = arith.constant 1 : index
    %c0_20 = arith.constant 0 : index
    %c0_21 = arith.constant 0 : index
    %33 = vector.load %arg3[%c1_19, %c0_20, %c0_21] : memref<2x64x32xbf16, #tpu.memory_space<vmem>>, vector<1x64x32xbf16>
    %34 = vector.shape_cast %33 : vector<1x64x32xbf16> to vector<64x32xbf16>
    %cst_22 = arith.constant dense<0.000000e+00> : vector<128x32xf32>
    %35 = tpu.matmul %26, %34, %cst_22 {dimension_numbers = #tpu.dot_dimension_numbers<[1], [0], [0], [1], [0, 0, 1, 1], [], []>} : vector<128x64xbf16>, vector<64x32xbf16>, vector<128x32xf32> -> vector<128x32xf32>
    %c3 = arith.constant 3 : index
    %c0_23 = arith.constant 0 : index
    %36 = vector.load %arg10[%c3, %c0_23] : memref<10x128xf32, #tpu.memory_space<vmem>>, vector<1x32xf32>
    %37 = vector.broadcast %36 : vector<1x32xf32> to vector<128x32xf32>
    %38 = arith.addf %35, %37 : vector<128x32xf32>
    %c0_24 = arith.constant 0 : index
    %c0_25 = arith.constant 0 : index
    %c0_26 = arith.constant 0 : index
    %39 = vector.load %arg4[%c0_24, %c0_25, %c0_26] : memref<2x64x64xbf16, #tpu.memory_space<vmem>>, vector<1x64x64xbf16>
    %40 = vector.shape_cast %39 : vector<1x64x64xbf16> to vector<64x64xbf16>
    %cst_27 = arith.constant dense<0.000000e+00> : vector<128x64xf32>
    %41 = tpu.matmul %26, %40, %cst_27 {dimension_numbers = #tpu.dot_dimension_numbers<[1], [0], [0], [1], [0, 0, 1, 1], [], []>} : vector<128x64xbf16>, vector<64x64xbf16>, vector<128x64xf32> -> vector<128x64xf32>
    %c4 = arith.constant 4 : index
    %c0_28 = arith.constant 0 : index
    %42 = vector.load %arg10[%c4, %c0_28] : memref<10x128xf32, #tpu.memory_space<vmem>>, vector<1x64xf32>
    %43 = vector.broadcast %42 : vector<1x64xf32> to vector<128x64xf32>
    %44 = arith.addf %41, %43 : vector<128x64xf32>
    %45 = vector.shape_cast %32 : vector<128x32xf32> to vector<2x64x32xf32>
    %46 = arith.truncf %45 : vector<2x64x32xf32> to vector<2x64x32xbf16>
    %47 = vector.shape_cast %38 : vector<128x32xf32> to vector<2x64x32xf32>
    %48 = arith.truncf %47 : vector<2x64x32xf32> to vector<2x64x32xbf16>
    %49 = vector.shape_cast %44 : vector<128x64xf32> to vector<2x64x64xf32>
    %50 = tpu.iota {dimensions = array<i32: 0>} : vector<64x1xi32>
    %c0_29 = arith.constant 0 : index
    %c0_30 = arith.constant 0 : index
    %51 = vector.load %arg8[%c0_29, %c0_30] : memref<9x64xf32, #tpu.memory_space<vmem>>, vector<9x64xf32>
    %c0_31 = arith.constant 0 : index
    %c0_32 = arith.constant 0 : index
    %c0_33 = arith.constant 0 : index
    %52 = vector.load %arg9[%c0_31, %c0_32, %c0_33] : memref<2x64x1xf32, #tpu.memory_space<vmem>>, vector<1x64x1xf32>
    %53 = vector.shape_cast %52 : vector<1x64x1xf32> to vector<64x1xf32>
    %c1_34 = arith.constant 1 : index
    %c0_35 = arith.constant 0 : index
    %c0_36 = arith.constant 0 : index
    %54 = vector.load %arg9[%c1_34, %c0_35, %c0_36] : memref<2x64x1xf32, #tpu.memory_space<vmem>>, vector<1x64x1xf32>
    %55 = vector.shape_cast %54 : vector<1x64x1xf32> to vector<64x1xf32>
    %c-9_i32 = arith.constant -9 : i32
    %56 = vector.broadcast %c-9_i32 : i32 to vector<64x1xi32>
    %57 = arith.addi %50, %56 : vector<64x1xi32>
    %c0_i32 = arith.constant 0 : i32
    %58 = vector.broadcast %c0_i32 : i32 to vector<64x1xi32>
    %59 = arith.cmpi sge, %57, %58 : vector<64x1xi32>
    %c-9_i32_37 = arith.constant -9 : i32
    %60 = vector.broadcast %c-9_i32_37 : i32 to vector<64x1xi32>
    %61 = arith.addi %50, %60 : vector<64x1xi32>
    %c64_i32 = arith.constant 64 : i32
    %62 = vector.broadcast %c64_i32 : i32 to vector<64x1xi32>
    %63 = arith.cmpi slt, %61, %62 : vector<64x1xi32>
    %64 = arith.andi %59, %63 : vector<64x1xi1>
    %65 = arith.extui %64 : vector<64x1xi1> to vector<64x1xi32>
    %66 = arith.sitofp %65 : vector<64x1xi32> to vector<64x1xf32>
    %67 = arith.mulf %66, %53 : vector<64x1xf32>
    %c-8_i32 = arith.constant -8 : i32
    %68 = vector.broadcast %c-8_i32 : i32 to vector<64x1xi32>
    %69 = arith.addi %50, %68 : vector<64x1xi32>
    %c0_i32_38 = arith.constant 0 : i32
    %70 = vector.broadcast %c0_i32_38 : i32 to vector<64x1xi32>
    %71 = arith.cmpi sge, %69, %70 : vector<64x1xi32>
    %c-8_i32_39 = arith.constant -8 : i32
    %72 = vector.broadcast %c-8_i32_39 : i32 to vector<64x1xi32>
    %73 = arith.addi %50, %72 : vector<64x1xi32>
    %c64_i32_40 = arith.constant 64 : i32
    %74 = vector.broadcast %c64_i32_40 : i32 to vector<64x1xi32>
    %75 = arith.cmpi slt, %73, %74 : vector<64x1xi32>
    %76 = arith.andi %71, %75 : vector<64x1xi1>
    %77 = arith.extui %76 : vector<64x1xi1> to vector<64x1xi32>
    %78 = arith.sitofp %77 : vector<64x1xi32> to vector<64x1xf32>
    %c-7_i32 = arith.constant -7 : i32
    %79 = vector.broadcast %c-7_i32 : i32 to vector<64x1xi32>
    %80 = arith.addi %50, %79 : vector<64x1xi32>
    %c0_i32_41 = arith.constant 0 : i32
    %81 = vector.broadcast %c0_i32_41 : i32 to vector<64x1xi32>
    %82 = arith.cmpi sge, %80, %81 : vector<64x1xi32>
    %c-7_i32_42 = arith.constant -7 : i32
    %83 = vector.broadcast %c-7_i32_42 : i32 to vector<64x1xi32>
    %84 = arith.addi %50, %83 : vector<64x1xi32>
    %c64_i32_43 = arith.constant 64 : i32
    %85 = vector.broadcast %c64_i32_43 : i32 to vector<64x1xi32>
    %86 = arith.cmpi slt, %84, %85 : vector<64x1xi32>
    %87 = arith.andi %82, %86 : vector<64x1xi1>
    %88 = arith.extui %87 : vector<64x1xi1> to vector<64x1xi32>
    %89 = arith.sitofp %88 : vector<64x1xi32> to vector<64x1xf32>
    %90 = arith.mulf %89, %55 : vector<64x1xf32>
    %c-1_i32 = arith.constant -1 : i32
    %91 = vector.broadcast %c-1_i32 : i32 to vector<64x1xi32>
    %92 = arith.addi %50, %91 : vector<64x1xi32>
    %c0_i32_44 = arith.constant 0 : i32
    %93 = vector.broadcast %c0_i32_44 : i32 to vector<64x1xi32>
    %94 = arith.cmpi sge, %92, %93 : vector<64x1xi32>
    %c-1_i32_45 = arith.constant -1 : i32
    %95 = vector.broadcast %c-1_i32_45 : i32 to vector<64x1xi32>
    %96 = arith.addi %50, %95 : vector<64x1xi32>
    %c64_i32_46 = arith.constant 64 : i32
    %97 = vector.broadcast %c64_i32_46 : i32 to vector<64x1xi32>
    %98 = arith.cmpi slt, %96, %97 : vector<64x1xi32>
    %99 = arith.andi %94, %98 : vector<64x1xi1>
    %100 = arith.extui %99 : vector<64x1xi1> to vector<64x1xi32>
    %101 = arith.sitofp %100 : vector<64x1xi32> to vector<64x1xf32>
    %102 = arith.mulf %101, %53 : vector<64x1xf32>
    %c0_i32_47 = arith.constant 0 : i32
    %103 = vector.broadcast %c0_i32_47 : i32 to vector<64x1xi32>
    %104 = arith.addi %50, %103 : vector<64x1xi32>
    %c0_i32_48 = arith.constant 0 : i32
    %105 = vector.broadcast %c0_i32_48 : i32 to vector<64x1xi32>
    %106 = arith.cmpi sge, %104, %105 : vector<64x1xi32>
    %c0_i32_49 = arith.constant 0 : i32
    %107 = vector.broadcast %c0_i32_49 : i32 to vector<64x1xi32>
    %108 = arith.addi %50, %107 : vector<64x1xi32>
    %c64_i32_50 = arith.constant 64 : i32
    %109 = vector.broadcast %c64_i32_50 : i32 to vector<64x1xi32>
    %110 = arith.cmpi slt, %108, %109 : vector<64x1xi32>
    %111 = arith.andi %106, %110 : vector<64x1xi1>
    %112 = arith.extui %111 : vector<64x1xi1> to vector<64x1xi32>
    %113 = arith.sitofp %112 : vector<64x1xi32> to vector<64x1xf32>
    %c1_i32 = arith.constant 1 : i32
    %114 = vector.broadcast %c1_i32 : i32 to vector<64x1xi32>
    %115 = arith.addi %50, %114 : vector<64x1xi32>
    %c0_i32_51 = arith.constant 0 : i32
    %116 = vector.broadcast %c0_i32_51 : i32 to vector<64x1xi32>
    %117 = arith.cmpi sge, %115, %116 : vector<64x1xi32>
    %c1_i32_52 = arith.constant 1 : i32
    %118 = vector.broadcast %c1_i32_52 : i32 to vector<64x1xi32>
    %119 = arith.addi %50, %118 : vector<64x1xi32>
    %c64_i32_53 = arith.constant 64 : i32
    %120 = vector.broadcast %c64_i32_53 : i32 to vector<64x1xi32>
    %121 = arith.cmpi slt, %119, %120 : vector<64x1xi32>
    %122 = arith.andi %117, %121 : vector<64x1xi1>
    %123 = arith.extui %122 : vector<64x1xi1> to vector<64x1xi32>
    %124 = arith.sitofp %123 : vector<64x1xi32> to vector<64x1xf32>
    %125 = arith.mulf %124, %55 : vector<64x1xf32>
    %c7_i32 = arith.constant 7 : i32
    %126 = vector.broadcast %c7_i32 : i32 to vector<64x1xi32>
    %127 = arith.addi %50, %126 : vector<64x1xi32>
    %c0_i32_54 = arith.constant 0 : i32
    %128 = vector.broadcast %c0_i32_54 : i32 to vector<64x1xi32>
    %129 = arith.cmpi sge, %127, %128 : vector<64x1xi32>
    %c7_i32_55 = arith.constant 7 : i32
    %130 = vector.broadcast %c7_i32_55 : i32 to vector<64x1xi32>
    %131 = arith.addi %50, %130 : vector<64x1xi32>
    %c64_i32_56 = arith.constant 64 : i32
    %132 = vector.broadcast %c64_i32_56 : i32 to vector<64x1xi32>
    %133 = arith.cmpi slt, %131, %132 : vector<64x1xi32>
    %134 = arith.andi %129, %133 : vector<64x1xi1>
    %135 = arith.extui %134 : vector<64x1xi1> to vector<64x1xi32>
    %136 = arith.sitofp %135 : vector<64x1xi32> to vector<64x1xf32>
    %137 = arith.mulf %136, %53 : vector<64x1xf32>
    %c8_i32 = arith.constant 8 : i32
    %138 = vector.broadcast %c8_i32 : i32 to vector<64x1xi32>
    %139 = arith.addi %50, %138 : vector<64x1xi32>
    %c0_i32_57 = arith.constant 0 : i32
    %140 = vector.broadcast %c0_i32_57 : i32 to vector<64x1xi32>
    %141 = arith.cmpi sge, %139, %140 : vector<64x1xi32>
    %c8_i32_58 = arith.constant 8 : i32
    %142 = vector.broadcast %c8_i32_58 : i32 to vector<64x1xi32>
    %143 = arith.addi %50, %142 : vector<64x1xi32>
    %c64_i32_59 = arith.constant 64 : i32
    %144 = vector.broadcast %c64_i32_59 : i32 to vector<64x1xi32>
    %145 = arith.cmpi slt, %143, %144 : vector<64x1xi32>
    %146 = arith.andi %141, %145 : vector<64x1xi1>
    %147 = arith.extui %146 : vector<64x1xi1> to vector<64x1xi32>
    %148 = arith.sitofp %147 : vector<64x1xi32> to vector<64x1xf32>
    %c9_i32 = arith.constant 9 : i32
    %149 = vector.broadcast %c9_i32 : i32 to vector<64x1xi32>
    %150 = arith.addi %50, %149 : vector<64x1xi32>
    %c0_i32_60 = arith.constant 0 : i32
    %151 = vector.broadcast %c0_i32_60 : i32 to vector<64x1xi32>
    %152 = arith.cmpi sge, %150, %151 : vector<64x1xi32>
    %c9_i32_61 = arith.constant 9 : i32
    %153 = vector.broadcast %c9_i32_61 : i32 to vector<64x1xi32>
    %154 = arith.addi %50, %153 : vector<64x1xi32>
    %c64_i32_62 = arith.constant 64 : i32
    %155 = vector.broadcast %c64_i32_62 : i32 to vector<64x1xi32>
    %156 = arith.cmpi slt, %154, %155 : vector<64x1xi32>
    %157 = arith.andi %152, %156 : vector<64x1xi1>
    %158 = arith.extui %157 : vector<64x1xi1> to vector<64x1xi32>
    %159 = arith.sitofp %158 : vector<64x1xi32> to vector<64x1xf32>
    %160 = arith.mulf %159, %55 : vector<64x1xf32>
    %161 = vector.extract_strided_slice %46 {offsets = [0, 0, 0], sizes = [1, 64, 32], strides = [1, 1, 1]} : vector<2x64x32xbf16> to vector<1x64x32xbf16>
    %162 = vector.shape_cast %161 : vector<1x64x32xbf16> to vector<64x32xbf16>
    %163 = vector.extract_strided_slice %48 {offsets = [0, 0, 0], sizes = [1, 64, 32], strides = [1, 1, 1]} : vector<2x64x32xbf16> to vector<1x64x32xbf16>
    %164 = vector.shape_cast %163 : vector<1x64x32xbf16> to vector<64x32xbf16>
    %165 = vector.extract_strided_slice %49 {offsets = [0, 0, 0], sizes = [1, 64, 64], strides = [1, 1, 1]} : vector<2x64x64xf32> to vector<1x64x64xf32>
    %166 = vector.shape_cast %165 : vector<1x64x64xf32> to vector<64x64xf32>
    %167 = arith.truncf %166 : vector<64x64xf32> to vector<64x64xbf16>
    %cst_63 = arith.constant dense<0.000000e+00> : vector<64x64xf32>
    %168 = tpu.matmul %162, %164, %cst_63 {dimension_numbers = #tpu.dot_dimension_numbers<[1], [1], [0], [0], [0, 0, 1, 0], [], []>} : vector<64x32xbf16>, vector<64x32xbf16>, vector<64x64xf32> -> vector<64x64xf32>
    %cst_64 = arith.constant dense<0xFF800000> : vector<64xf32>
    %169 = vector.multi_reduction <maximumf>, %168, %cst_64 [1] : vector<64x64xf32> to vector<64xf32>
    %170 = vector.shape_cast %169 : vector<64xf32> to vector<64x1xf32>
    %171 = vector.broadcast %170 : vector<64x1xf32> to vector<64x64xf32>
    %172 = arith.subf %168, %171 : vector<64x64xf32>
    %173 = math.exp %172 : vector<64x64xf32>
    %cst_65 = arith.constant dense<0.000000e+00> : vector<64xf32>
    %174 = vector.multi_reduction <add>, %173, %cst_65 [1] : vector<64x64xf32> to vector<64xf32>
    %175 = vector.shape_cast %174 : vector<64xf32> to vector<64x1xf32>
    %176 = tpu.reciprocal %175 {approx = true} : vector<64x1xf32> -> vector<64x1xf32>
    %177 = vector.broadcast %176 : vector<64x1xf32> to vector<64x64xf32>
    %178 = arith.mulf %173, %177 : vector<64x64xf32>
    %179 = arith.truncf %178 : vector<64x64xf32> to vector<64x64xbf16>
    %cst_66 = arith.constant dense<0.000000e+00> : vector<64x64xf32>
    %180 = tpu.matmul %179, %167, %cst_66 {dimension_numbers = #tpu.dot_dimension_numbers<[1], [0], [0], [1], [0, 0, 1, 1], [], []>} : vector<64x64xbf16>, vector<64x64xbf16>, vector<64x64xf32> -> vector<64x64xf32>
    %cst_67 = arith.constant 0.000000e+00 : f32
    %181 = vector.broadcast %cst_67 : f32 to vector<64x64xf32>
    %c9_i32_68 = arith.constant 9 : i32
    %182 = tpu.dynamic_rotate %166 by %c9_i32_68 dim 0 : vector<64x64xf32>, i32 -> vector<64x64xf32>
    %183 = vector.broadcast %67 : vector<64x1xf32> to vector<64x64xf32>
    %184 = arith.mulf %182, %183 : vector<64x64xf32>
    %185 = vector.extract_strided_slice %51 {offsets = [0, 0], sizes = [1, 64], strides = [1, 1]} : vector<9x64xf32> to vector<1x64xf32>
    %186 = vector.shape_cast %185 : vector<1x64xf32> to vector<64xf32>
    %187 = vector.shape_cast %186 : vector<64xf32> to vector<1x64xf32>
    %188 = vector.broadcast %187 : vector<1x64xf32> to vector<64x64xf32>
    %189 = arith.mulf %184, %188 : vector<64x64xf32>
    %190 = arith.addf %181, %189 : vector<64x64xf32>
    %c8_i32_69 = arith.constant 8 : i32
    %191 = tpu.dynamic_rotate %166 by %c8_i32_69 dim 0 : vector<64x64xf32>, i32 -> vector<64x64xf32>
    %192 = vector.broadcast %78 : vector<64x1xf32> to vector<64x64xf32>
    %193 = arith.mulf %191, %192 : vector<64x64xf32>
    %194 = vector.extract_strided_slice %51 {offsets = [1, 0], sizes = [1, 64], strides = [1, 1]} : vector<9x64xf32> to vector<1x64xf32>
    %195 = vector.shape_cast %194 : vector<1x64xf32> to vector<64xf32>
    %196 = vector.shape_cast %195 : vector<64xf32> to vector<1x64xf32>
    %197 = vector.broadcast %196 : vector<1x64xf32> to vector<64x64xf32>
    %198 = arith.mulf %193, %197 : vector<64x64xf32>
    %199 = arith.addf %190, %198 : vector<64x64xf32>
    %c7_i32_70 = arith.constant 7 : i32
    %200 = tpu.dynamic_rotate %166 by %c7_i32_70 dim 0 : vector<64x64xf32>, i32 -> vector<64x64xf32>
    %201 = vector.broadcast %90 : vector<64x1xf32> to vector<64x64xf32>
    %202 = arith.mulf %200, %201 : vector<64x64xf32>
    %203 = vector.extract_strided_slice %51 {offsets = [2, 0], sizes = [1, 64], strides = [1, 1]} : vector<9x64xf32> to vector<1x64xf32>
    %204 = vector.shape_cast %203 : vector<1x64xf32> to vector<64xf32>
    %205 = vector.shape_cast %204 : vector<64xf32> to vector<1x64xf32>
    %206 = vector.broadcast %205 : vector<1x64xf32> to vector<64x64xf32>
    %207 = arith.mulf %202, %206 : vector<64x64xf32>
    %208 = arith.addf %199, %207 : vector<64x64xf32>
    %c1_i32_71 = arith.constant 1 : i32
    %209 = tpu.dynamic_rotate %166 by %c1_i32_71 dim 0 : vector<64x64xf32>, i32 -> vector<64x64xf32>
    %210 = vector.broadcast %102 : vector<64x1xf32> to vector<64x64xf32>
    %211 = arith.mulf %209, %210 : vector<64x64xf32>
    %212 = vector.extract_strided_slice %51 {offsets = [3, 0], sizes = [1, 64], strides = [1, 1]} : vector<9x64xf32> to vector<1x64xf32>
    %213 = vector.shape_cast %212 : vector<1x64xf32> to vector<64xf32>
    %214 = vector.shape_cast %213 : vector<64xf32> to vector<1x64xf32>
    %215 = vector.broadcast %214 : vector<1x64xf32> to vector<64x64xf32>
    %216 = arith.mulf %211, %215 : vector<64x64xf32>
    %217 = arith.addf %208, %216 : vector<64x64xf32>
    %218 = vector.broadcast %113 : vector<64x1xf32> to vector<64x64xf32>
    %219 = arith.mulf %166, %218 : vector<64x64xf32>
    %220 = vector.extract_strided_slice %51 {offsets = [4, 0], sizes = [1, 64], strides = [1, 1]} : vector<9x64xf32> to vector<1x64xf32>
    %221 = vector.shape_cast %220 : vector<1x64xf32> to vector<64xf32>
    %222 = vector.shape_cast %221 : vector<64xf32> to vector<1x64xf32>
    %223 = vector.broadcast %222 : vector<1x64xf32> to vector<64x64xf32>
    %224 = arith.mulf %219, %223 : vector<64x64xf32>
    %225 = arith.addf %217, %224 : vector<64x64xf32>
    %c63_i32 = arith.constant 63 : i32
    %226 = tpu.dynamic_rotate %166 by %c63_i32 dim 0 : vector<64x64xf32>, i32 -> vector<64x64xf32>
    %227 = vector.broadcast %125 : vector<64x1xf32> to vector<64x64xf32>
    %228 = arith.mulf %226, %227 : vector<64x64xf32>
    %229 = vector.extract_strided_slice %51 {offsets = [5, 0], sizes = [1, 64], strides = [1, 1]} : vector<9x64xf32> to vector<1x64xf32>
    %230 = vector.shape_cast %229 : vector<1x64xf32> to vector<64xf32>
    %231 = vector.shape_cast %230 : vector<64xf32> to vector<1x64xf32>
    %232 = vector.broadcast %231 : vector<1x64xf32> to vector<64x64xf32>
    %233 = arith.mulf %228, %232 : vector<64x64xf32>
    %234 = arith.addf %225, %233 : vector<64x64xf32>
    %c57_i32 = arith.constant 57 : i32
    %235 = tpu.dynamic_rotate %166 by %c57_i32 dim 0 : vector<64x64xf32>, i32 -> vector<64x64xf32>
    %236 = vector.broadcast %137 : vector<64x1xf32> to vector<64x64xf32>
    %237 = arith.mulf %235, %236 : vector<64x64xf32>
    %238 = vector.extract_strided_slice %51 {offsets = [6, 0], sizes = [1, 64], strides = [1, 1]} : vector<9x64xf32> to vector<1x64xf32>
    %239 = vector.shape_cast %238 : vector<1x64xf32> to vector<64xf32>
    %240 = vector.shape_cast %239 : vector<64xf32> to vector<1x64xf32>
    %241 = vector.broadcast %240 : vector<1x64xf32> to vector<64x64xf32>
    %242 = arith.mulf %237, %241 : vector<64x64xf32>
    %243 = arith.addf %234, %242 : vector<64x64xf32>
    %c56_i32 = arith.constant 56 : i32
    %244 = tpu.dynamic_rotate %166 by %c56_i32 dim 0 : vector<64x64xf32>, i32 -> vector<64x64xf32>
    %245 = vector.broadcast %148 : vector<64x1xf32> to vector<64x64xf32>
    %246 = arith.mulf %244, %245 : vector<64x64xf32>
    %247 = vector.extract_strided_slice %51 {offsets = [7, 0], sizes = [1, 64], strides = [1, 1]} : vector<9x64xf32> to vector<1x64xf32>
    %248 = vector.shape_cast %247 : vector<1x64xf32> to vector<64xf32>
    %249 = vector.shape_cast %248 : vector<64xf32> to vector<1x64xf32>
    %250 = vector.broadcast %249 : vector<1x64xf32> to vector<64x64xf32>
    %251 = arith.mulf %246, %250 : vector<64x64xf32>
    %252 = arith.addf %243, %251 : vector<64x64xf32>
    %c55_i32 = arith.constant 55 : i32
    %253 = tpu.dynamic_rotate %166 by %c55_i32 dim 0 : vector<64x64xf32>, i32 -> vector<64x64xf32>
    %254 = vector.broadcast %160 : vector<64x1xf32> to vector<64x64xf32>
    %255 = arith.mulf %253, %254 : vector<64x64xf32>
    %256 = vector.extract_strided_slice %51 {offsets = [8, 0], sizes = [1, 64], strides = [1, 1]} : vector<9x64xf32> to vector<1x64xf32>
    %257 = vector.shape_cast %256 : vector<1x64xf32> to vector<64xf32>
    %258 = vector.shape_cast %257 : vector<64xf32> to vector<1x64xf32>
    %259 = vector.broadcast %258 : vector<1x64xf32> to vector<64x64xf32>
    %260 = arith.mulf %255, %259 : vector<64x64xf32>
    %261 = arith.addf %252, %260 : vector<64x64xf32>
    %262 = arith.addf %180, %261 : vector<64x64xf32>
    %263 = vector.extract_strided_slice %46 {offsets = [1, 0, 0], sizes = [1, 64, 32], strides = [1, 1, 1]} : vector<2x64x32xbf16> to vector<1x64x32xbf16>
    %264 = vector.shape_cast %263 : vector<1x64x32xbf16> to vector<64x32xbf16>
    %265 = vector.extract_strided_slice %48 {offsets = [1, 0, 0], sizes = [1, 64, 32], strides = [1, 1, 1]} : vector<2x64x32xbf16> to vector<1x64x32xbf16>
    %266 = vector.shape_cast %265 : vector<1x64x32xbf16> to vector<64x32xbf16>
    %267 = vector.extract_strided_slice %49 {offsets = [1, 0, 0], sizes = [1, 64, 64], strides = [1, 1, 1]} : vector<2x64x64xf32> to vector<1x64x64xf32>
    %268 = vector.shape_cast %267 : vector<1x64x64xf32> to vector<64x64xf32>
    %269 = arith.truncf %268 : vector<64x64xf32> to vector<64x64xbf16>
    %cst_72 = arith.constant dense<0.000000e+00> : vector<64x64xf32>
    %270 = tpu.matmul %264, %266, %cst_72 {dimension_numbers = #tpu.dot_dimension_numbers<[1], [1], [0], [0], [0, 0, 1, 0], [], []>} : vector<64x32xbf16>, vector<64x32xbf16>, vector<64x64xf32> -> vector<64x64xf32>
    %cst_73 = arith.constant dense<0xFF800000> : vector<64xf32>
    %271 = vector.multi_reduction <maximumf>, %270, %cst_73 [1] : vector<64x64xf32> to vector<64xf32>
    %272 = vector.shape_cast %271 : vector<64xf32> to vector<64x1xf32>
    %273 = vector.broadcast %272 : vector<64x1xf32> to vector<64x64xf32>
    %274 = arith.subf %270, %273 : vector<64x64xf32>
    %275 = math.exp %274 : vector<64x64xf32>
    %cst_74 = arith.constant dense<0.000000e+00> : vector<64xf32>
    %276 = vector.multi_reduction <add>, %275, %cst_74 [1] : vector<64x64xf32> to vector<64xf32>
    %277 = vector.shape_cast %276 : vector<64xf32> to vector<64x1xf32>
    %278 = tpu.reciprocal %277 {approx = true} : vector<64x1xf32> -> vector<64x1xf32>
    %279 = vector.broadcast %278 : vector<64x1xf32> to vector<64x64xf32>
    %280 = arith.mulf %275, %279 : vector<64x64xf32>
    %281 = arith.truncf %280 : vector<64x64xf32> to vector<64x64xbf16>
    %cst_75 = arith.constant dense<0.000000e+00> : vector<64x64xf32>
    %282 = tpu.matmul %281, %269, %cst_75 {dimension_numbers = #tpu.dot_dimension_numbers<[1], [0], [0], [1], [0, 0, 1, 1], [], []>} : vector<64x64xbf16>, vector<64x64xbf16>, vector<64x64xf32> -> vector<64x64xf32>
    %cst_76 = arith.constant 0.000000e+00 : f32
    %283 = vector.broadcast %cst_76 : f32 to vector<64x64xf32>
    %c9_i32_77 = arith.constant 9 : i32
    %284 = tpu.dynamic_rotate %268 by %c9_i32_77 dim 0 : vector<64x64xf32>, i32 -> vector<64x64xf32>
    %285 = vector.broadcast %67 : vector<64x1xf32> to vector<64x64xf32>
    %286 = arith.mulf %284, %285 : vector<64x64xf32>
    %287 = vector.extract_strided_slice %51 {offsets = [0, 0], sizes = [1, 64], strides = [1, 1]} : vector<9x64xf32> to vector<1x64xf32>
    %288 = vector.shape_cast %287 : vector<1x64xf32> to vector<64xf32>
    %289 = vector.shape_cast %288 : vector<64xf32> to vector<1x64xf32>
    %290 = vector.broadcast %289 : vector<1x64xf32> to vector<64x64xf32>
    %291 = arith.mulf %286, %290 : vector<64x64xf32>
    %292 = arith.addf %283, %291 : vector<64x64xf32>
    %c8_i32_78 = arith.constant 8 : i32
    %293 = tpu.dynamic_rotate %268 by %c8_i32_78 dim 0 : vector<64x64xf32>, i32 -> vector<64x64xf32>
    %294 = vector.broadcast %78 : vector<64x1xf32> to vector<64x64xf32>
    %295 = arith.mulf %293, %294 : vector<64x64xf32>
    %296 = vector.extract_strided_slice %51 {offsets = [1, 0], sizes = [1, 64], strides = [1, 1]} : vector<9x64xf32> to vector<1x64xf32>
    %297 = vector.shape_cast %296 : vector<1x64xf32> to vector<64xf32>
    %298 = vector.shape_cast %297 : vector<64xf32> to vector<1x64xf32>
    %299 = vector.broadcast %298 : vector<1x64xf32> to vector<64x64xf32>
    %300 = arith.mulf %295, %299 : vector<64x64xf32>
    %301 = arith.addf %292, %300 : vector<64x64xf32>
    %c7_i32_79 = arith.constant 7 : i32
    %302 = tpu.dynamic_rotate %268 by %c7_i32_79 dim 0 : vector<64x64xf32>, i32 -> vector<64x64xf32>
    %303 = vector.broadcast %90 : vector<64x1xf32> to vector<64x64xf32>
    %304 = arith.mulf %302, %303 : vector<64x64xf32>
    %305 = vector.extract_strided_slice %51 {offsets = [2, 0], sizes = [1, 64], strides = [1, 1]} : vector<9x64xf32> to vector<1x64xf32>
    %306 = vector.shape_cast %305 : vector<1x64xf32> to vector<64xf32>
    %307 = vector.shape_cast %306 : vector<64xf32> to vector<1x64xf32>
    %308 = vector.broadcast %307 : vector<1x64xf32> to vector<64x64xf32>
    %309 = arith.mulf %304, %308 : vector<64x64xf32>
    %310 = arith.addf %301, %309 : vector<64x64xf32>
    %c1_i32_80 = arith.constant 1 : i32
    %311 = tpu.dynamic_rotate %268 by %c1_i32_80 dim 0 : vector<64x64xf32>, i32 -> vector<64x64xf32>
    %312 = vector.broadcast %102 : vector<64x1xf32> to vector<64x64xf32>
    %313 = arith.mulf %311, %312 : vector<64x64xf32>
    %314 = vector.extract_strided_slice %51 {offsets = [3, 0], sizes = [1, 64], strides = [1, 1]} : vector<9x64xf32> to vector<1x64xf32>
    %315 = vector.shape_cast %314 : vector<1x64xf32> to vector<64xf32>
    %316 = vector.shape_cast %315 : vector<64xf32> to vector<1x64xf32>
    %317 = vector.broadcast %316 : vector<1x64xf32> to vector<64x64xf32>
    %318 = arith.mulf %313, %317 : vector<64x64xf32>
    %319 = arith.addf %310, %318 : vector<64x64xf32>
    %320 = vector.broadcast %113 : vector<64x1xf32> to vector<64x64xf32>
    %321 = arith.mulf %268, %320 : vector<64x64xf32>
    %322 = vector.extract_strided_slice %51 {offsets = [4, 0], sizes = [1, 64], strides = [1, 1]} : vector<9x64xf32> to vector<1x64xf32>
    %323 = vector.shape_cast %322 : vector<1x64xf32> to vector<64xf32>
    %324 = vector.shape_cast %323 : vector<64xf32> to vector<1x64xf32>
    %325 = vector.broadcast %324 : vector<1x64xf32> to vector<64x64xf32>
    %326 = arith.mulf %321, %325 : vector<64x64xf32>
    %327 = arith.addf %319, %326 : vector<64x64xf32>
    %c63_i32_81 = arith.constant 63 : i32
    %328 = tpu.dynamic_rotate %268 by %c63_i32_81 dim 0 : vector<64x64xf32>, i32 -> vector<64x64xf32>
    %329 = vector.broadcast %125 : vector<64x1xf32> to vector<64x64xf32>
    %330 = arith.mulf %328, %329 : vector<64x64xf32>
    %331 = vector.extract_strided_slice %51 {offsets = [5, 0], sizes = [1, 64], strides = [1, 1]} : vector<9x64xf32> to vector<1x64xf32>
    %332 = vector.shape_cast %331 : vector<1x64xf32> to vector<64xf32>
    %333 = vector.shape_cast %332 : vector<64xf32> to vector<1x64xf32>
    %334 = vector.broadcast %333 : vector<1x64xf32> to vector<64x64xf32>
    %335 = arith.mulf %330, %334 : vector<64x64xf32>
    %336 = arith.addf %327, %335 : vector<64x64xf32>
    %c57_i32_82 = arith.constant 57 : i32
    %337 = tpu.dynamic_rotate %268 by %c57_i32_82 dim 0 : vector<64x64xf32>, i32 -> vector<64x64xf32>
    %338 = vector.broadcast %137 : vector<64x1xf32> to vector<64x64xf32>
    %339 = arith.mulf %337, %338 : vector<64x64xf32>
    %340 = vector.extract_strided_slice %51 {offsets = [6, 0], sizes = [1, 64], strides = [1, 1]} : vector<9x64xf32> to vector<1x64xf32>
    %341 = vector.shape_cast %340 : vector<1x64xf32> to vector<64xf32>
    %342 = vector.shape_cast %341 : vector<64xf32> to vector<1x64xf32>
    %343 = vector.broadcast %342 : vector<1x64xf32> to vector<64x64xf32>
    %344 = arith.mulf %339, %343 : vector<64x64xf32>
    %345 = arith.addf %336, %344 : vector<64x64xf32>
    %c56_i32_83 = arith.constant 56 : i32
    %346 = tpu.dynamic_rotate %268 by %c56_i32_83 dim 0 : vector<64x64xf32>, i32 -> vector<64x64xf32>
    %347 = vector.broadcast %148 : vector<64x1xf32> to vector<64x64xf32>
    %348 = arith.mulf %346, %347 : vector<64x64xf32>
    %349 = vector.extract_strided_slice %51 {offsets = [7, 0], sizes = [1, 64], strides = [1, 1]} : vector<9x64xf32> to vector<1x64xf32>
    %350 = vector.shape_cast %349 : vector<1x64xf32> to vector<64xf32>
    %351 = vector.shape_cast %350 : vector<64xf32> to vector<1x64xf32>
    %352 = vector.broadcast %351 : vector<1x64xf32> to vector<64x64xf32>
    %353 = arith.mulf %348, %352 : vector<64x64xf32>
    %354 = arith.addf %345, %353 : vector<64x64xf32>
    %c55_i32_84 = arith.constant 55 : i32
    %355 = tpu.dynamic_rotate %268 by %c55_i32_84 dim 0 : vector<64x64xf32>, i32 -> vector<64x64xf32>
    %356 = vector.broadcast %160 : vector<64x1xf32> to vector<64x64xf32>
    %357 = arith.mulf %355, %356 : vector<64x64xf32>
    %358 = vector.extract_strided_slice %51 {offsets = [8, 0], sizes = [1, 64], strides = [1, 1]} : vector<9x64xf32> to vector<1x64xf32>
    %359 = vector.shape_cast %358 : vector<1x64xf32> to vector<64xf32>
    %360 = vector.shape_cast %359 : vector<64xf32> to vector<1x64xf32>
    %361 = vector.broadcast %360 : vector<1x64xf32> to vector<64x64xf32>
    %362 = arith.mulf %357, %361 : vector<64x64xf32>
    %363 = arith.addf %354, %362 : vector<64x64xf32>
    %364 = arith.addf %282, %363 : vector<64x64xf32>
    %365 = tpu.concatenate %262, %364 in 0 : vector<64x64xf32>, vector<64x64xf32> -> vector<128x64xf32>
    %c5 = arith.constant 5 : index
    %c0_85 = arith.constant 0 : index
    %366 = vector.load %arg10[%c5, %c0_85] : memref<10x128xf32, #tpu.memory_space<vmem>>, vector<1x64xf32>
    %367 = vector.broadcast %366 : vector<1x64xf32> to vector<128x64xf32>
    %368 = arith.addf %365, %367 : vector<128x64xf32>
    %369 = arith.truncf %368 : vector<128x64xf32> to vector<128x64xbf16>
    %c1_86 = arith.constant 1 : index
    %c0_87 = arith.constant 0 : index
    %c0_88 = arith.constant 0 : index
    %370 = vector.load %arg4[%c1_86, %c0_87, %c0_88] : memref<2x64x64xbf16, #tpu.memory_space<vmem>>, vector<1x64x64xbf16>
    %371 = vector.shape_cast %370 : vector<1x64x64xbf16> to vector<64x64xbf16>
    %cst_89 = arith.constant dense<0.000000e+00> : vector<128x64xf32>
    %372 = tpu.matmul %369, %371, %cst_89 {dimension_numbers = #tpu.dot_dimension_numbers<[1], [0], [0], [1], [0, 0, 1, 1], [], []>} : vector<128x64xbf16>, vector<64x64xbf16>, vector<128x64xf32> -> vector<128x64xf32>
    %c6 = arith.constant 6 : index
    %c0_90 = arith.constant 0 : index
    %373 = vector.load %arg10[%c6, %c0_90] : memref<10x128xf32, #tpu.memory_space<vmem>>, vector<1x64xf32>
    %374 = vector.broadcast %373 : vector<1x64xf32> to vector<128x64xf32>
    %375 = arith.addf %372, %374 : vector<128x64xf32>
    %376 = arith.addf %25, %375 : vector<128x64xf32>
    %377 = arith.truncf %376 : vector<128x64xf32> to vector<128x64xbf16>
    %c0_91 = arith.constant 0 : index
    %c0_92 = arith.constant 0 : index
    %378 = vector.load %arg5[%c0_91, %c0_92] : memref<64x128xbf16, #tpu.memory_space<vmem>>, vector<64x128xbf16>
    %cst_93 = arith.constant dense<0.000000e+00> : vector<128x128xf32>
    %379 = tpu.matmul %377, %378, %cst_93 {dimension_numbers = #tpu.dot_dimension_numbers<[1], [0], [0], [1], [0, 0, 1, 1], [], []>} : vector<128x64xbf16>, vector<64x128xbf16>, vector<128x128xf32> -> vector<128x128xf32>
    %c7 = arith.constant 7 : index
    %c0_94 = arith.constant 0 : index
    %380 = vector.load %arg10[%c7, %c0_94] : memref<10x128xf32, #tpu.memory_space<vmem>>, vector<1x128xf32>
    %381 = vector.broadcast %380 : vector<1x128xf32> to vector<128x128xf32>
    %382 = arith.addf %379, %381 : vector<128x128xf32>
    %383 = arith.negf %382 : vector<128x128xf32>
    %384 = math.exp %383 : vector<128x128xf32>
    %cst_95 = arith.constant 1.000000e+00 : f32
    %385 = vector.broadcast %cst_95 : f32 to vector<128x128xf32>
    %386 = arith.addf %385, %384 : vector<128x128xf32>
    %387 = arith.divf %385, %386 : vector<128x128xf32>
    %388 = arith.mulf %382, %387 : vector<128x128xf32>
    %389 = arith.truncf %388 : vector<128x128xf32> to vector<128x128xbf16>
    %c0_96 = arith.constant 0 : index
    %c0_97 = arith.constant 0 : index
    %390 = vector.load %arg6[%c0_96, %c0_97] : memref<128x64xbf16, #tpu.memory_space<vmem>>, vector<128x64xbf16>
    %cst_98 = arith.constant dense<0.000000e+00> : vector<128x64xf32>
    %391 = tpu.matmul %389, %390, %cst_98 {dimension_numbers = #tpu.dot_dimension_numbers<[1], [0], [0], [1], [0, 0, 1, 1], [], []>} : vector<128x128xbf16>, vector<128x64xbf16>, vector<128x64xf32> -> vector<128x64xf32>
    %c8 = arith.constant 8 : index
    %c0_99 = arith.constant 0 : index
    %392 = vector.load %arg10[%c8, %c0_99] : memref<10x128xf32, #tpu.memory_space<vmem>>, vector<1x64xf32>
    %393 = vector.broadcast %392 : vector<1x64xf32> to vector<128x64xf32>
    %394 = arith.addf %391, %393 : vector<128x64xf32>
    %395 = arith.addf %376, %394 : vector<128x64xf32>
    %396 = arith.truncf %13 : vector<128x64xf32> to vector<128x64xbf16>
    %c0_100 = arith.constant 0 : index
    %c0_101 = arith.constant 0 : index
    %c0_102 = arith.constant 0 : index
    %397 = vector.load %arg7[%c0_100, %c0_101, %c0_102] : memref<2x64x128xbf16, #tpu.memory_space<vmem>>, vector<1x64x128xbf16>
    %398 = vector.shape_cast %397 : vector<1x64x128xbf16> to vector<64x128xbf16>
    %cst_103 = arith.constant dense<0.000000e+00> : vector<128x128xf32>
    %399 = tpu.matmul %396, %398, %cst_103 {dimension_numbers = #tpu.dot_dimension_numbers<[1], [0], [0], [1], [0, 0, 1, 1], [], []>} : vector<128x64xbf16>, vector<64x128xbf16>, vector<128x128xf32> -> vector<128x128xf32>
    %400 = arith.truncf %395 : vector<128x64xf32> to vector<128x64xbf16>
    %c1_104 = arith.constant 1 : index
    %c0_105 = arith.constant 0 : index
    %c0_106 = arith.constant 0 : index
    %401 = vector.load %arg7[%c1_104, %c0_105, %c0_106] : memref<2x64x128xbf16, #tpu.memory_space<vmem>>, vector<1x64x128xbf16>
    %402 = vector.shape_cast %401 : vector<1x64x128xbf16> to vector<64x128xbf16>
    %cst_107 = arith.constant dense<0.000000e+00> : vector<128x128xf32>
    %403 = tpu.matmul %400, %402, %cst_107 {dimension_numbers = #tpu.dot_dimension_numbers<[1], [0], [0], [1], [0, 0, 1, 1], [], []>} : vector<128x64xbf16>, vector<64x128xbf16>, vector<128x128xf32> -> vector<128x128xf32>
    %404 = arith.addf %399, %403 : vector<128x128xf32>
    %c9 = arith.constant 9 : index
    %c0_108 = arith.constant 0 : index
    %405 = vector.load %arg10[%c9, %c0_108] : memref<10x128xf32, #tpu.memory_space<vmem>>, vector<1x128xf32>
    %406 = vector.broadcast %405 : vector<1x128xf32> to vector<128x128xf32>
    %407 = arith.addf %404, %406 : vector<128x128xf32>
    %408 = arith.negf %407 : vector<128x128xf32>
    %409 = math.exp %408 : vector<128x128xf32>
    %cst_109 = arith.constant 1.000000e+00 : f32
    %410 = vector.broadcast %cst_109 : f32 to vector<128x128xf32>
    %411 = arith.addf %410, %409 : vector<128x128xf32>
    %412 = arith.divf %410, %411 : vector<128x128xf32>
    %413 = arith.mulf %407, %412 : vector<128x128xf32>
    %414 = vector.shape_cast %413 : vector<128x128xf32> to vector<2x64x128xf32>
    %c0_110 = arith.constant 0 : index
    %c0_111 = arith.constant 0 : index
    %c0_112 = arith.constant 0 : index
    %415 = vector.load %arg11[%c0_110, %c0_111, %c0_112] : memref<2x64x128xf32, #tpu.memory_space<vmem>>, vector<2x64x128xf32>
    tpu.vector_store %arg11[%c0_110, %c0_111, %c0_112], %414 {strides = array<i32>} : memref<2x64x128xf32, #tpu.memory_space<vmem>>, vector<2x64x128xf32>,
    return
  }
  func.func @transform_0(%arg0: i32) -> (i32, i32, i32) {
    %c0_i32 = arith.constant 0 : i32
    %c0_i32_0 = arith.constant 0 : i32
    %c0_i32_1 = arith.constant 0 : i32
    return %arg0, %c0_i32, %c0_i32_0 : i32, i32, i32
  }
  func.func @transform_1(%arg0: i32) -> (i32, i32, i32) {
    %c0_i32 = arith.constant 0 : i32
    %c0_i32_0 = arith.constant 0 : i32
    %c0_i32_1 = arith.constant 0 : i32
    %c0_i32_2 = arith.constant 0 : i32
    return %c0_i32, %c0_i32_0, %c0_i32_1 : i32, i32, i32
  }
  func.func @transform_2(%arg0: i32) -> (i32, i32, i32) {
    %c0_i32 = arith.constant 0 : i32
    %c0_i32_0 = arith.constant 0 : i32
    %c0_i32_1 = arith.constant 0 : i32
    %c0_i32_2 = arith.constant 0 : i32
    return %c0_i32, %c0_i32_0, %c0_i32_1 : i32, i32, i32
  }
  func.func @transform_3(%arg0: i32) -> (i32, i32, i32) {
    %c0_i32 = arith.constant 0 : i32
    %c0_i32_0 = arith.constant 0 : i32
    %c0_i32_1 = arith.constant 0 : i32
    %c0_i32_2 = arith.constant 0 : i32
    return %c0_i32, %c0_i32_0, %c0_i32_1 : i32, i32, i32
  }
  func.func @transform_4(%arg0: i32) -> (i32, i32) {
    %c0_i32 = arith.constant 0 : i32
    %c0_i32_0 = arith.constant 0 : i32
    %c0_i32_1 = arith.constant 0 : i32
    return %c0_i32, %c0_i32_0 : i32, i32
  }
  func.func @transform_5(%arg0: i32) -> (i32, i32) {
    %c0_i32 = arith.constant 0 : i32
    %c0_i32_0 = arith.constant 0 : i32
    %c0_i32_1 = arith.constant 0 : i32
    return %c0_i32, %c0_i32_0 : i32, i32
  }
  func.func @transform_6(%arg0: i32) -> (i32, i32, i32) {
    %c0_i32 = arith.constant 0 : i32
    %c0_i32_0 = arith.constant 0 : i32
    %c0_i32_1 = arith.constant 0 : i32
    %c0_i32_2 = arith.constant 0 : i32
    return %c0_i32, %c0_i32_0, %c0_i32_1 : i32, i32, i32
  }
  func.func @transform_7(%arg0: i32) -> (i32, i32) {
    %c0_i32 = arith.constant 0 : i32
    %c0_i32_0 = arith.constant 0 : i32
    %c0_i32_1 = arith.constant 0 : i32
    return %c0_i32, %c0_i32_0 : i32, i32
  }
  func.func @transform_8(%arg0: i32) -> (i32, i32, i32) {
    %c0_i32 = arith.constant 0 : i32
    %c0_i32_0 = arith.constant 0 : i32
    %c0_i32_1 = arith.constant 0 : i32
    %c0_i32_2 = arith.constant 0 : i32
    return %c0_i32, %c0_i32_0, %c0_i32_1 : i32, i32, i32
  }
  func.func @transform_9(%arg0: i32) -> (i32, i32) {
    %c0_i32 = arith.constant 0 : i32
    %c0_i32_0 = arith.constant 0 : i32
    %c0_i32_1 = arith.constant 0 : i32
    return %c0_i32, %c0_i32_0 : i32, i32
  }
  func.func @transform_10(%arg0: i32) -> (i32, i32, i32) {
    %c0_i32 = arith.constant 0 : i32
    %c0_i32_0 = arith.constant 0 : i32
    %c0_i32_1 = arith.constant 0 : i32
    return %arg0, %c0_i32, %c0_i32_0 : i32, i32, i32
  }
}

</mosaic_0001>

<llo_original>
// kernel: squeeze.13
$region0: #{squeeze.13}
  %s0 = inlined_call_operand.vmem [shape: f32[64,3,3], index: 0, kind: input, shape index: {}]
  %s1 = inlined_call_operand.vmem [shape: f32[64,9], index: 1, kind: output, shape index: {}]
  $region1: #{squeeze.13} parent=0
    #allocation0 [shape = 'u8[12288]{0}', space=vmem, size = 0x3000, scoped, tag = 'scoped mem for input reshape']
    %s3 = sshllo.u32 0, 4
    %s4 = smul.addr 4, 2
    %s5 = scalar_lea.vmem %s0, %s4
    %v6 = vld [vmem:[%s5] sm:%s3]
    %s7 = scalar_lea.vmem [#allocation0], 16
    %8 = vst [vmem:[%s7] sm:%s3] %v6
    %s9 = scalar_lea.vmem %s0, 4
    %v10 = vld [vmem:[%s9] sm:%s3]
    %s11 = scalar_lea.vmem [#allocation0], 8
    %12 = vst [vmem:[%s11] sm:%s3] %v10
    %v13 = vld [vmem:[%s0] sm:%s3]
    %14 = vst [vmem:[#allocation0] sm:%s3] %v13
    %v15 = vld [vmem:[#allocation0] sm:$0x7]
    %vm16 = vcmask 523264
    %17 = vst.msk [vmem:[%s1] sm:$0x7] %vm16, %v15
    %s18 = scalar_lea.vmem [#allocation0], 8
    %v19 = vld [vmem:[%s18] sm:$0x7]
    %vm20 = vcmask 523264
    %s21 = scalar_lea.vmem %s1, 3
    %22 = vst.msk [vmem:[%s21] sm:$0x7] %vm20, %v19
    %s23 = scalar_lea.vmem [#allocation0], 16
    %v24 = vld [vmem:[%s23] sm:$0x7]
    %vm25 = vcmask 523264
    %s26 = scalar_lea.vmem %s1, 6
    %27 = vst.msk [vmem:[%s26] sm:$0x7] %vm25, %v24

// kernel: psa_forward.1
$region0: #{psa_forward.1}
  #allocation0 [shape = 'u32[]', space=smem, size = 0x4, offset = 0x4, fixed_abs, tag = 'smem constant byte address 0x4 - core index']
  #allocation1 [shape = 'u32[144,128]{1,0:T(1,128)}', space=vmem, size = 0x12000, scoped, tag = 'internal scratch']
  %s0 = inlined_call_operand.vmem [shape: bf16[2,64,128], index: 0, kind: input, shape index: {}]
  %s1 = inlined_call_operand.vmem [shape: bf16[2,128,64], index: 1, kind: input, shape index: {}]
  %s2 = inlined_call_operand.vmem [shape: bf16[2,64,32], index: 2, kind: input, shape index: {}]
  %s3 = inlined_call_operand.vmem [shape: bf16[2,64,64], index: 3, kind: input, shape index: {}]
  %s4 = inlined_call_operand.vmem [shape: bf16[64,128], index: 4, kind: input, shape index: {}]
  %s5 = inlined_call_operand.vmem [shape: bf16[128,64], index: 5, kind: input, shape index: {}]
  %s6 = inlined_call_operand.vmem [shape: bf16[2,64,128], index: 6, kind: input, shape index: {}]
  %s7 = inlined_call_operand.vmem [shape: f32[9,64], index: 7, kind: input, shape index: {}]
  %s8 = inlined_call_operand.vmem [shape: f32[2,64,1], index: 8, kind: input, shape index: {}]
  %s9 = inlined_call_operand.vmem [shape: f32[10,128], index: 9, kind: input, shape index: {}]
  %s10 = inlined_call_operand.hbm [shape: f32[2,64,128], index: 10, kind: output, shape index: {}]
  %s11 = sld [smem:[#allocation0]]
  $region50: #{psa_forward.1} parent=0
    _
  %s13 = ssub.s32 1, %s11
  %s14 = scalar_select 0, %s13, %s11
  $region1: #{psa_forward.1} parent=0
    #allocation2 [shape = 'u8[65536]{0}', space=vmem, size = 0x10000, scoped, tag = 'output window, operand 0, single buffered']
    #allocation3 [shape = 's32[1]{0}', space=sflag, size = 0x4, scoped, tag = 'scoped memory for psa_forward.1']
    %15 = vsyncpa [#allocation3], 0
    // Predicated region
    $region2: #{psa_forward.1} parent=1 // pred_check
      _
    $region3: #{psa_forward.1} parent=1 // pred_check_branch
      %17 = sbr.rel (0) target = $region5
    $region4: #{psa_forward.1} parent=1 // pred_region
      _
    $region5: #{psa_forward.1} parent=1 // pred_fallthru
      _
    // Predicated region
    $region6: #{psa_forward.1} parent=1 // pred_check
      _
    $region7: #{psa_forward.1} parent=1 // pred_check_branch
      %19 = sbr.rel (0) target = $region9
    $region8: #{psa_forward.1} parent=1 // pred_region
      _
    $region9: #{psa_forward.1} parent=1 // pred_fallthru
      _
    // Predicated region
    $region10: #{psa_forward.1} parent=1 // pred_check
      _
    $region11: #{psa_forward.1} parent=1 // pred_check_branch
      %21 = sbr.rel (0) target = $region13
    $region12: #{psa_forward.1} parent=1 // pred_region
      _
    $region13: #{psa_forward.1} parent=1 // pred_fallthru
      _
    // Predicated region
    $region14: #{psa_forward.1} parent=1 // pred_check
      _
    $region15: #{psa_forward.1} parent=1 // pred_check_branch
      %23 = sbr.rel (0) target = $region17
    $region16: #{psa_forward.1} parent=1 // pred_region
      _
    $region17: #{psa_forward.1} parent=1 // pred_fallthru
      _
    // Predicated region
    $region18: #{psa_forward.1} parent=1 // pred_check
      _
    $region19: #{psa_forward.1} parent=1 // pred_check_branch
      %25 = sbr.rel (0) target = $region21
    $region20: #{psa_forward.1} parent=1 // pred_region
      _
    $region21: #{psa_forward.1} parent=1 // pred_fallthru
      _
    // Predicated region
    $region22: #{psa_forward.1} parent=1 // pred_check
      _
    $region23: #{psa_forward.1} parent=1 // pred_check_branch
      %27 = sbr.rel (0) target = $region25
    $region24: #{psa_forward.1} parent=1 // pred_region
      _
    $region25: #{psa_forward.1} parent=1 // pred_fallthru
      _
    // Predicated region
    $region26: #{psa_forward.1} parent=1 // pred_check
      _
    $region27: #{psa_forward.1} parent=1 // pred_check_branch
      %29 = sbr.rel (0) target = $region29
    $region28: #{psa_forward.1} parent=1 // pred_region
      _
    $region29: #{psa_forward.1} parent=1 // pred_fallthru
      _
    // Predicated region
    $region30: #{psa_forward.1} parent=1 // pred_check
      _
    $region31: #{psa_forward.1} parent=1 // pred_check_branch
      %31 = sbr.rel (0) target = $region33
    $region32: #{psa_forward.1} parent=1 // pred_region
      _
    $region33: #{psa_forward.1} parent=1 // pred_fallthru
      _
    // Predicated region
    $region34: #{psa_forward.1} parent=1 // pred_check
      _
    $region35: #{psa_forward.1} parent=1 // pred_check_branch
      %33 = sbr.rel (0) target = $region37
    $region36: #{psa_forward.1} parent=1 // pred_region
      _
    $region37: #{psa_forward.1} parent=1 // pred_fallthru
      _
    // Predicated region
    $region38: #{psa_forward.1} parent=1 // pred_check
      _
    $region39: #{psa_forward.1} parent=1 // pred_check_branch
      %35 = sbr.rel (0) target = $region41
    $region40: #{psa_forward.1} parent=1 // pred_region
      _
    $region41: #{psa_forward.1} parent=1 // pred_fallthru
      _
    %v37 = vld [vmem:[%s0] sm:$0xf]
    %v38 = vld [vmem:[%s0 + $0x4] sm:$0xf]
    %v39 = vld [vmem:[%s0 + $0x8] sm:$0xf]
    %v40 = vld [vmem:[%s0 + $0xc] sm:$0xf]
    %v41 = vld [vmem:[%s0 + $0x10] sm:$0xf]
    %v42 = vld [vmem:[%s0 + $0x14] sm:$0xf]
    %v43 = vld [vmem:[%s0 + $0x18] sm:$0xf]
    %v44 = vld [vmem:[%s0 + $0x1c] sm:$0xf]
    %v45 = vld [vmem:[%s0 + $0x20] sm:$0xf]
    %v46 = vld [vmem:[%s0 + $0x24] sm:$0xf]
    %v47 = vld [vmem:[%s0 + $0x28] sm:$0xf]
    %v48 = vld [vmem:[%s0 + $0x2c] sm:$0xf]
    %v49 = vld [vmem:[%s0 + $0x30] sm:$0xf]
    %v50 = vld [vmem:[%s0 + $0x34] sm:$0xf]
    %v51 = vld [vmem:[%s0 + $0x38] sm:$0xf]
    %v52 = vld [vmem:[%s0 + $0x3c] sm:$0xf]
    %v53 = vld [vmem:[%s1] sm:$0xf]
    %v54 = vld [vmem:[%s1 + $0x4] sm:$0xf]
    %v55 = vld [vmem:[%s1 + $0x8] sm:$0xf]
    %v56 = vld [vmem:[%s1 + $0xc] sm:$0xf]
    %v57 = vld [vmem:[%s1 + $0x10] sm:$0xf]
    %v58 = vld [vmem:[%s1 + $0x14] sm:$0xf]
    %v59 = vld [vmem:[%s1 + $0x18] sm:$0xf]
    %v60 = vld [vmem:[%s1 + $0x1c] sm:$0xf]
    %v61 = vld [vmem:[%s1 + $0x20] sm:$0xf]
    %v62 = vld [vmem:[%s1 + $0x24] sm:$0xf]
    %v63 = vld [vmem:[%s1 + $0x28] sm:$0xf]
    %v64 = vld [vmem:[%s1 + $0x2c] sm:$0xf]
    %v65 = vld [vmem:[%s1 + $0x30] sm:$0xf]
    %v66 = vld [vmem:[%s1 + $0x34] sm:$0xf]
    %v67 = vld [vmem:[%s1 + $0x38] sm:$0xf]
    %v68 = vld [vmem:[%s1 + $0x3c] sm:$0xf]
    %v69 = vld [vmem:[%s9] sm:$0x1]
    %v70 = vlaneseq
    %v71 = vshrl.u32 %v70, 7
    %v72 = vsub.s32 0, %v71
    %v73 = vrot.slane %v69, %v72
    %v90 = vunpack.c.l.b16 %v37
    %v91 = vunpack.c.l.b16 %v38
    %v92 = vunpack.c.l.b16 %v39
    %v93 = vunpack.c.l.b16 %v40
    %v94 = vunpack.c.l.b16 %v41
    %v95 = vunpack.c.l.b16 %v42
    %v96 = vunpack.c.l.b16 %v43
    %v97 = vunpack.c.l.b16 %v44
    %v98 = vunpack.c.l.b16 %v45
    %v99 = vunpack.c.l.b16 %v46
    %v100 = vunpack.c.l.b16 %v47
    %v101 = vunpack.c.l.b16 %v48
    %v102 = vunpack.c.l.b16 %v49
    %v103 = vunpack.c.l.b16 %v50
    %v104 = vunpack.c.l.b16 %v51
    %v105 = vunpack.c.l.b16 %v52
    %v106 = vpack.c.b16 %v91, %v90
    %v107 = vpack.c.b16 %v93, %v92
    %v108 = vpack.c.b16 %v95, %v94
    %v109 = vpack.c.b16 %v97, %v96
    %v110 = vpack.c.b16 %v99, %v98
    %v111 = vpack.c.b16 %v101, %v100
    %v112 = vpack.c.b16 %v103, %v102
    %v113 = vpack.c.b16 %v105, %v104
    %v138 = vunpack.c.l.b16 %v53
    %v139 = vunpack.c.l.b16 %v54
    %v140 = vunpack.c.l.b16 %v55
    %v141 = vunpack.c.l.b16 %v56
    %v142 = vunpack.c.l.b16 %v57
    %v143 = vunpack.c.l.b16 %v58
    %v144 = vunpack.c.l.b16 %v59
    %v145 = vunpack.c.l.b16 %v60
    %v146 = vunpack.c.l.b16 %v61
    %v147 = vunpack.c.l.b16 %v62
    %v148 = vunpack.c.l.b16 %v63
    %v149 = vunpack.c.l.b16 %v64
    %v150 = vunpack.c.l.b16 %v65
    %v151 = vunpack.c.l.b16 %v66
    %v152 = vunpack.c.l.b16 %v67
    %v153 = vunpack.c.l.b16 %v68
    %v154 = vpack.c.b16 %v139, %v138
    %v155 = vpack.c.b16 %v141, %v140
    %v156 = vpack.c.b16 %v143, %v142
    %v157 = vpack.c.b16 %v145, %v144
    %v158 = vpack.c.b16 %v147, %v146
    %v159 = vpack.c.b16 %v149, %v148
    %v160 = vpack.c.b16 %v151, %v150
    %v161 = vpack.c.b16 %v153, %v152
    %170 = vmatprep.subr.bf16.mxu0 0
    %171 = vmatpush1.bf16.msra.mxu0 %v154
    %172 = vmatprep.subr.bf16.mxu0 0
    %173 = vmatpush1.bf16.msra.mxu0 %v155
    %174 = vmatprep.subr.bf16.mxu0 0
    %175 = vmatpush1.bf16.msra.mxu0 %v156
    %176 = vmatprep.subr.bf16.mxu0 0
    %177 = vmatpush1.bf16.msra.mxu0 %v157
    %178 = vmatprep.subr.bf16.mxu0 0
    %179 = vmatpush1.bf16.msra.mxu0 %v158
    %180 = vmatprep.subr.bf16.mxu0 0
    %181 = vmatpush1.bf16.msra.mxu0 %v159
    %182 = vmatprep.subr.bf16.mxu0 0
    %183 = vmatpush1.bf16.msra.mxu0 %v160
    %184 = vmatprep.subr.bf16.mxu0 0
    %185 = vmatpush1.bf16.msra.mxu0 %v161
    %186 = vmatprep.subr.bf16.mxu0 0
    %187 = vmatpush1.bf16.msra.mxu0 0
    %188 = vmatprep.subr.bf16.mxu0 0
    %189 = vmatpush1.bf16.msra.mxu0 0
    %190 = vmatprep.subr.bf16.mxu0 0
    %191 = vmatpush1.bf16.msra.mxu0 0
    %192 = vmatprep.subr.bf16.mxu0 0
    %193 = vmatpush1.bf16.msra.mxu0 0
    %194 = vmatprep.subr.bf16.mxu0 0
    %195 = vmatpush1.bf16.msra.mxu0 0
    %196 = vmatprep.subr.bf16.mxu0 0
    %197 = vmatpush1.bf16.msra.mxu0 0
    %198 = vmatprep.subr.bf16.mxu0 0
    %199 = vmatpush1.bf16.msra.mxu0 0
    %200 = vmatprep.subr.bf16.mxu0 0
    %201 = vmatpush1.bf16.msra.mxu0 0
    %202 = vmatprep.mubr.bf16.mxu0 0
    %203 = vmatmul.mubr.bf16.gmra.mrb[0].mxu0 %v106
    %v204 = vpop.f32.mrb[0].mxu0
    %v205 = vadd.f32 %v73, %v204
    %v206 = vpop.f32.mrb[0].mxu0
    %v207 = vpop.f32.mrb[0].mxu0
    %v208 = vadd.f32 %v73, %v207
    %v209 = vpop.f32.mrb[0].mxu0
    %210 = vmatprep.mubr.bf16.mxu0 0
    %211 = vmatmul.mubr.bf16.gmra.mrb[0].mxu0 %v107
    %v212 = vpop.f32.mrb[0].mxu0
    %v213 = vadd.f32 %v73, %v212
    %v214 = vpop.f32.mrb[0].mxu0
    %v215 = vpop.f32.mrb[0].mxu0
    %v216 = vadd.f32 %v73, %v215
    %v217 = vpop.f32.mrb[0].mxu0
    %218 = vmatprep.mubr.bf16.mxu0 0
    %219 = vmatmul.mubr.bf16.gmra.mrb[0].mxu0 %v108
    %v220 = vpop.f32.mrb[0].mxu0
    %v221 = vadd.f32 %v73, %v220
    %v222 = vpop.f32.mrb[0].mxu0
    %v223 = vpop.f32.mrb[0].mxu0
    %v224 = vadd.f32 %v73, %v223
    %v225 = vpop.f32.mrb[0].mxu0
    %226 = vmatprep.mubr.bf16.mxu0 0
    %227 = vmatmul.mubr.bf16.gmra.mrb[0].mxu0 %v109
    %v228 = vpop.f32.mrb[0].mxu0
    %v229 = vadd.f32 %v73, %v228
    %v230 = vpop.f32.mrb[0].mxu0
    %v231 = vpop.f32.mrb[0].mxu0
    %v232 = vadd.f32 %v73, %v231
    %v233 = vpop.f32.mrb[0].mxu0
    %234 = vmatprep.mubr.bf16.mxu0 0
    %235 = vmatmul.mubr.bf16.gmra.mrb[0].mxu0 %v110
    %v236 = vpop.f32.mrb[0].mxu0
    %v237 = vadd.f32 %v73, %v236
    %v238 = vpop.f32.mrb[0].mxu0
    %v239 = vpop.f32.mrb[0].mxu0
    %v240 = vadd.f32 %v73, %v239
    %v241 = vpop.f32.mrb[0].mxu0
    %242 = vmatprep.mubr.bf16.mxu0 0
    %243 = vmatmul.mubr.bf16.gmra.mrb[0].mxu0 %v111
    %v244 = vpop.f32.mrb[0].mxu0
    %v245 = vadd.f32 %v73, %v244
    %v246 = vpop.f32.mrb[0].mxu0
    %v247 = vpop.f32.mrb[0].mxu0
    %v248 = vadd.f32 %v73, %v247
    %v249 = vpop.f32.mrb[0].mxu0
    %250 = vmatprep.mubr.bf16.mxu0 0
    %251 = vmatmul.mubr.bf16.gmra.mrb[0].mxu0 %v112
    %v252 = vpop.f32.mrb[0].mxu0
    %v253 = vadd.f32 %v73, %v252
    %v254 = vpop.f32.mrb[0].mxu0
    %v255 = vpop.f32.mrb[0].mxu0
    %v256 = vadd.f32 %v73, %v255
    %v257 = vpop.f32.mrb[0].mxu0
    %258 = vmatprep.mubr.bf16.mxu0 0
    %259 = vmatmul.mubr.bf16.gmra.mrb[0].mxu0 %v113
    %v260 = vpop.f32.mrb[0].mxu0
    %v261 = vadd.f32 %v73, %v260
    %v262 = vpop.f32.mrb[0].mxu0
    %v263 = vpop.f32.mrb[0].mxu0
    %v264 = vadd.f32 %v73, %v263
    %v265 = vpop.f32.mrb[0].mxu0
    %266 = vdwg.mxu0
    %v267 = vxor.u32 %v205, 2147483648
    %v268 = vxor.u32 %v208, 2147483648
    %v269 = vxor.u32 %v213, 2147483648
    %v270 = vxor.u32 %v216, 2147483648
    %v271 = vxor.u32 %v221, 2147483648
    %v272 = vxor.u32 %v224, 2147483648
    %v273 = vxor.u32 %v229, 2147483648
    %v274 = vxor.u32 %v232, 2147483648
    %v275 = vxor.u32 %v237, 2147483648
    %v276 = vxor.u32 %v240, 2147483648
    %v277 = vxor.u32 %v245, 2147483648
    %v278 = vxor.u32 %v248, 2147483648
    %v279 = vxor.u32 %v253, 2147483648
    %v280 = vxor.u32 %v256, 2147483648
    %v281 = vxor.u32 %v261, 2147483648
    %v282 = vxor.u32 %v264, 2147483648
    %v283 = vmul.f32 %v267, 1.442695
    %v284 = vpow.pop %v283
    %v285 = vmul.f32 %v268, 1.442695
    %v286 = vpow.pop %v285
    %v287 = vmul.f32 %v269, 1.442695
    %v288 = vpow.pop %v287
    %v289 = vmul.f32 %v270, 1.442695
    %v290 = vpow.pop %v289
    %v291 = vmul.f32 %v271, 1.442695
    %v292 = vpow.pop %v291
    %v293 = vmul.f32 %v272, 1.442695
    %v294 = vpow.pop %v293
    %v295 = vmul.f32 %v273, 1.442695
    %v296 = vpow.pop %v295
    %v297 = vmul.f32 %v274, 1.442695
    %v298 = vpow.pop %v297
    %v299 = vmul.f32 %v275, 1.442695
    %v300 = vpow.pop %v299
    %v301 = vmul.f32 %v276, 1.442695
    %v302 = vpow.pop %v301
    %v303 = vmul.f32 %v277, 1.442695
    %v304 = vpow.pop %v303
    %v305 = vmul.f32 %v278, 1.442695
    %v306 = vpow.pop %v305
    %v307 = vmul.f32 %v279, 1.442695
    %v308 = vpow.pop %v307
    %v309 = vmul.f32 %v280, 1.442695
    %v310 = vpow.pop %v309
    %v311 = vmul.f32 %v281, 1.442695
    %v312 = vpow.pop %v311
    %v313 = vmul.f32 %v282, 1.442695
    %v314 = vpow.pop %v313
    %v315 = vadd.f32 %v284, 1.0
    %v316 = vadd.f32 %v286, 1.0
    %v317 = vadd.f32 %v288, 1.0
    %v318 = vadd.f32 %v290, 1.0
    %v319 = vadd.f32 %v292, 1.0
    %v320 = vadd.f32 %v294, 1.0
    %v321 = vadd.f32 %v296, 1.0
    %v322 = vadd.f32 %v298, 1.0
    %v323 = vadd.f32 %v300, 1.0
    %v324 = vadd.f32 %v302, 1.0
    %v325 = vadd.f32 %v304, 1.0
    %v326 = vadd.f32 %v306, 1.0
    %v327 = vadd.f32 %v308, 1.0
    %v328 = vadd.f32 %v310, 1.0
    %v329 = vadd.f32 %v312, 1.0
    %v330 = vadd.f32 %v314, 1.0
    %v331 = vrcp.pop %v315
    %v332 = vmul.f32 1.0, %v331
    %v333 = vrcp.pop %v316
    %v334 = vmul.f32 1.0, %v333
    %v335 = vrcp.pop %v317
    %v336 = vmul.f32 1.0, %v335
    %v337 = vrcp.pop %v318
    %v338 = vmul.f32 1.0, %v337
    %v339 = vrcp.pop %v319
    %v340 = vmul.f32 1.0, %v339
    %v341 = vrcp.pop %v320
    %v342 = vmul.f32 1.0, %v341
    %v343 = vrcp.pop %v321
    %v344 = vmul.f32 1.0, %v343
    %v345 = vrcp.pop %v322
    %v346 = vmul.f32 1.0, %v345
    %v347 = vrcp.pop %v323
    %v348 = vmul.f32 1.0, %v347
    %v349 = vrcp.pop %v324
    %v350 = vmul.f32 1.0, %v349
    %v351 = vrcp.pop %v325
    %v352 = vmul.f32 1.0, %v351
    %v353 = vrcp.pop %v326
    %v354 = vmul.f32 1.0, %v353
    %v355 = vrcp.pop %v327
    %v356 = vmul.f32 1.0, %v355
    %v357 = vrcp.pop %v328
    %v358 = vmul.f32 1.0, %v357
    %v359 = vrcp.pop %v329
    %v360 = vmul.f32 1.0, %v359
    %v361 = vrcp.pop %v330
    %v362 = vmul.f32 1.0, %v361
    %v363 = vmul.f32 %v205, %v332
    %v364 = vmul.f32 %v208, %v334
    %v365 = vmul.f32 %v213, %v336
    %v366 = vmul.f32 %v216, %v338
    %v367 = vmul.f32 %v221, %v340
    %v368 = vmul.f32 %v224, %v342
    %v369 = vmul.f32 %v229, %v344
    %v370 = vmul.f32 %v232, %v346
    %v371 = vmul.f32 %v237, %v348
    %v372 = vmul.f32 %v240, %v350
    %v373 = vmul.f32 %v245, %v352
    %v374 = vmul.f32 %v248, %v354
    %v375 = vmul.f32 %v253, %v356
    %v376 = vmul.f32 %v256, %v358
    %v377 = vmul.f32 %v261, %v360
    %v378 = vmul.f32 %v264, %v362
    %s379 = scalar_lea.vmem %s1, 64
    %v380 = vld [vmem:[%s379] sm:$0xf]
    %v381 = vld [vmem:[%s379 + $0x4] sm:$0xf]
    %v382 = vld [vmem:[%s379 + $0x8] sm:$0xf]
    %v383 = vld [vmem:[%s379 + $0xc] sm:$0xf]
    %v384 = vld [vmem:[%s379 + $0x10] sm:$0xf]
    %v385 = vld [vmem:[%s379 + $0x14] sm:$0xf]
    %v386 = vld [vmem:[%s379 + $0x18] sm:$0xf]
    %v387 = vld [vmem:[%s379 + $0x1c] sm:$0xf]
    %v388 = vld [vmem:[%s379 + $0x20] sm:$0xf]
    %v389 = vld [vmem:[%s379 + $0x24] sm:$0xf]
    %v390 = vld [vmem:[%s379 + $0x28] sm:$0xf]
    %v391 = vld [vmem:[%s379 + $0x2c] sm:$0xf]
    %v392 = vld [vmem:[%s379 + $0x30] sm:$0xf]
    %v393 = vld [vmem:[%s379 + $0x34] sm:$0xf]
    %v394 = vld [vmem:[%s379 + $0x38] sm:$0xf]
    %v395 = vld [vmem:[%s379 + $0x3c] sm:$0xf]
    %v396 = vld [vmem:[%s9 + $0x1] sm:$0x1]
    %v397 = vlaneseq
    %v398 = vshrl.u32 %v397, 7
    %v399 = vsub.s32 0, %v398
    %v400 = vrot.slane %v396, %v399
    %v417 = vunpack.c.l.b16 %v380
    %v418 = vunpack.c.l.b16 %v381
    %v419 = vunpack.c.l.b16 %v382
    %v420 = vunpack.c.l.b16 %v383
    %v421 = vunpack.c.l.b16 %v384
    %v422 = vunpack.c.l.b16 %v385
    %v423 = vunpack.c.l.b16 %v386
    %v424 = vunpack.c.l.b16 %v387
    %v425 = vunpack.c.l.b16 %v388
    %v426 = vunpack.c.l.b16 %v389
    %v427 = vunpack.c.l.b16 %v390
    %v428 = vunpack.c.l.b16 %v391
    %v429 = vunpack.c.l.b16 %v392
    %v430 = vunpack.c.l.b16 %v393
    %v431 = vunpack.c.l.b16 %v394
    %v432 = vunpack.c.l.b16 %v395
    %v433 = vpack.c.b16 %v418, %v417
    %v434 = vpack.c.b16 %v420, %v419
    %v435 = vpack.c.b16 %v422, %v421
    %v436 = vpack.c.b16 %v424, %v423
    %v437 = vpack.c.b16 %v426, %v425
    %v438 = vpack.c.b16 %v428, %v427
    %v439 = vpack.c.b16 %v430, %v429
    %v440 = vpack.c.b16 %v432, %v431
    %449 = vmatprep.subr.bf16.mxu0 0
    %450 = vmatpush1.bf16.msra.mxu0 %v433
    %451 = vmatprep.subr.bf16.mxu0 0
    %452 = vmatpush1.bf16.msra.mxu0 %v434
    %453 = vmatprep.subr.bf16.mxu0 0
    %454 = vmatpush1.bf16.msra.mxu0 %v435
    %455 = vmatprep.subr.bf16.mxu0 0
    %456 = vmatpush1.bf16.msra.mxu0 %v436
    %457 = vmatprep.subr.bf16.mxu0 0
    %458 = vmatpush1.bf16.msra.mxu0 %v437
    %459 = vmatprep.subr.bf16.mxu0 0
    %460 = vmatpush1.bf16.msra.mxu0 %v438
    %461 = vmatprep.subr.bf16.mxu0 0
    %462 = vmatpush1.bf16.msra.mxu0 %v439
    %463 = vmatprep.subr.bf16.mxu0 0
    %464 = vmatpush1.bf16.msra.mxu0 %v440
    %465 = vmatprep.subr.bf16.mxu0 0
    %466 = vmatpush1.bf16.msra.mxu0 0
    %467 = vmatprep.subr.bf16.mxu0 0
    %468 = vmatpush1.bf16.msra.mxu0 0
    %469 = vmatprep.subr.bf16.mxu0 0
    %470 = vmatpush1.bf16.msra.mxu0 0
    %471 = vmatprep.subr.bf16.mxu0 0
    %472 = vmatpush1.bf16.msra.mxu0 0
    %473 = vmatprep.subr.bf16.mxu0 0
    %474 = vmatpush1.bf16.msra.mxu0 0
    %475 = vmatprep.subr.bf16.mxu0 0
    %476 = vmatpush1.bf16.msra.mxu0 0
    %477 = vmatprep.subr.bf16.mxu0 0
    %478 = vmatpush1.bf16.msra.mxu0 0
    %479 = vmatprep.subr.bf16.mxu0 0
    %480 = vmatpush1.bf16.msra.mxu0 0
    %481 = vmatprep.mubr.bf16.mxu0 0
    %482 = vmatmul.mubr.bf16.gmra.mrb[0].mxu0 %v106
    %v483 = vpop.f32.mrb[0].mxu0
    %v484 = vadd.f32 %v400, %v483
    %v485 = vpop.f32.mrb[0].mxu0
    %v486 = vpop.f32.mrb[0].mxu0
    %v487 = vadd.f32 %v400, %v486
    %v488 = vpop.f32.mrb[0].mxu0
    %489 = vmatprep.mubr.bf16.mxu0 0
    %490 = vmatmul.mubr.bf16.gmra.mrb[0].mxu0 %v107
    %v491 = vpop.f32.mrb[0].mxu0
    %v492 = vadd.f32 %v400, %v491
    %v493 = vpop.f32.mrb[0].mxu0
    %v494 = vpop.f32.mrb[0].mxu0
    %v495 = vadd.f32 %v400, %v494
    %v496 = vpop.f32.mrb[0].mxu0
    %497 = vmatprep.mubr.bf16.mxu0 0
    %498 = vmatmul.mubr.bf16.gmra.mrb[0].mxu0 %v108
    %v499 = vpop.f32.mrb[0].mxu0
    %v500 = vadd.f32 %v400, %v499
    %v501 = vpop.f32.mrb[0].mxu0
    %v502 = vpop.f32.mrb[0].mxu0
    %v503 = vadd.f32 %v400, %v502
    %v504 = vpop.f32.mrb[0].mxu0
    %505 = vmatprep.mubr.bf16.mxu0 0
    %506 = vmatmul.mubr.bf16.gmra.mrb[0].mxu0 %v109
    %v507 = vpop.f32.mrb[0].mxu0
    %v508 = vadd.f32 %v400, %v507
    %v509 = vpop.f32.mrb[0].mxu0
    %v510 = vpop.f32.mrb[0].mxu0
    %v511 = vadd.f32 %v400, %v510
    %v512 = vpop.f32.mrb[0].mxu0
    %513 = vmatprep.mubr.bf16.mxu0 0
    %514 = vmatmul.mubr.bf16.gmra.mrb[0].mxu0 %v110
    %v515 = vpop.f32.mrb[0].mxu0
    %v516 = vadd.f32 %v400, %v515
    %v517 = vpop.f32.mrb[0].mxu0
    %v518 = vpop.f32.mrb[0].mxu0
    %v519 = vadd.f32 %v400, %v518
    %v520 = vpop.f32.mrb[0].mxu0
    %521 = vmatprep.mubr.bf16.mxu0 0
    %522 = vmatmul.mubr.bf16.gmra.mrb[0].mxu0 %v111
    %v523 = vpop.f32.mrb[0].mxu0
    %v524 = vadd.f32 %v400, %v523
    %v525 = vpop.f32.mrb[0].mxu0
    %v526 = vpop.f32.mrb[0].mxu0
    %v527 = vadd.f32 %v400, %v526
    %v528 = vpop.f32.mrb[0].mxu0
    %529 = vmatprep.mubr.bf16.mxu0 0
    %530 = vmatmul.mubr.bf16.gmra.mrb[0].mxu0 %v112
    %v531 = vpop.f32.mrb[0].mxu0
    %v532 = vadd.f32 %v400, %v531
    %v533 = vpop.f32.mrb[0].mxu0
    %v534 = vpop.f32.mrb[0].mxu0
    %v535 = vadd.f32 %v400, %v534
    %v536 = vpop.f32.mrb[0].mxu0
    %537 = vmatprep.mubr.bf16.mxu0 0
    %538 = vmatmul.mubr.bf16.gmra.mrb[0].mxu0 %v113
    %v539 = vpop.f32.mrb[0].mxu0
    %v540 = vadd.f32 %v400, %v539
    %v541 = vpop.f32.mrb[0].mxu0
    %v542 = vpop.f32.mrb[0].mxu0
    %v543 = vadd.f32 %v400, %v542
    %v544 = vpop.f32.mrb[0].mxu0
    %545 = vdwg.mxu0
    %v546 = vxor.u32 %v484, 2147483648
    %v547 = vxor.u32 %v487, 2147483648
    %v548 = vxor.u32 %v492, 2147483648
    %v549 = vxor.u32 %v495, 2147483648
    %v550 = vxor.u32 %v500, 2147483648
    %v551 = vxor.u32 %v503, 2147483648
    %v552 = vxor.u32 %v508, 2147483648
    %v553 = vxor.u32 %v511, 2147483648
    %v554 = vxor.u32 %v516, 2147483648
    %v555 = vxor.u32 %v519, 2147483648
    %v556 = vxor.u32 %v524, 2147483648
    %v557 = vxor.u32 %v527, 2147483648
    %v558 = vxor.u32 %v532, 2147483648
    %v559 = vxor.u32 %v535, 2147483648
    %v560 = vxor.u32 %v540, 2147483648
    %v561 = vxor.u32 %v543, 2147483648
    %v562 = vmul.f32 %v546, 1.442695
    %v563 = vpow.pop %v562
    %v564 = vmul.f32 %v547, 1.442695
    %v565 = vpow.pop %v564
    %v566 = vmul.f32 %v548, 1.442695
    %v567 = vpow.pop %v566
    %v568 = vmul.f32 %v549, 1.442695
    %v569 = vpow.pop %v568
    %v570 = vmul.f32 %v550, 1.442695
    %v571 = vpow.pop %v570
    %v572 = vmul.f32 %v551, 1.442695
    %v573 = vpow.pop %v572
    %v574 = vmul.f32 %v552, 1.442695
    %v575 = vpow.pop %v574
    %v576 = vmul.f32 %v553, 1.442695
    %v577 = vpow.pop %v576
    %v578 = vmul.f32 %v554, 1.442695
    %v579 = vpow.pop %v578
    %v580 = vmul.f32 %v555, 1.442695
    %v581 = vpow.pop %v580
    %v582 = vmul.f32 %v556, 1.442695
    %v583 = vpow.pop %v582
    %v584 = vmul.f32 %v557, 1.442695
    %v585 = vpow.pop %v584
    %v586 = vmul.f32 %v558, 1.442695
    %v587 = vpow.pop %v586
    %v588 = vmul.f32 %v559, 1.442695
    %v589 = vpow.pop %v588
    %v590 = vmul.f32 %v560, 1.442695
    %v591 = vpow.pop %v590
    %v592 = vmul.f32 %v561, 1.442695
    %v593 = vpow.pop %v592
    %v594 = vadd.f32 %v563, 1.0
    %v595 = vadd.f32 %v565, 1.0
    %v596 = vadd.f32 %v567, 1.0
    %v597 = vadd.f32 %v569, 1.0
    %v598 = vadd.f32 %v571, 1.0
    %v599 = vadd.f32 %v573, 1.0
    %v600 = vadd.f32 %v575, 1.0
    %v601 = vadd.f32 %v577, 1.0
    %v602 = vadd.f32 %v579, 1.0
    %v603 = vadd.f32 %v581, 1.0
    %v604 = vadd.f32 %v583, 1.0
    %v605 = vadd.f32 %v585, 1.0
    %v606 = vadd.f32 %v587, 1.0
    %v607 = vadd.f32 %v589, 1.0
    %v608 = vadd.f32 %v591, 1.0
    %v609 = vadd.f32 %v593, 1.0
    %v610 = vrcp.pop %v594
    %v611 = vmul.f32 1.0, %v610
    %v612 = vrcp.pop %v595
    %v613 = vmul.f32 1.0, %v612
    %v614 = vrcp.pop %v596
    %v615 = vmul.f32 1.0, %v614
    %v616 = vrcp.pop %v597
    %v617 = vmul.f32 1.0, %v616
    %v618 = vrcp.pop %v598
    %v619 = vmul.f32 1.0, %v618
    %v620 = vrcp.pop %v599
    %v621 = vmul.f32 1.0, %v620
    %v622 = vrcp.pop %v600
    %v623 = vmul.f32 1.0, %v622
    %v624 = vrcp.pop %v601
    %v625 = vmul.f32 1.0, %v624
    %v626 = vrcp.pop %v602
    %v627 = vmul.f32 1.0, %v626
    %v628 = vrcp.pop %v603
    %v629 = vmul.f32 1.0, %v628
    %v630 = vrcp.pop %v604
    %v631 = vmul.f32 1.0, %v630
    %v632 = vrcp.pop %v605
    %v633 = vmul.f32 1.0, %v632
    %v634 = vrcp.pop %v606
    %v635 = vmul.f32 1.0, %v634
    %v636 = vrcp.pop %v607
    %v637 = vmul.f32 1.0, %v636
    %v638 = vrcp.pop %v608
    %v639 = vmul.f32 1.0, %v638
    %v640 = vrcp.pop %v609
    %v641 = vmul.f32 1.0, %v640
    %v642 = vmul.f32 %v484, %v611
    %v643 = vmul.f32 %v487, %v613
    %v644 = vmul.f32 %v492, %v615
    %v645 = vmul.f32 %v495, %v617
    %v646 = vmul.f32 %v500, %v619
    %v647 = vmul.f32 %v503, %v621
    %v648 = vmul.f32 %v508, %v623
    %v649 = vmul.f32 %v511, %v625
    %v650 = vmul.f32 %v516, %v627
    %v651 = vmul.f32 %v519, %v629
    %v652 = vmul.f32 %v524, %v631
    %v653 = vmul.f32 %v527, %v633
    %v654 = vmul.f32 %v532, %v635
    %v655 = vmul.f32 %v535, %v637
    %v656 = vmul.f32 %v540, %v639
    %v657 = vmul.f32 %v543, %v641
    %v658 = vpack.c.bf16 %v643, %v642
    %v659 = vpack.c.bf16 %v645, %v644
    %v660 = vpack.c.bf16 %v647, %v646
    %v661 = vpack.c.bf16 %v649, %v648
    %v662 = vpack.c.bf16 %v651, %v650
    %v663 = vpack.c.bf16 %v653, %v652
    %v664 = vpack.c.bf16 %v655, %v654
    %v665 = vpack.c.bf16 %v657, %v656
    %v666 = vld [vmem:[%s2] sm:$0xf]
    %v667 = vld [vmem:[%s2 + $0x4] sm:$0xf]
    %v668 = vld [vmem:[%s2 + $0x8] sm:$0xf]
    %v669 = vld [vmem:[%s2 + $0xc] sm:$0xf]
    %v670 = vld [vmem:[%s2 + $0x10] sm:$0xf]
    %v671 = vld [vmem:[%s2 + $0x14] sm:$0xf]
    %v672 = vld [vmem:[%s2 + $0x18] sm:$0xf]
    %v673 = vld [vmem:[%s2 + $0x1c] sm:$0xf]
    %v674 = vld [vmem:[%s9 + $0x2] sm:$0x1]
    %v675 = vlaneseq
    %v676 = vshrl.u32 %v675, 7
    %v677 = vsub.s32 0, %v676
    %v678 = vrot.slane %v674, %v677
    %v687 = vunpack.c.l.b16 %v666
    %v688 = vunpack.c.l.b16 %v667
    %v689 = vunpack.c.l.b16 %v668
    %v690 = vunpack.c.l.b16 %v669
    %v691 = vunpack.c.l.b16 %v670
    %v692 = vunpack.c.l.b16 %v671
    %v693 = vunpack.c.l.b16 %v672
    %v694 = vunpack.c.l.b16 %v673
    %v695 = vpack.c.b16 %v688, %v687
    %v696 = vpack.c.b16 %v690, %v689
    %v697 = vpack.c.b16 %v692, %v691
    %v698 = vpack.c.b16 %v694, %v693
    %vm703 = vcmask 523264
    %v705 = vsel %vm703, %v658, 0
    %v708 = vsel %vm703, %v659, 0
    %v711 = vsel %vm703, %v660, 0
    %v714 = vsel %vm703, %v661, 0
    %v717 = vsel %vm703, %v662, 0
    %v720 = vsel %vm703, %v663, 0
    %v723 = vsel %vm703, %v664, 0
    %v726 = vsel %vm703, %v665, 0
    %728 = vmatprep.subr.bf16.mxu0 0
    %729 = vmatpush1.bf16.msra.mxu0 %v695
    %730 = vmatprep.subr.bf16.mxu0 0
    %731 = vmatpush1.bf16.msra.mxu0 %v696
    %732 = vmatprep.subr.bf16.mxu0 0
    %733 = vmatpush1.bf16.msra.mxu0 %v697
    %734 = vmatprep.subr.bf16.mxu0 0
    %735 = vmatpush1.bf16.msra.mxu0 %v698
    %736 = vmatprep.subr.bf16.mxu0 0
    %737 = vmatpush1.bf16.msra.mxu0 0
    %738 = vmatprep.subr.bf16.mxu0 0
    %739 = vmatpush1.bf16.msra.mxu0 0
    %740 = vmatprep.subr.bf16.mxu0 0
    %741 = vmatpush1.bf16.msra.mxu0 0
    %742 = vmatprep.subr.bf16.mxu0 0
    %743 = vmatpush1.bf16.msra.mxu0 0
    %744 = vmatprep.subr.bf16.mxu0 0
    %745 = vmatpush1.bf16.msra.mxu0 0
    %746 = vmatprep.subr.bf16.mxu0 0
    %747 = vmatpush1.bf16.msra.mxu0 0
    %748 = vmatprep.subr.bf16.mxu0 0
    %749 = vmatpush1.bf16.msra.mxu0 0
    %750 = vmatprep.subr.bf16.mxu0 0
    %751 = vmatpush1.bf16.msra.mxu0 0
    %752 = vmatprep.subr.bf16.mxu0 0
    %753 = vmatpush1.bf16.msra.mxu0 0
    %754 = vmatprep.subr.bf16.mxu0 0
    %755 = vmatpush1.bf16.msra.mxu0 0
    %756 = vmatprep.subr.bf16.mxu0 0
    %757 = vmatpush1.bf16.msra.mxu0 0
    %758 = vmatprep.subr.bf16.mxu0 0
    %759 = vmatpush1.bf16.msra.mxu0 0
    %760 = vmatprep.mubr.bf16.mxu0 0
    %761 = vmatmul.mubr.bf16.gmra.mrb[0].mxu0 %v705
    %v762 = vpop.f32.mrb[0].mxu0
    %v763 = vadd.f32 %v678, %v762
    %v764 = vpop.f32.mrb[0].mxu0
    %v765 = vpop.f32.mrb[0].mxu0
    %v766 = vadd.f32 %v678, %v765
    %v767 = vpop.f32.mrb[0].mxu0
    %768 = vmatprep.mubr.bf16.mxu0 0
    %769 = vmatmul.mubr.bf16.gmra.mrb[0].mxu0 %v708
    %v770 = vpop.f32.mrb[0].mxu0
    %v771 = vadd.f32 %v678, %v770
    %v772 = vpop.f32.mrb[0].mxu0
    %v773 = vpop.f32.mrb[0].mxu0
    %v774 = vadd.f32 %v678, %v773
    %v775 = vpop.f32.mrb[0].mxu0
    %776 = vmatprep.mubr.bf16.mxu0 0
    %777 = vmatmul.mubr.bf16.gmra.mrb[0].mxu0 %v711
    %v778 = vpop.f32.mrb[0].mxu0
    %v779 = vadd.f32 %v678, %v778
    %v780 = vpop.f32.mrb[0].mxu0
    %v781 = vpop.f32.mrb[0].mxu0
    %v782 = vadd.f32 %v678, %v781
    %v783 = vpop.f32.mrb[0].mxu0
    %784 = vmatprep.mubr.bf16.mxu0 0
    %785 = vmatmul.mubr.bf16.gmra.mrb[0].mxu0 %v714
    %v786 = vpop.f32.mrb[0].mxu0
    %v787 = vadd.f32 %v678, %v786
    %v788 = vpop.f32.mrb[0].mxu0
    %v789 = vpop.f32.mrb[0].mxu0
    %v790 = vadd.f32 %v678, %v789
    %v791 = vpop.f32.mrb[0].mxu0
    %792 = vmatprep.mubr.bf16.mxu0 0
    %793 = vmatmul.mubr.bf16.gmra.mrb[0].mxu0 %v717
    %v794 = vpop.f32.mrb[0].mxu0
    %v795 = vadd.f32 %v678, %v794
    %v796 = vpop.f32.mrb[0].mxu0
    %v797 = vpop.f32.mrb[0].mxu0
    %v798 = vadd.f32 %v678, %v797
    %v799 = vpop.f32.mrb[0].mxu0
    %800 = vmatprep.mubr.bf16.mxu0 0
    %801 = vmatmul.mubr.bf16.gmra.mrb[0].mxu0 %v720
    %v802 = vpop.f32.mrb[0].mxu0
    %v803 = vadd.f32 %v678, %v802
    %v804 = vpop.f32.mrb[0].mxu0
    %v805 = vpop.f32.mrb[0].mxu0
    %v806 = vadd.f32 %v678, %v805
    %v807 = vpop.f32.mrb[0].mxu0
    %808 = vmatprep.mubr.bf16.mxu0 0
    %809 = vmatmul.mubr.bf16.gmra.mrb[0].mxu0 %v723
    %v810 = vpop.f32.mrb[0].mxu0
    %v811 = vadd.f32 %v678, %v810
    %v812 = vpop.f32.mrb[0].mxu0
    %v813 = vpop.f32.mrb[0].mxu0
    %v814 = vadd.f32 %v678, %v813
    %v815 = vpop.f32.mrb[0].mxu0
    %816 = vmatprep.mubr.bf16.mxu0 0
    %817 = vmatmul.mubr.bf16.gmra.mrb[0].mxu0 %v726
    %v818 = vpop.f32.mrb[0].mxu0
    %v819 = vadd.f32 %v678, %v818
    %v820 = vpop.f32.mrb[0].mxu0
    %v821 = vpop.f32.mrb[0].mxu0
    %v822 = vadd.f32 %v678, %v821
    %v823 = vpop.f32.mrb[0].mxu0
    %824 = vdwg.mxu0
    %s825 = scalar_lea.vmem %s2, 32
    %v826 = vld [vmem:[%s825] sm:$0xf]
    %v827 = vld [vmem:[%s825 + $0x4] sm:$0xf]
    %v828 = vld [vmem:[%s825 + $0x8] sm:$0xf]
    %v829 = vld [vmem:[%s825 + $0xc] sm:$0xf]
    %v830 = vld [vmem:[%s825 + $0x10] sm:$0xf]
    %v831 = vld [vmem:[%s825 + $0x14] sm:$0xf]
    %v832 = vld [vmem:[%s825 + $0x18] sm:$0xf]
    %v833 = vld [vmem:[%s825 + $0x1c] sm:$0xf]
    %v834 = vld [vmem:[%s9 + $0x3] sm:$0x1]
    %v835 = vlaneseq
    %v836 = vshrl.u32 %v835, 7
    %v837 = vsub.s32 0, %v836
    %v838 = vrot.slane %v834, %v837
    %v847 = vunpack.c.l.b16 %v826
    %v848 = vunpack.c.l.b16 %v827
    %v849 = vunpack.c.l.b16 %v828
    %v850 = vunpack.c.l.b16 %v829
    %v851 = vunpack.c.l.b16 %v830
    %v852 = vunpack.c.l.b16 %v831
    %v853 = vunpack.c.l.b16 %v832
    %v854 = vunpack.c.l.b16 %v833
    %v855 = vpack.c.b16 %v848, %v847
    %v856 = vpack.c.b16 %v850, %v849
    %v857 = vpack.c.b16 %v852, %v851
    %v858 = vpack.c.b16 %v854, %v853
    %863 = vmatprep.subr.bf16.mxu0 0
    %864 = vmatpush1.bf16.msra.mxu0 %v855
    %865 = vmatprep.subr.bf16.mxu0 0
    %866 = vmatpush1.bf16.msra.mxu0 %v856
    %867 = vmatprep.subr.bf16.mxu0 0
    %868 = vmatpush1.bf16.msra.mxu0 %v857
    %869 = vmatprep.subr.bf16.mxu0 0
    %870 = vmatpush1.bf16.msra.mxu0 %v858
    %871 = vmatprep.subr.bf16.mxu0 0
    %872 = vmatpush1.bf16.msra.mxu0 0
    %873 = vmatprep.subr.bf16.mxu0 0
    %874 = vmatpush1.bf16.msra.mxu0 0
    %875 = vmatprep.subr.bf16.mxu0 0
    %876 = vmatpush1.bf16.msra.mxu0 0
    %877 = vmatprep.subr.bf16.mxu0 0
    %878 = vmatpush1.bf16.msra.mxu0 0
    %879 = vmatprep.subr.bf16.mxu0 0
    %880 = vmatpush1.bf16.msra.mxu0 0
    %881 = vmatprep.subr.bf16.mxu0 0
    %882 = vmatpush1.bf16.msra.mxu0 0
    %883 = vmatprep.subr.bf16.mxu0 0
    %884 = vmatpush1.bf16.msra.mxu0 0
    %885 = vmatprep.subr.bf16.mxu0 0
    %886 = vmatpush1.bf16.msra.mxu0 0
    %887 = vmatprep.subr.bf16.mxu0 0
    %888 = vmatpush1.bf16.msra.mxu0 0
    %889 = vmatprep.subr.bf16.mxu0 0
    %890 = vmatpush1.bf16.msra.mxu0 0
    %891 = vmatprep.subr.bf16.mxu0 0
    %892 = vmatpush1.bf16.msra.mxu0 0
    %893 = vmatprep.subr.bf16.mxu0 0
    %894 = vmatpush1.bf16.msra.mxu0 0
    %895 = vmatprep.mubr.bf16.mxu0 0
    %896 = vmatmul.mubr.bf16.gmra.mrb[0].mxu0 %v705
    %v897 = vpop.f32.mrb[0].mxu0
    %v898 = vadd.f32 %v838, %v897
    %v899 = vpop.f32.mrb[0].mxu0
    %v900 = vpop.f32.mrb[0].mxu0
    %v901 = vadd.f32 %v838, %v900
    %v902 = vpop.f32.mrb[0].mxu0
    %903 = vmatprep.mubr.bf16.mxu0 0
    %904 = vmatmul.mubr.bf16.gmra.mrb[0].mxu0 %v708
    %v905 = vpop.f32.mrb[0].mxu0
    %v906 = vadd.f32 %v838, %v905
    %v907 = vpop.f32.mrb[0].mxu0
    %v908 = vpop.f32.mrb[0].mxu0
    %v909 = vadd.f32 %v838, %v908
    %v910 = vpop.f32.mrb[0].mxu0
    %911 = vmatprep.mubr.bf16.mxu0 0
    %912 = vmatmul.mubr.bf16.gmra.mrb[0].mxu0 %v711
    %v913 = vpop.f32.mrb[0].mxu0
    %v914 = vadd.f32 %v838, %v913
    %v915 = vpop.f32.mrb[0].mxu0
    %v916 = vpop.f32.mrb[0].mxu0
    %v917 = vadd.f32 %v838, %v916
    %v918 = vpop.f32.mrb[0].mxu0
    %919 = vmatprep.mubr.bf16.mxu0 0
    %920 = vmatmul.mubr.bf16.gmra.mrb[0].mxu0 %v714
    %v921 = vpop.f32.mrb[0].mxu0
    %v922 = vadd.f32 %v838, %v921
    %v923 = vpop.f32.mrb[0].mxu0
    %v924 = vpop.f32.mrb[0].mxu0
    %v925 = vadd.f32 %v838, %v924
    %v926 = vpop.f32.mrb[0].mxu0
    %927 = vmatprep.mubr.bf16.mxu0 0
    %928 = vmatmul.mubr.bf16.gmra.mrb[0].mxu0 %v717
    %v929 = vpop.f32.mrb[0].mxu0
    %v930 = vadd.f32 %v838, %v929
    %v931 = vpop.f32.mrb[0].mxu0
    %v932 = vpop.f32.mrb[0].mxu0
    %v933 = vadd.f32 %v838, %v932
    %v934 = vpop.f32.mrb[0].mxu0
    %935 = vmatprep.mubr.bf16.mxu0 0
    %936 = vmatmul.mubr.bf16.gmra.mrb[0].mxu0 %v720
    %v937 = vpop.f32.mrb[0].mxu0
    %v938 = vadd.f32 %v838, %v937
    %v939 = vpop.f32.mrb[0].mxu0
    %v940 = vpop.f32.mrb[0].mxu0
    %v941 = vadd.f32 %v838, %v940
    %v942 = vpop.f32.mrb[0].mxu0
    %943 = vmatprep.mubr.bf16.mxu0 0
    %944 = vmatmul.mubr.bf16.gmra.mrb[0].mxu0 %v723
    %v945 = vpop.f32.mrb[0].mxu0
    %v946 = vadd.f32 %v838, %v945
    %v947 = vpop.f32.mrb[0].mxu0
    %v948 = vpop.f32.mrb[0].mxu0
    %v949 = vadd.f32 %v838, %v948
    %v950 = vpop.f32.mrb[0].mxu0
    %951 = vmatprep.mubr.bf16.mxu0 0
    %952 = vmatmul.mubr.bf16.gmra.mrb[0].mxu0 %v726
    %v953 = vpop.f32.mrb[0].mxu0
    %v954 = vadd.f32 %v838, %v953
    %v955 = vpop.f32.mrb[0].mxu0
    %v956 = vpop.f32.mrb[0].mxu0
    %v957 = vadd.f32 %v838, %v956
    %v958 = vpop.f32.mrb[0].mxu0
    %959 = vdwg.mxu0
    %v960 = vld [vmem:[%s3] sm:$0xf]
    %v961 = vld [vmem:[%s3 + $0x4] sm:$0xf]
    %v962 = vld [vmem:[%s3 + $0x8] sm:$0xf]
    %v963 = vld [vmem:[%s3 + $0xc] sm:$0xf]
    %v964 = vld [vmem:[%s3 + $0x10] sm:$0xf]
    %v965 = vld [vmem:[%s3 + $0x14] sm:$0xf]
    %v966 = vld [vmem:[%s3 + $0x18] sm:$0xf]
    %v967 = vld [vmem:[%s3 + $0x1c] sm:$0xf]
    %v968 = vld [vmem:[%s9 + $0x4] sm:$0x1]
    %v969 = vlaneseq
    %v970 = vshrl.u32 %v969, 7
    %v971 = vsub.s32 0, %v970
    %v972 = vrot.slane %v968, %v971
    %v981 = vunpack.c.l.b16 %v960
    %v982 = vunpack.c.l.b16 %v961
    %v983 = vunpack.c.l.b16 %v962
    %v984 = vunpack.c.l.b16 %v963
    %v985 = vunpack.c.l.b16 %v964
    %v986 = vunpack.c.l.b16 %v965
    %v987 = vunpack.c.l.b16 %v966
    %v988 = vunpack.c.l.b16 %v967
    %v989 = vpack.c.b16 %v982, %v981
    %v990 = vpack.c.b16 %v984, %v983
    %v991 = vpack.c.b16 %v986, %v985
    %v992 = vpack.c.b16 %v988, %v987
    %997 = vmatprep.subr.bf16.mxu0 0
    %998 = vmatpush1.bf16.msra.mxu0 %v989
    %999 = vmatprep.subr.bf16.mxu0 0
    %1000 = vmatpush1.bf16.msra.mxu0 %v990
    %1001 = vmatprep.subr.bf16.mxu0 0
    %1002 = vmatpush1.bf16.msra.mxu0 %v991
    %1003 = vmatprep.subr.bf16.mxu0 0
    %1004 = vmatpush1.bf16.msra.mxu0 %v992
    %1005 = vmatprep.subr.bf16.mxu0 0
    %1006 = vmatpush1.bf16.msra.mxu0 0
    %1007 = vmatprep.subr.bf16.mxu0 0
    %1008 = vmatpush1.bf16.msra.mxu0 0
    %1009 = vmatprep.subr.bf16.mxu0 0
    %1010 = vmatpush1.bf16.msra.mxu0 0
    %1011 = vmatprep.subr.bf16.mxu0 0
    %1012 = vmatpush1.bf16.msra.mxu0 0
    %1013 = vmatprep.subr.bf16.mxu0 0
    %1014 = vmatpush1.bf16.msra.mxu0 0
    %1015 = vmatprep.subr.bf16.mxu0 0
    %1016 = vmatpush1.bf16.msra.mxu0 0
    %1017 = vmatprep.subr.bf16.mxu0 0
    %1018 = vmatpush1.bf16.msra.mxu0 0
    %1019 = vmatprep.subr.bf16.mxu0 0
    %1020 = vmatpush1.bf16.msra.mxu0 0
    %1021 = vmatprep.subr.bf16.mxu0 0
    %1022 = vmatpush1.bf16.msra.mxu0 0
    %1023 = vmatprep.subr.bf16.mxu0 0
    %1024 = vmatpush1.bf16.msra.mxu0 0
    %1025 = vmatprep.subr.bf16.mxu0 0
    %1026 = vmatpush1.bf16.msra.mxu0 0
    %1027 = vmatprep.subr.bf16.mxu0 0
    %1028 = vmatpush1.bf16.msra.mxu0 0
    %1029 = vmatprep.mubr.bf16.mxu0 0
    %1030 = vmatmul.mubr.bf16.gmra.mrb[0].mxu0 %v705
    %v1031 = vpop.f32.mrb[0].mxu0
    %v1032 = vadd.f32 %v972, %v1031
    %v1033 = vpop.f32.mrb[0].mxu0
    %v1034 = vpop.f32.mrb[0].mxu0
    %v1035 = vadd.f32 %v972, %v1034
    %v1036 = vpop.f32.mrb[0].mxu0
    %1037 = vmatprep.mubr.bf16.mxu0 0
    %1038 = vmatmul.mubr.bf16.gmra.mrb[0].mxu0 %v708
    %v1039 = vpop.f32.mrb[0].mxu0
    %v1040 = vadd.f32 %v972, %v1039
    %v1041 = vpop.f32.mrb[0].mxu0
    %v1042 = vpop.f32.mrb[0].mxu0
    %v1043 = vadd.f32 %v972, %v1042
    %v1044 = vpop.f32.mrb[0].mxu0
    %1045 = vmatprep.mubr.bf16.mxu0 0
    %1046 = vmatmul.mubr.bf16.gmra.mrb[0].mxu0 %v711
    %v1047 = vpop.f32.mrb[0].mxu0
    %v1048 = vadd.f32 %v972, %v1047
    %v1049 = vpop.f32.mrb[0].mxu0
    %v1050 = vpop.f32.mrb[0].mxu0
    %v1051 = vadd.f32 %v972, %v1050
    %v1052 = vpop.f32.mrb[0].mxu0
    %1053 = vmatprep.mubr.bf16.mxu0 0
    %1054 = vmatmul.mubr.bf16.gmra.mrb[0].mxu0 %v714
    %v1055 = vpop.f32.mrb[0].mxu0
    %v1056 = vadd.f32 %v972, %v1055
    %v1057 = vpop.f32.mrb[0].mxu0
    %v1058 = vpop.f32.mrb[0].mxu0
    %v1059 = vadd.f32 %v972, %v1058
    %v1060 = vpop.f32.mrb[0].mxu0
    %1061 = vmatprep.mubr.bf16.mxu0 0
    %1062 = vmatmul.mubr.bf16.gmra.mrb[0].mxu0 %v717
    %v1063 = vpop.f32.mrb[0].mxu0
    %v1064 = vadd.f32 %v972, %v1063
    %v1065 = vpop.f32.mrb[0].mxu0
    %v1066 = vpop.f32.mrb[0].mxu0
    %v1067 = vadd.f32 %v972, %v1066
    %v1068 = vpop.f32.mrb[0].mxu0
    %1069 = vmatprep.mubr.bf16.mxu0 0
    %1070 = vmatmul.mubr.bf16.gmra.mrb[0].mxu0 %v720
    %v1071 = vpop.f32.mrb[0].mxu0
    %v1072 = vadd.f32 %v972, %v1071
    %v1073 = vpop.f32.mrb[0].mxu0
    %v1074 = vpop.f32.mrb[0].mxu0
    %v1075 = vadd.f32 %v972, %v1074
    %v1076 = vpop.f32.mrb[0].mxu0
    %1077 = vmatprep.mubr.bf16.mxu0 0
    %1078 = vmatmul.mubr.bf16.gmra.mrb[0].mxu0 %v723
    %v1079 = vpop.f32.mrb[0].mxu0
    %v1080 = vadd.f32 %v972, %v1079
    %v1081 = vpop.f32.mrb[0].mxu0
    %v1082 = vpop.f32.mrb[0].mxu0
    %v1083 = vadd.f32 %v972, %v1082
    %v1084 = vpop.f32.mrb[0].mxu0
    %1085 = vmatprep.mubr.bf16.mxu0 0
    %1086 = vmatmul.mubr.bf16.gmra.mrb[0].mxu0 %v726
    %v1087 = vpop.f32.mrb[0].mxu0
    %v1088 = vadd.f32 %v972, %v1087
    %v1089 = vpop.f32.mrb[0].mxu0
    %v1090 = vpop.f32.mrb[0].mxu0
    %v1091 = vadd.f32 %v972, %v1090
    %v1092 = vpop.f32.mrb[0].mxu0
    %1093 = vdwg.mxu0
    %v1094 = vpack.c.bf16 %v766, %v763
    %v1095 = vpack.c.bf16 %v774, %v771
    %v1096 = vpack.c.bf16 %v782, %v779
    %v1097 = vpack.c.bf16 %v790, %v787
    %v1098 = vpack.c.bf16 %v798, %v795
    %v1099 = vpack.c.bf16 %v806, %v803
    %v1100 = vpack.c.bf16 %v814, %v811
    %v1101 = vpack.c.bf16 %v822, %v819
    %v1102 = vpack.c.bf16 %v901, %v898
    %v1103 = vpack.c.bf16 %v909, %v906
    %v1104 = vpack.c.bf16 %v917, %v914
    %v1105 = vpack.c.bf16 %v925, %v922
    %v1106 = vpack.c.bf16 %v933, %v930
    %v1107 = vpack.c.bf16 %v941, %v938
    %v1108 = vpack.c.bf16 %v949, %v946
    %v1109 = vpack.c.bf16 %v957, %v954
    %v1110 = vlaneseq
    %v1111 = vshrl.u32 %v1110, 7
    %v1112 = vadd.s32 %v1111, 8
    %v1113 = vadd.s32 %v1111, 16
    %v1114 = vadd.s32 %v1111, 24
    %v1115 = vadd.s32 %v1111, 32
    %v1116 = vadd.s32 %v1111, 40
    %v1117 = vadd.s32 %v1111, 48
    %v1118 = vadd.s32 %v1111, 56
    %v1119 = vld [vmem:[%s7] sm:$0xff]
    %v1120 = vld [vmem:[%s7 + $0x8] sm:$0x1]
    %v1121 = vld [vmem:[%s8] sm:$0xff]
    %v1122 = vld [vmem:[%s8 + $0x8] sm:$0xff]
    %v1123 = vld [vmem:[%s8 + $0x10] sm:$0xff]
    %v1124 = vld [vmem:[%s8 + $0x18] sm:$0xff]
    %v1125 = vld [vmem:[%s8 + $0x20] sm:$0xff]
    %v1126 = vld [vmem:[%s8 + $0x28] sm:$0xff]
    %v1127 = vld [vmem:[%s8 + $0x30] sm:$0xff]
    %v1128 = vld [vmem:[%s8 + $0x38] sm:$0xff]
    %s1129 = scalar_lea.vmem %s8, 64
    %v1130 = vld [vmem:[%s1129] sm:$0xff]
    %v1131 = vld [vmem:[%s1129 + $0x8] sm:$0xff]
    %v1132 = vld [vmem:[%s1129 + $0x10] sm:$0xff]
    %v1133 = vld [vmem:[%s1129 + $0x18] sm:$0xff]
    %v1134 = vld [vmem:[%s1129 + $0x20] sm:$0xff]
    %v1135 = vld [vmem:[%s1129 + $0x28] sm:$0xff]
    %v1136 = vld [vmem:[%s1129 + $0x30] sm:$0xff]
    %v1137 = vld [vmem:[%s1129 + $0x38] sm:$0xff]
    %v1138 = vadd.s32 %v1111, 4294967287
    %v1139 = vadd.s32 %v1112, 4294967287
    %v1140 = vadd.s32 %v1113, 4294967287
    %v1141 = vadd.s32 %v1114, 4294967287
    %v1142 = vadd.s32 %v1115, 4294967287
    %v1143 = vadd.s32 %v1116, 4294967287
    %v1144 = vadd.s32 %v1117, 4294967287
    %v1145 = vadd.s32 %v1118, 4294967287
    %vm1146 = vcmp.ge.s32.totalorder %v1138, 0
    %vm1147 = vcmp.ge.s32.totalorder %v1139, 0
    %vm1148 = vcmp.ge.s32.totalorder %v1140, 0
    %vm1149 = vcmp.ge.s32.totalorder %v1141, 0
    %vm1150 = vcmp.ge.s32.totalorder %v1142, 0
    %vm1151 = vcmp.ge.s32.totalorder %v1143, 0
    %vm1152 = vcmp.ge.s32.totalorder %v1144, 0
    %vm1153 = vcmp.ge.s32.totalorder %v1145, 0
    %vm1154 = vcmp.lt.s32.totalorder %v1138, 64
    %vm1155 = vcmp.lt.s32.totalorder %v1139, 64
    %vm1156 = vcmp.lt.s32.totalorder %v1140, 64
    %vm1157 = vcmp.lt.s32.totalorder %v1141, 64
    %vm1158 = vcmp.lt.s32.totalorder %v1142, 64
    %vm1159 = vcmp.lt.s32.totalorder %v1143, 64
    %vm1160 = vcmp.lt.s32.totalorder %v1144, 64
    %vm1161 = vcmp.lt.s32.totalorder %v1145, 64
    %vm1162 = vmand %vm1146, %vm1154
    %vm1163 = vmand %vm1147, %vm1155
    %vm1164 = vmand %vm1148, %vm1156
    %vm1165 = vmand %vm1149, %vm1157
    %vm1166 = vmand %vm1150, %vm1158
    %vm1167 = vmand %vm1151, %vm1159
    %vm1168 = vmand %vm1152, %vm1160
    %vm1169 = vmand %vm1153, %vm1161
    %v1170 = vsel %vm1162, 1, 0
    %v1171 = vsel %vm1163, 1, 0
    %v1172 = vsel %vm1164, 1, 0
    %v1173 = vsel %vm1165, 1, 0
    %v1174 = vsel %vm1166, 1, 0
    %v1175 = vsel %vm1167, 1, 0
    %v1176 = vsel %vm1168, 1, 0
    %v1177 = vsel %vm1169, 1, 0
    %v1178 = vcvt.s32.f32 %v1170
    %v1179 = vcvt.s32.f32 %v1171
    %v1180 = vcvt.s32.f32 %v1172
    %v1181 = vcvt.s32.f32 %v1173
    %v1182 = vcvt.s32.f32 %v1174
    %v1183 = vcvt.s32.f32 %v1175
    %v1184 = vcvt.s32.f32 %v1176
    %v1185 = vcvt.s32.f32 %v1177
    %v1186 = vmul.f32 %v1178, %v1121
    %v1187 = vmul.f32 %v1179, %v1122
    %v1188 = vmul.f32 %v1180, %v1123
    %v1189 = vmul.f32 %v1181, %v1124
    %v1190 = vmul.f32 %v1182, %v1125
    %v1191 = vmul.f32 %v1183, %v1126
    %v1192 = vmul.f32 %v1184, %v1127
    %v1193 = vmul.f32 %v1185, %v1128
    %v1194 = vadd.s32 %v1111, 4294967288
    %v1195 = vadd.s32 %v1112, 4294967288
    %v1196 = vadd.s32 %v1113, 4294967288
    %v1197 = vadd.s32 %v1114, 4294967288
    %v1198 = vadd.s32 %v1115, 4294967288
    %v1199 = vadd.s32 %v1116, 4294967288
    %v1200 = vadd.s32 %v1117, 4294967288
    %v1201 = vadd.s32 %v1118, 4294967288
    %vm1202 = vcmp.ge.s32.totalorder %v1194, 0
    %vm1203 = vcmp.ge.s32.totalorder %v1195, 0
    %vm1204 = vcmp.ge.s32.totalorder %v1196, 0
    %vm1205 = vcmp.ge.s32.totalorder %v1197, 0
    %vm1206 = vcmp.ge.s32.totalorder %v1198, 0
    %vm1207 = vcmp.ge.s32.totalorder %v1199, 0
    %vm1208 = vcmp.ge.s32.totalorder %v1200, 0
    %vm1209 = vcmp.ge.s32.totalorder %v1201, 0
    %vm1210 = vcmp.lt.s32.totalorder %v1194, 64
    %vm1211 = vcmp.lt.s32.totalorder %v1195, 64
    %vm1212 = vcmp.lt.s32.totalorder %v1196, 64
    %vm1213 = vcmp.lt.s32.totalorder %v1197, 64
    %vm1214 = vcmp.lt.s32.totalorder %v1198, 64
    %vm1215 = vcmp.lt.s32.totalorder %v1199, 64
    %vm1216 = vcmp.lt.s32.totalorder %v1200, 64
    %vm1217 = vcmp.lt.s32.totalorder %v1201, 64
    %vm1218 = vmand %vm1202, %vm1210
    %vm1219 = vmand %vm1203, %vm1211
    %vm1220 = vmand %vm1204, %vm1212
    %vm1221 = vmand %vm1205, %vm1213
    %vm1222 = vmand %vm1206, %vm1214
    %vm1223 = vmand %vm1207, %vm1215
    %vm1224 = vmand %vm1208, %vm1216
    %vm1225 = vmand %vm1209, %vm1217
    %v1226 = vsel %vm1218, 1, 0
    %v1227 = vsel %vm1219, 1, 0
    %v1228 = vsel %vm1220, 1, 0
    %v1229 = vsel %vm1221, 1, 0
    %v1230 = vsel %vm1222, 1, 0
    %v1231 = vsel %vm1223, 1, 0
    %v1232 = vsel %vm1224, 1, 0
    %v1233 = vsel %vm1225, 1, 0
    %v1234 = vcvt.s32.f32 %v1226
    %v1235 = vcvt.s32.f32 %v1227
    %v1236 = vcvt.s32.f32 %v1228
    %v1237 = vcvt.s32.f32 %v1229
    %v1238 = vcvt.s32.f32 %v1230
    %v1239 = vcvt.s32.f32 %v1231
    %v1240 = vcvt.s32.f32 %v1232
    %v1241 = vcvt.s32.f32 %v1233
    %v1242 = vadd.s32 %v1111, 4294967289
    %v1243 = vadd.s32 %v1112, 4294967289
    %v1244 = vadd.s32 %v1113, 4294967289
    %v1245 = vadd.s32 %v1114, 4294967289
    %v1246 = vadd.s32 %v1115, 4294967289
    %v1247 = vadd.s32 %v1116, 4294967289
    %v1248 = vadd.s32 %v1117, 4294967289
    %v1249 = vadd.s32 %v1118, 4294967289
    %vm1250 = vcmp.ge.s32.totalorder %v1242, 0
    %vm1251 = vcmp.ge.s32.totalorder %v1243, 0
    %vm1252 = vcmp.ge.s32.totalorder %v1244, 0
    %vm1253 = vcmp.ge.s32.totalorder %v1245, 0
    %vm1254 = vcmp.ge.s32.totalorder %v1246, 0
    %vm1255 = vcmp.ge.s32.totalorder %v1247, 0
    %vm1256 = vcmp.ge.s32.totalorder %v1248, 0
    %vm1257 = vcmp.ge.s32.totalorder %v1249, 0
    %vm1258 = vcmp.lt.s32.totalorder %v1242, 64
    %vm1259 = vcmp.lt.s32.totalorder %v1243, 64
    %vm1260 = vcmp.lt.s32.totalorder %v1244, 64
    %vm1261 = vcmp.lt.s32.totalorder %v1245, 64
    %vm1262 = vcmp.lt.s32.totalorder %v1246, 64
    %vm1263 = vcmp.lt.s32.totalorder %v1247, 64
    %vm1264 = vcmp.lt.s32.totalorder %v1248, 64
    %vm1265 = vcmp.lt.s32.totalorder %v1249, 64
    %vm1266 = vmand %vm1250, %vm1258
    %vm1267 = vmand %vm1251, %vm1259
    %vm1268 = vmand %vm1252, %vm1260
    %vm1269 = vmand %vm1253, %vm1261
    %vm1270 = vmand %vm1254, %vm1262
    %vm1271 = vmand %vm1255, %vm1263
    %vm1272 = vmand %vm1256, %vm1264
    %vm1273 = vmand %vm1257, %vm1265
    %v1274 = vsel %vm1266, 1, 0
    %v1275 = vsel %vm1267, 1, 0
    %v1276 = vsel %vm1268, 1, 0
    %v1277 = vsel %vm1269, 1, 0
    %v1278 = vsel %vm1270, 1, 0
    %v1279 = vsel %vm1271, 1, 0
    %v1280 = vsel %vm1272, 1, 0
    %v1281 = vsel %vm1273, 1, 0
    %v1282 = vcvt.s32.f32 %v1274
    %v1283 = vcvt.s32.f32 %v1275
    %v1284 = vcvt.s32.f32 %v1276
    %v1285 = vcvt.s32.f32 %v1277
    %v1286 = vcvt.s32.f32 %v1278
    %v1287 = vcvt.s32.f32 %v1279
    %v1288 = vcvt.s32.f32 %v1280
    %v1289 = vcvt.s32.f32 %v1281
    %v1290 = vmul.f32 %v1282, %v1130
    %v1291 = vmul.f32 %v1283, %v1131
    %v1292 = vmul.f32 %v1284, %v1132
    %v1293 = vmul.f32 %v1285, %v1133
    %v1294 = vmul.f32 %v1286, %v1134
    %v1295 = vmul.f32 %v1287, %v1135
    %v1296 = vmul.f32 %v1288, %v1136
    %v1297 = vmul.f32 %v1289, %v1137
    %v1298 = vadd.s32 %v1111, 4294967295
    %v1299 = vadd.s32 %v1112, 4294967295
    %v1300 = vadd.s32 %v1113, 4294967295
    %v1301 = vadd.s32 %v1114, 4294967295
    %v1302 = vadd.s32 %v1115, 4294967295
    %v1303 = vadd.s32 %v1116, 4294967295
    %v1304 = vadd.s32 %v1117, 4294967295
    %v1305 = vadd.s32 %v1118, 4294967295
    %vm1306 = vcmp.ge.s32.totalorder %v1298, 0
    %vm1307 = vcmp.ge.s32.totalorder %v1299, 0
    %vm1308 = vcmp.ge.s32.totalorder %v1300, 0
    %vm1309 = vcmp.ge.s32.totalorder %v1301, 0
    %vm1310 = vcmp.ge.s32.totalorder %v1302, 0
    %vm1311 = vcmp.ge.s32.totalorder %v1303, 0
    %vm1312 = vcmp.ge.s32.totalorder %v1304, 0
    %vm1313 = vcmp.ge.s32.totalorder %v1305, 0
    %vm1314 = vcmp.lt.s32.totalorder %v1298, 64
    %vm1315 = vcmp.lt.s32.totalorder %v1299, 64
    %vm1316 = vcmp.lt.s32.totalorder %v1300, 64
    %vm1317 = vcmp.lt.s32.totalorder %v1301, 64
    %vm1318 = vcmp.lt.s32.totalorder %v1302, 64
    %vm1319 = vcmp.lt.s32.totalorder %v1303, 64
    %vm1320 = vcmp.lt.s32.totalorder %v1304, 64
    %vm1321 = vcmp.lt.s32.totalorder %v1305, 64
    %vm1322 = vmand %vm1306, %vm1314
    %vm1323 = vmand %vm1307, %vm1315
    %vm1324 = vmand %vm1308, %vm1316
    %vm1325 = vmand %vm1309, %vm1317
    %vm1326 = vmand %vm1310, %vm1318
    %vm1327 = vmand %vm1311, %vm1319
    %vm1328 = vmand %vm1312, %vm1320
    %vm1329 = vmand %vm1313, %vm1321
    %v1330 = vsel %vm1322, 1, 0
    %v1331 = vsel %vm1323, 1, 0
    %v1332 = vsel %vm1324, 1, 0
    %v1333 = vsel %vm1325, 1, 0
    %v1334 = vsel %vm1326, 1, 0
    %v1335 = vsel %vm1327, 1, 0
    %v1336 = vsel %vm1328, 1, 0
    %v1337 = vsel %vm1329, 1, 0
    %v1338 = vcvt.s32.f32 %v1330
    %v1339 = vcvt.s32.f32 %v1331
    %v1340 = vcvt.s32.f32 %v1332
    %v1341 = vcvt.s32.f32 %v1333
    %v1342 = vcvt.s32.f32 %v1334
    %v1343 = vcvt.s32.f32 %v1335
    %v1344 = vcvt.s32.f32 %v1336
    %v1345 = vcvt.s32.f32 %v1337
    %v1346 = vmul.f32 %v1338, %v1121
    %v1347 = vmul.f32 %v1339, %v1122
    %v1348 = vmul.f32 %v1340, %v1123
    %v1349 = vmul.f32 %v1341, %v1124
    %v1350 = vmul.f32 %v1342, %v1125
    %v1351 = vmul.f32 %v1343, %v1126
    %v1352 = vmul.f32 %v1344, %v1127
    %v1353 = vmul.f32 %v1345, %v1128
    %vm1354 = vcmp.ge.s32.totalorder %v1111, 0
    %vm1355 = vcmp.ge.s32.totalorder %v1112, 0
    %vm1356 = vcmp.ge.s32.totalorder %v1113, 0
    %vm1357 = vcmp.ge.s32.totalorder %v1114, 0
    %vm1358 = vcmp.ge.s32.totalorder %v1115, 0
    %vm1359 = vcmp.ge.s32.totalorder %v1116, 0
    %vm1360 = vcmp.ge.s32.totalorder %v1117, 0
    %vm1361 = vcmp.ge.s32.totalorder %v1118, 0
    %vm1362 = vcmp.lt.s32.totalorder %v1111, 64
    %vm1363 = vcmp.lt.s32.totalorder %v1112, 64
    %vm1364 = vcmp.lt.s32.totalorder %v1113, 64
    %vm1365 = vcmp.lt.s32.totalorder %v1114, 64
    %vm1366 = vcmp.lt.s32.totalorder %v1115, 64
    %vm1367 = vcmp.lt.s32.totalorder %v1116, 64
    %vm1368 = vcmp.lt.s32.totalorder %v1117, 64
    %vm1369 = vcmp.lt.s32.totalorder %v1118, 64
    %vm1370 = vmand %vm1354, %vm1362
    %vm1371 = vmand %vm1355, %vm1363
    %vm1372 = vmand %vm1356, %vm1364
    %vm1373 = vmand %vm1357, %vm1365
    %vm1374 = vmand %vm1358, %vm1366
    %vm1375 = vmand %vm1359, %vm1367
    %vm1376 = vmand %vm1360, %vm1368
    %vm1377 = vmand %vm1361, %vm1369
    %v1378 = vsel %vm1370, 1, 0
    %v1379 = vsel %vm1371, 1, 0
    %v1380 = vsel %vm1372, 1, 0
    %v1381 = vsel %vm1373, 1, 0
    %v1382 = vsel %vm1374, 1, 0
    %v1383 = vsel %vm1375, 1, 0
    %v1384 = vsel %vm1376, 1, 0
    %v1385 = vsel %vm1377, 1, 0
    %v1386 = vcvt.s32.f32 %v1378
    %v1387 = vcvt.s32.f32 %v1379
    %v1388 = vcvt.s32.f32 %v1380
    %v1389 = vcvt.s32.f32 %v1381
    %v1390 = vcvt.s32.f32 %v1382
    %v1391 = vcvt.s32.f32 %v1383
    %v1392 = vcvt.s32.f32 %v1384
    %v1393 = vcvt.s32.f32 %v1385
    %v1394 = vadd.s32 %v1111, 1
    %v1395 = vadd.s32 %v1112, 1
    %v1396 = vadd.s32 %v1113, 1
    %v1397 = vadd.s32 %v1114, 1
    %v1398 = vadd.s32 %v1115, 1
    %v1399 = vadd.s32 %v1116, 1
    %v1400 = vadd.s32 %v1117, 1
    %v1401 = vadd.s32 %v1118, 1
    %vm1402 = vcmp.ge.s32.totalorder %v1394, 0
    %vm1403 = vcmp.ge.s32.totalorder %v1395, 0
    %vm1404 = vcmp.ge.s32.totalorder %v1396, 0
    %vm1405 = vcmp.ge.s32.totalorder %v1397, 0
    %vm1406 = vcmp.ge.s32.totalorder %v1398, 0
    %vm1407 = vcmp.ge.s32.totalorder %v1399, 0
    %vm1408 = vcmp.ge.s32.totalorder %v1400, 0
    %vm1409 = vcmp.ge.s32.totalorder %v1401, 0
    %vm1410 = vcmp.lt.s32.totalorder %v1394, 64
    %vm1411 = vcmp.lt.s32.totalorder %v1395, 64
    %vm1412 = vcmp.lt.s32.totalorder %v1396, 64
    %vm1413 = vcmp.lt.s32.totalorder %v1397, 64
    %vm1414 = vcmp.lt.s32.totalorder %v1398, 64
    %vm1415 = vcmp.lt.s32.totalorder %v1399, 64
    %vm1416 = vcmp.lt.s32.totalorder %v1400, 64
    %vm1417 = vcmp.lt.s32.totalorder %v1401, 64
    %vm1418 = vmand %vm1402, %vm1410
    %vm1419 = vmand %vm1403, %vm1411
    %vm1420 = vmand %vm1404, %vm1412
    %vm1421 = vmand %vm1405, %vm1413
    %vm1422 = vmand %vm1406, %vm1414
    %vm1423 = vmand %vm1407, %vm1415
    %vm1424 = vmand %vm1408, %vm1416
    %vm1425 = vmand %vm1409, %vm1417
    %v1426 = vsel %vm1418, 1, 0
    %v1427 = vsel %vm1419, 1, 0
    %v1428 = vsel %vm1420, 1, 0
    %v1429 = vsel %vm1421, 1, 0
    %v1430 = vsel %vm1422, 1, 0
    %v1431 = vsel %vm1423, 1, 0
    %v1432 = vsel %vm1424, 1, 0
    %v1433 = vsel %vm1425, 1, 0
    %v1434 = vcvt.s32.f32 %v1426
    %v1435 = vcvt.s32.f32 %v1427
    %v1436 = vcvt.s32.f32 %v1428
    %v1437 = vcvt.s32.f32 %v1429
    %v1438 = vcvt.s32.f32 %v1430
    %v1439 = vcvt.s32.f32 %v1431
    %v1440 = vcvt.s32.f32 %v1432
    %v1441 = vcvt.s32.f32 %v1433
    %v1442 = vmul.f32 %v1434, %v1130
    %v1443 = vmul.f32 %v1435, %v1131
    %v1444 = vmul.f32 %v1436, %v1132
    %v1445 = vmul.f32 %v1437, %v1133
    %v1446 = vmul.f32 %v1438, %v1134
    %v1447 = vmul.f32 %v1439, %v1135
    %v1448 = vmul.f32 %v1440, %v1136
    %v1449 = vmul.f32 %v1441, %v1137
    %v1450 = vadd.s32 %v1111, 7
    %v1451 = vadd.s32 %v1112, 7
    %v1452 = vadd.s32 %v1113, 7
    %v1453 = vadd.s32 %v1114, 7
    %v1454 = vadd.s32 %v1115, 7
    %v1455 = vadd.s32 %v1116, 7
    %v1456 = vadd.s32 %v1117, 7
    %v1457 = vadd.s32 %v1118, 7
    %vm1458 = vcmp.ge.s32.totalorder %v1450, 0
    %vm1459 = vcmp.ge.s32.totalorder %v1451, 0
    %vm1460 = vcmp.ge.s32.totalorder %v1452, 0
    %vm1461 = vcmp.ge.s32.totalorder %v1453, 0
    %vm1462 = vcmp.ge.s32.totalorder %v1454, 0
    %vm1463 = vcmp.ge.s32.totalorder %v1455, 0
    %vm1464 = vcmp.ge.s32.totalorder %v1456, 0
    %vm1465 = vcmp.ge.s32.totalorder %v1457, 0
    %vm1466 = vcmp.lt.s32.totalorder %v1450, 64
    %vm1467 = vcmp.lt.s32.totalorder %v1451, 64
    %vm1468 = vcmp.lt.s32.totalorder %v1452, 64
    %vm1469 = vcmp.lt.s32.totalorder %v1453, 64
    %vm1470 = vcmp.lt.s32.totalorder %v1454, 64
    %vm1471 = vcmp.lt.s32.totalorder %v1455, 64
    %vm1472 = vcmp.lt.s32.totalorder %v1456, 64
    %vm1473 = vcmp.lt.s32.totalorder %v1457, 64
    %vm1474 = vmand %vm1458, %vm1466
    %vm1475 = vmand %vm1459, %vm1467
    %vm1476 = vmand %vm1460, %vm1468
    %vm1477 = vmand %vm1461, %vm1469
    %vm1478 = vmand %vm1462, %vm1470
    %vm1479 = vmand %vm1463, %vm1471
    %vm1480 = vmand %vm1464, %vm1472
    %vm1481 = vmand %vm1465, %vm1473
    %v1482 = vsel %vm1474, 1, 0
    %v1483 = vsel %vm1475, 1, 0
    %v1484 = vsel %vm1476, 1, 0
    %v1485 = vsel %vm1477, 1, 0
    %v1486 = vsel %vm1478, 1, 0
    %v1487 = vsel %vm1479, 1, 0
    %v1488 = vsel %vm1480, 1, 0
    %v1489 = vsel %vm1481, 1, 0
    %v1490 = vcvt.s32.f32 %v1482
    %v1491 = vcvt.s32.f32 %v1483
    %v1492 = vcvt.s32.f32 %v1484
    %v1493 = vcvt.s32.f32 %v1485
    %v1494 = vcvt.s32.f32 %v1486
    %v1495 = vcvt.s32.f32 %v1487
    %v1496 = vcvt.s32.f32 %v1488
    %v1497 = vcvt.s32.f32 %v1489
    %v1498 = vmul.f32 %v1490, %v1121
    %v1499 = vmul.f32 %v1491, %v1122
    %v1500 = vmul.f32 %v1492, %v1123
    %v1501 = vmul.f32 %v1493, %v1124
    %v1502 = vmul.f32 %v1494, %v1125
    %v1503 = vmul.f32 %v1495, %v1126
    %v1504 = vmul.f32 %v1496, %v1127
    %v1505 = vmul.f32 %v1497, %v1128
    %v1506 = vadd.s32 %v1112, 8
    %v1507 = vadd.s32 %v1113, 8
    %v1508 = vadd.s32 %v1114, 8
    %v1509 = vadd.s32 %v1115, 8
    %v1510 = vadd.s32 %v1116, 8
    %v1511 = vadd.s32 %v1117, 8
    %v1512 = vadd.s32 %v1118, 8
    %vm1513 = vcmp.ge.s32.totalorder %v1506, 0
    %vm1514 = vcmp.ge.s32.totalorder %v1507, 0
    %vm1515 = vcmp.ge.s32.totalorder %v1508, 0
    %vm1516 = vcmp.ge.s32.totalorder %v1509, 0
    %vm1517 = vcmp.ge.s32.totalorder %v1510, 0
    %vm1518 = vcmp.ge.s32.totalorder %v1511, 0
    %vm1519 = vcmp.ge.s32.totalorder %v1512, 0
    %vm1520 = vcmp.lt.s32.totalorder %v1506, 64
    %vm1521 = vcmp.lt.s32.totalorder %v1507, 64
    %vm1522 = vcmp.lt.s32.totalorder %v1508, 64
    %vm1523 = vcmp.lt.s32.totalorder %v1509, 64
    %vm1524 = vcmp.lt.s32.totalorder %v1510, 64
    %vm1525 = vcmp.lt.s32.totalorder %v1511, 64
    %vm1526 = vcmp.lt.s32.totalorder %v1512, 64
    %vm1527 = vmand %vm1513, %vm1520
    %vm1528 = vmand %vm1514, %vm1521
    %vm1529 = vmand %vm1515, %vm1522
    %vm1530 = vmand %vm1516, %vm1523
    %vm1531 = vmand %vm1517, %vm1524
    %vm1532 = vmand %vm1518, %vm1525
    %vm1533 = vmand %vm1519, %vm1526
    %v1534 = vsel %vm1527, 1, 0
    %v1535 = vsel %vm1528, 1, 0
    %v1536 = vsel %vm1529, 1, 0
    %v1537 = vsel %vm1530, 1, 0
    %v1538 = vsel %vm1531, 1, 0
    %v1539 = vsel %vm1532, 1, 0
    %v1540 = vsel %vm1533, 1, 0
    %v1541 = vcvt.s32.f32 %v1534
    %v1542 = vcvt.s32.f32 %v1535
    %v1543 = vcvt.s32.f32 %v1536
    %v1544 = vcvt.s32.f32 %v1537
    %v1545 = vcvt.s32.f32 %v1538
    %v1546 = vcvt.s32.f32 %v1539
    %v1547 = vcvt.s32.f32 %v1540
    %v1548 = vadd.s32 %v1111, 9
    %v1549 = vadd.s32 %v1112, 9
    %v1550 = vadd.s32 %v1113, 9
    %v1551 = vadd.s32 %v1114, 9
    %v1552 = vadd.s32 %v1115, 9
    %v1553 = vadd.s32 %v1116, 9
    %v1554 = vadd.s32 %v1117, 9
    %v1555 = vadd.s32 %v1118, 9
    %vm1556 = vcmp.ge.s32.totalorder %v1548, 0
    %vm1557 = vcmp.ge.s32.totalorder %v1549, 0
    %vm1558 = vcmp.ge.s32.totalorder %v1550, 0
    %vm1559 = vcmp.ge.s32.totalorder %v1551, 0
    %vm1560 = vcmp.ge.s32.totalorder %v1552, 0
    %vm1561 = vcmp.ge.s32.totalorder %v1553, 0
    %vm1562 = vcmp.ge.s32.totalorder %v1554, 0
    %vm1563 = vcmp.ge.s32.totalorder %v1555, 0
    %vm1564 = vcmp.lt.s32.totalorder %v1548, 64
    %vm1565 = vcmp.lt.s32.totalorder %v1549, 64
    %vm1566 = vcmp.lt.s32.totalorder %v1550, 64
    %vm1567 = vcmp.lt.s32.totalorder %v1551, 64
    %vm1568 = vcmp.lt.s32.totalorder %v1552, 64
    %vm1569 = vcmp.lt.s32.totalorder %v1553, 64
    %vm1570 = vcmp.lt.s32.totalorder %v1554, 64
    %vm1571 = vcmp.lt.s32.totalorder %v1555, 64
    %vm1572 = vmand %vm1556, %vm1564
    %vm1573 = vmand %vm1557, %vm1565
    %vm1574 = vmand %vm1558, %vm1566
    %vm1575 = vmand %vm1559, %vm1567
    %vm1576 = vmand %vm1560, %vm1568
    %vm1577 = vmand %vm1561, %vm1569
    %vm1578 = vmand %vm1562, %vm1570
    %vm1579 = vmand %vm1563, %vm1571
    %v1580 = vsel %vm1572, 1, 0
    %v1581 = vsel %vm1573, 1, 0
    %v1582 = vsel %vm1574, 1, 0
    %v1583 = vsel %vm1575, 1, 0
    %v1584 = vsel %vm1576, 1, 0
    %v1585 = vsel %vm1577, 1, 0
    %v1586 = vsel %vm1578, 1, 0
    %v1587 = vsel %vm1579, 1, 0
    %v1588 = vcvt.s32.f32 %v1580
    %v1589 = vcvt.s32.f32 %v1581
    %v1590 = vcvt.s32.f32 %v1582
    %v1591 = vcvt.s32.f32 %v1583
    %v1592 = vcvt.s32.f32 %v1584
    %v1593 = vcvt.s32.f32 %v1585
    %v1594 = vcvt.s32.f32 %v1586
    %v1595 = vcvt.s32.f32 %v1587
    %v1596 = vmul.f32 %v1588, %v1130
    %v1597 = vmul.f32 %v1589, %v1131
    %v1598 = vmul.f32 %v1590, %v1132
    %v1599 = vmul.f32 %v1591, %v1133
    %v1600 = vmul.f32 %v1592, %v1134
    %v1601 = vmul.f32 %v1593, %v1135
    %v1602 = vmul.f32 %v1594, %v1136
    %v1603 = vmul.f32 %v1595, %v1137
    %v1604 = vpack.c.bf16 %v1035, %v1032
    %v1605 = vpack.c.bf16 %v1043, %v1040
    %v1606 = vpack.c.bf16 %v1051, %v1048
    %v1607 = vpack.c.bf16 %v1059, %v1056
    %vm1608 = vcmask 261120
    %v1610 = vsel %vm1608, %v1094, 0
    %v1613 = vsel %vm1608, %v1095, 0
    %v1616 = vsel %vm1608, %v1096, 0
    %v1619 = vsel %vm1608, %v1097, 0
    %v1622 = vsel %vm1608, %v1102, 0
    %v1625 = vsel %vm1608, %v1103, 0
    %v1628 = vsel %vm1608, %v1104, 0
    %v1631 = vsel %vm1608, %v1105, 0
    %1633 = vmatprep.subr.bf16.mxu0 0
    %1634 = vmatpush1.bf16.xpose.msra.mxu0 %v1622
    %1635 = vmatprep.subr.bf16.mxu0 0
    %1636 = vmatpush1.bf16.xpose.msra.mxu0 %v1625
    %1637 = vmatprep.subr.bf16.mxu0 0
    %1638 = vmatpush1.bf16.xpose.msra.mxu0 %v1628
    %1639 = vmatprep.subr.bf16.mxu0 0
    %1640 = vmatpush1.bf16.xpose.msra.mxu0 %v1631
    %1641 = vmatprep.subr.bf16.mxu0 0
    %1642 = vmatpush1.bf16.xpose.msra.mxu0 0
    %1643 = vmatprep.subr.bf16.mxu0 0
    %1644 = vmatpush1.bf16.xpose.msra.mxu0 0
    %1645 = vmatprep.subr.bf16.mxu0 0
    %1646 = vmatpush1.bf16.xpose.msra.mxu0 0
    %1647 = vmatprep.subr.bf16.mxu0 0
    %1648 = vmatpush1.bf16.xpose.msra.mxu0 0
    %1649 = vmatprep.subr.bf16.mxu0 0
    %1650 = vmatpush1.bf16.xpose.msra.mxu0 0
    %1651 = vmatprep.subr.bf16.mxu0 0
    %1652 = vmatpush1.bf16.xpose.msra.mxu0 0
    %1653 = vmatprep.subr.bf16.mxu0 0
    %1654 = vmatpush1.bf16.xpose.msra.mxu0 0
    %1655 = vmatprep.subr.bf16.mxu0 0
    %1656 = vmatpush1.bf16.xpose.msra.mxu0 0
    %1657 = vmatprep.subr.bf16.mxu0 0
    %1658 = vmatpush1.bf16.xpose.msra.mxu0 0
    %1659 = vmatprep.subr.bf16.mxu0 0
    %1660 = vmatpush1.bf16.xpose.msra.mxu0 0
    %1661 = vmatprep.subr.bf16.mxu0 0
    %1662 = vmatpush1.bf16.xpose.msra.mxu0 0
    %1663 = vmatprep.subr.bf16.mxu0 0
    %1664 = vmatpush1.bf16.xpose.msra.mxu0 0
    %1665 = vmatprep.mubr.bf16.mxu0 0
    %1666 = vmatmul.mubr.bf16.gmra.mrb[0].mxu0 %v1610
    %v1667 = vpop.f32.mrb[0].mxu0
    %v1668 = vadd.f32 0.0, %v1667
    %v1669 = vpop.f32.mrb[0].mxu0
    %v1670 = vpop.f32.mrb[0].mxu0
    %v1671 = vadd.f32 0.0, %v1670
    %v1672 = vpop.f32.mrb[0].mxu0
    %1673 = vmatprep.mubr.bf16.mxu0 0
    %1674 = vmatmul.mubr.bf16.gmra.mrb[0].mxu0 %v1613
    %v1675 = vpop.f32.mrb[0].mxu0
    %v1676 = vadd.f32 0.0, %v1675
    %v1677 = vpop.f32.mrb[0].mxu0
    %v1678 = vpop.f32.mrb[0].mxu0
    %v1679 = vadd.f32 0.0, %v1678
    %v1680 = vpop.f32.mrb[0].mxu0
    %1681 = vmatprep.mubr.bf16.mxu0 0
    %1682 = vmatmul.mubr.bf16.gmra.mrb[0].mxu0 %v1616
    %v1683 = vpop.f32.mrb[0].mxu0
    %v1684 = vadd.f32 0.0, %v1683
    %v1685 = vpop.f32.mrb[0].mxu0
    %v1686 = vpop.f32.mrb[0].mxu0
    %v1687 = vadd.f32 0.0, %v1686
    %v1688 = vpop.f32.mrb[0].mxu0
    %1689 = vmatprep.mubr.bf16.mxu0 0
    %1690 = vmatmul.mubr.bf16.gmra.mrb[0].mxu0 %v1619
    %v1691 = vpop.f32.mrb[0].mxu0
    %v1692 = vadd.f32 0.0, %v1691
    %v1693 = vpop.f32.mrb[0].mxu0
    %v1694 = vpop.f32.mrb[0].mxu0
    %v1695 = vadd.f32 0.0, %v1694
    %v1696 = vpop.f32.mrb[0].mxu0
    %1697 = vdwg.mxu0
    %v1698 = vsel %vm703, %v1668, -inf
    %1699 = vmax.xlane.f32.xlu0 %v1698
    %v1700 = vpop.xlane.xlu0 %1699
    %v1701 = vsel %vm703, %v1671, -inf
    %1702 = vmax.xlane.f32.xlu0 %v1701
    %v1703 = vpop.xlane.xlu0 %1702
    %v1704 = vsel %vm703, %v1676, -inf
    %1705 = vmax.xlane.f32.xlu0 %v1704
    %v1706 = vpop.xlane.xlu0 %1705
    %v1707 = vsel %vm703, %v1679, -inf
    %1708 = vmax.xlane.f32.xlu0 %v1707
    %v1709 = vpop.xlane.xlu0 %1708
    %v1710 = vsel %vm703, %v1684, -inf
    %1711 = vmax.xlane.f32.xlu0 %v1710
    %v1712 = vpop.xlane.xlu0 %1711
    %v1713 = vsel %vm703, %v1687, -inf
    %1714 = vmax.xlane.f32.xlu0 %v1713
    %v1715 = vpop.xlane.xlu0 %1714
    %v1716 = vsel %vm703, %v1692, -inf
    %1717 = vmax.xlane.f32.xlu0 %v1716
    %v1718 = vpop.xlane.xlu0 %1717
    %v1719 = vsel %vm703, %v1695, -inf
    %1720 = vmax.xlane.f32.xlu0 %v1719
    %v1721 = vpop.xlane.xlu0 %1720
    %v1722 = vsub.f32 %v1668, %v1700
    %v1723 = vsub.f32 %v1671, %v1703
    %v1724 = vsub.f32 %v1676, %v1706
    %v1725 = vsub.f32 %v1679, %v1709
    %v1726 = vsub.f32 %v1684, %v1712
    %v1727 = vsub.f32 %v1687, %v1715
    %v1728 = vsub.f32 %v1692, %v1718
    %v1729 = vsub.f32 %v1695, %v1721
    %v1730 = vmul.f32 %v1722, 1.442695
    %v1731 = vpow.pop %v1730
    %v1732 = vmul.f32 %v1723, 1.442695
    %v1733 = vpow.pop %v1732
    %v1734 = vmul.f32 %v1724, 1.442695
    %v1735 = vpow.pop %v1734
    %v1736 = vmul.f32 %v1725, 1.442695
    %v1737 = vpow.pop %v1736
    %v1738 = vmul.f32 %v1726, 1.442695
    %v1739 = vpow.pop %v1738
    %v1740 = vmul.f32 %v1727, 1.442695
    %v1741 = vpow.pop %v1740
    %v1742 = vmul.f32 %v1728, 1.442695
    %v1743 = vpow.pop %v1742
    %v1744 = vmul.f32 %v1729, 1.442695
    %v1745 = vpow.pop %v1744
    %v1746 = vsel %vm703, %v1731, 0.0
    %1747 = vadd.xlane.f32.xlu0 %v1746
    %v1748 = vpop.xlane.xlu0 %1747
    %v1749 = vsel %vm703, %v1733, 0.0
    %1750 = vadd.xlane.f32.xlu0 %v1749
    %v1751 = vpop.xlane.xlu0 %1750
    %v1752 = vsel %vm703, %v1735, 0.0
    %1753 = vadd.xlane.f32.xlu0 %v1752
    %v1754 = vpop.xlane.xlu0 %1753
    %v1755 = vsel %vm703, %v1737, 0.0
    %1756 = vadd.xlane.f32.xlu0 %v1755
    %v1757 = vpop.xlane.xlu0 %1756
    %v1758 = vsel %vm703, %v1739, 0.0
    %1759 = vadd.xlane.f32.xlu0 %v1758
    %v1760 = vpop.xlane.xlu0 %1759
    %v1761 = vsel %vm703, %v1741, 0.0
    %1762 = vadd.xlane.f32.xlu0 %v1761
    %v1763 = vpop.xlane.xlu0 %1762
    %v1764 = vsel %vm703, %v1743, 0.0
    %1765 = vadd.xlane.f32.xlu0 %v1764
    %v1766 = vpop.xlane.xlu0 %1765
    %v1767 = vsel %vm703, %v1745, 0.0
    %1768 = vadd.xlane.f32.xlu0 %v1767
    %v1769 = vpop.xlane.xlu0 %1768
    %v1770 = vrcp.pop %v1748
    %v1771 = vrcp.pop %v1751
    %v1772 = vrcp.pop %v1754
    %v1773 = vrcp.pop %v1757
    %v1774 = vrcp.pop %v1760
    %v1775 = vrcp.pop %v1763
    %v1776 = vrcp.pop %v1766
    %v1777 = vrcp.pop %v1769
    %v1778 = vmul.f32 %v1731, %v1770
    %v1779 = vmul.f32 %v1733, %v1771
    %v1780 = vmul.f32 %v1735, %v1772
    %v1781 = vmul.f32 %v1737, %v1773
    %v1782 = vmul.f32 %v1739, %v1774
    %v1783 = vmul.f32 %v1741, %v1775
    %v1784 = vmul.f32 %v1743, %v1776
    %v1785 = vmul.f32 %v1745, %v1777
    %v1786 = vpack.c.bf16 %v1779, %v1778
    %v1787 = vpack.c.bf16 %v1781, %v1780
    %v1788 = vpack.c.bf16 %v1783, %v1782
    %v1789 = vpack.c.bf16 %v1785, %v1784
    %v1790 = vrot.slane %v1032, 7
    %v1791 = vrot.slane %v1035, 7
    %v1792 = vrot.slane %v1040, 7
    %v1793 = vrot.slane %v1043, 7
    %v1794 = vrot.slane %v1048, 7
    %v1795 = vrot.slane %v1051, 7
    %v1796 = vrot.slane %v1056, 7
    %v1797 = vrot.slane %v1059, 7
    %vm1798 = vcmp.lt.s32.totalorder %v1111, 1
    %v1799 = vsel %vm1798, %v1796, %v1797
    %v1800 = vsel %vm1798, %v1795, %v1796
    %v1801 = vsel %vm1798, %v1794, %v1795
    %v1802 = vsel %vm1798, %v1793, %v1794
    %v1803 = vsel %vm1798, %v1792, %v1793
    %v1804 = vsel %vm1798, %v1791, %v1792
    %v1805 = vsel %vm1798, %v1790, %v1791
    %v1806 = vsel %vm1798, %v1797, %v1790
    %1808 = vset.pattern.permute.xlu0 0
    %1809 = vperm.xlu0 %1808, %v1186
    %v1810 = vpop.permute.xlu0 %1809
    %1813 = vset.pattern.permute.xlu0 0
    %1814 = vperm.xlu0 %1813, %v1187
    %v1815 = vpop.permute.xlu0 %1814
    %1818 = vset.pattern.permute.xlu0 0
    %1819 = vperm.xlu0 %1818, %v1188
    %v1820 = vpop.permute.xlu0 %1819
    %1823 = vset.pattern.permute.xlu0 0
    %1824 = vperm.xlu0 %1823, %v1189
    %v1825 = vpop.permute.xlu0 %1824
    %1828 = vset.pattern.permute.xlu0 0
    %1829 = vperm.xlu0 %1828, %v1190
    %v1830 = vpop.permute.xlu0 %1829
    %1833 = vset.pattern.permute.xlu0 0
    %1834 = vperm.xlu0 %1833, %v1191
    %v1835 = vpop.permute.xlu0 %1834
    %1838 = vset.pattern.permute.xlu0 0
    %1839 = vperm.xlu0 %1838, %v1192
    %v1840 = vpop.permute.xlu0 %1839
    %1843 = vset.pattern.permute.xlu0 0
    %1844 = vperm.xlu0 %1843, %v1193
    %v1845 = vpop.permute.xlu0 %1844
    %v1847 = vmul.f32 %v1799, %v1810
    %v1848 = vmul.f32 %v1806, %v1815
    %v1849 = vmul.f32 %v1805, %v1820
    %v1850 = vmul.f32 %v1804, %v1825
    %v1851 = vmul.f32 %v1803, %v1830
    %v1852 = vmul.f32 %v1802, %v1835
    %v1853 = vmul.f32 %v1801, %v1840
    %v1854 = vmul.f32 %v1800, %v1845
    %v1855 = vlaneseq
    %v1856 = vshrl.u32 %v1855, 7
    %v1857 = vsub.s32 0, %v1856
    %v1858 = vrot.slane %v1119, %v1857
    %v1859 = vmul.f32 %v1847, %v1858
    %v1860 = vmul.f32 %v1848, %v1858
    %v1861 = vmul.f32 %v1849, %v1858
    %v1862 = vmul.f32 %v1850, %v1858
    %v1863 = vmul.f32 %v1851, %v1858
    %v1864 = vmul.f32 %v1852, %v1858
    %v1865 = vmul.f32 %v1853, %v1858
    %v1866 = vmul.f32 %v1854, %v1858
    %v1867 = vadd.f32 %v1859, 0.0
    %v1868 = vadd.f32 %v1860, 0.0
    %v1869 = vadd.f32 %v1861, 0.0
    %v1870 = vadd.f32 %v1862, 0.0
    %v1871 = vadd.f32 %v1863, 0.0
    %v1872 = vadd.f32 %v1864, 0.0
    %v1873 = vadd.f32 %v1865, 0.0
    %v1874 = vadd.f32 %v1866, 0.0
    %v1875 = vmul.f32 %v1059, %v1234
    %v1876 = vmul.f32 %v1032, %v1235
    %v1877 = vmul.f32 %v1035, %v1236
    %v1878 = vmul.f32 %v1040, %v1237
    %v1879 = vmul.f32 %v1043, %v1238
    %v1880 = vmul.f32 %v1048, %v1239
    %v1881 = vmul.f32 %v1051, %v1240
    %v1882 = vmul.f32 %v1056, %v1241
    %v1883 = vlaneseq
    %v1884 = vshrl.u32 %v1883, 7
    %v1885 = vsub.s32 1, %v1884
    %v1886 = vrot.slane %v1119, %v1885
    %v1887 = vmul.f32 %v1875, %v1886
    %v1888 = vmul.f32 %v1876, %v1886
    %v1889 = vmul.f32 %v1877, %v1886
    %v1890 = vmul.f32 %v1878, %v1886
    %v1891 = vmul.f32 %v1879, %v1886
    %v1892 = vmul.f32 %v1880, %v1886
    %v1893 = vmul.f32 %v1881, %v1886
    %v1894 = vmul.f32 %v1882, %v1886
    %v1895 = vadd.f32 %v1867, %v1887
    %v1896 = vadd.f32 %v1868, %v1888
    %v1897 = vadd.f32 %v1869, %v1889
    %v1898 = vadd.f32 %v1870, %v1890
    %v1899 = vadd.f32 %v1871, %v1891
    %v1900 = vadd.f32 %v1872, %v1892
    %v1901 = vadd.f32 %v1873, %v1893
    %v1902 = vadd.f32 %v1874, %v1894
    %v1903 = vrot.slane %v1032, 1
    %v1904 = vrot.slane %v1035, 1
    %v1905 = vrot.slane %v1040, 1
    %v1906 = vrot.slane %v1043, 1
    %v1907 = vrot.slane %v1048, 1
    %v1908 = vrot.slane %v1051, 1
    %v1909 = vrot.slane %v1056, 1
    %v1910 = vrot.slane %v1059, 1
    %vm1911 = vcmp.lt.s32.totalorder %v1111, 7
    %v1912 = vsel %vm1911, %v1909, %v1910
    %v1913 = vsel %vm1911, %v1908, %v1909
    %v1914 = vsel %vm1911, %v1907, %v1908
    %v1915 = vsel %vm1911, %v1906, %v1907
    %v1916 = vsel %vm1911, %v1905, %v1906
    %v1917 = vsel %vm1911, %v1904, %v1905
    %v1918 = vsel %vm1911, %v1903, %v1904
    %v1919 = vsel %vm1911, %v1910, %v1903
    %1921 = vset.pattern.permute.xlu0 0
    %1922 = vperm.xlu0 %1921, %v1290
    %v1923 = vpop.permute.xlu0 %1922
    %1926 = vset.pattern.permute.xlu0 0
    %1927 = vperm.xlu0 %1926, %v1291
    %v1928 = vpop.permute.xlu0 %1927
    %1931 = vset.pattern.permute.xlu0 0
    %1932 = vperm.xlu0 %1931, %v1292
    %v1933 = vpop.permute.xlu0 %1932
    %1936 = vset.pattern.permute.xlu0 0
    %1937 = vperm.xlu0 %1936, %v1293
    %v1938 = vpop.permute.xlu0 %1937
    %1941 = vset.pattern.permute.xlu0 0
    %1942 = vperm.xlu0 %1941, %v1294
    %v1943 = vpop.permute.xlu0 %1942
    %1946 = vset.pattern.permute.xlu0 0
    %1947 = vperm.xlu0 %1946, %v1295
    %v1948 = vpop.permute.xlu0 %1947
    %1951 = vset.pattern.permute.xlu0 0
    %1952 = vperm.xlu0 %1951, %v1296
    %v1953 = vpop.permute.xlu0 %1952
    %1956 = vset.pattern.permute.xlu0 0
    %1957 = vperm.xlu0 %1956, %v1297
    %v1958 = vpop.permute.xlu0 %1957
    %v1960 = vmul.f32 %v1919, %v1923
    %v1961 = vmul.f32 %v1918, %v1928
    %v1962 = vmul.f32 %v1917, %v1933
    %v1963 = vmul.f32 %v1916, %v1938
    %v1964 = vmul.f32 %v1915, %v1943
    %v1965 = vmul.f32 %v1914, %v1948
    %v1966 = vmul.f32 %v1913, %v1953
    %v1967 = vmul.f32 %v1912, %v1958
    %v1968 = vlaneseq
    %v1969 = vshrl.u32 %v1968, 7
    %v1970 = vsub.s32 2, %v1969
    %v1971 = vrot.slane %v1119, %v1970
    %v1972 = vmul.f32 %v1960, %v1971
    %v1973 = vmul.f32 %v1961, %v1971
    %v1974 = vmul.f32 %v1962, %v1971
    %v1975 = vmul.f32 %v1963, %v1971
    %v1976 = vmul.f32 %v1964, %v1971
    %v1977 = vmul.f32 %v1965, %v1971
    %v1978 = vmul.f32 %v1966, %v1971
    %v1979 = vmul.f32 %v1967, %v1971
    %v1980 = vadd.f32 %v1895, %v1972
    %v1981 = vadd.f32 %v1896, %v1973
    %v1982 = vadd.f32 %v1897, %v1974
    %v1983 = vadd.f32 %v1898, %v1975
    %v1984 = vadd.f32 %v1899, %v1976
    %v1985 = vadd.f32 %v1900, %v1977
    %v1986 = vadd.f32 %v1901, %v1978
    %v1987 = vadd.f32 %v1902, %v1979
    %1989 = vset.pattern.permute.xlu0 0
    %1990 = vperm.xlu0 %1989, %v1346
    %v1991 = vpop.permute.xlu0 %1990
    %1994 = vset.pattern.permute.xlu0 0
    %1995 = vperm.xlu0 %1994, %v1347
    %v1996 = vpop.permute.xlu0 %1995
    %1999 = vset.pattern.permute.xlu0 0
    %2000 = vperm.xlu0 %1999, %v1348
    %v2001 = vpop.permute.xlu0 %2000
    %2004 = vset.pattern.permute.xlu0 0
    %2005 = vperm.xlu0 %2004, %v1349
    %v2006 = vpop.permute.xlu0 %2005
    %2009 = vset.pattern.permute.xlu0 0
    %2010 = vperm.xlu0 %2009, %v1350
    %v2011 = vpop.permute.xlu0 %2010
    %2014 = vset.pattern.permute.xlu0 0
    %2015 = vperm.xlu0 %2014, %v1351
    %v2016 = vpop.permute.xlu0 %2015
    %2019 = vset.pattern.permute.xlu0 0
    %2020 = vperm.xlu0 %2019, %v1352
    %v2021 = vpop.permute.xlu0 %2020
    %2024 = vset.pattern.permute.xlu0 0
    %2025 = vperm.xlu0 %2024, %v1353
    %v2026 = vpop.permute.xlu0 %2025
    %v2028 = vmul.f32 %v1806, %v1991
    %v2029 = vmul.f32 %v1805, %v1996
    %v2030 = vmul.f32 %v1804, %v2001
    %v2031 = vmul.f32 %v1803, %v2006
    %v2032 = vmul.f32 %v1802, %v2011
    %v2033 = vmul.f32 %v1801, %v2016
    %v2034 = vmul.f32 %v1800, %v2021
    %v2035 = vmul.f32 %v1799, %v2026
    %v2036 = vlaneseq
    %v2037 = vshrl.u32 %v2036, 7
    %v2038 = vsub.s32 3, %v2037
    %v2039 = vrot.slane %v1119, %v2038
    %v2040 = vmul.f32 %v2028, %v2039
    %v2041 = vmul.f32 %v2029, %v2039
    %v2042 = vmul.f32 %v2030, %v2039
    %v2043 = vmul.f32 %v2031, %v2039
    %v2044 = vmul.f32 %v2032, %v2039
    %v2045 = vmul.f32 %v2033, %v2039
    %v2046 = vmul.f32 %v2034, %v2039
    %v2047 = vmul.f32 %v2035, %v2039
    %v2048 = vadd.f32 %v1980, %v2040
    %v2049 = vadd.f32 %v1981, %v2041
    %v2050 = vadd.f32 %v1982, %v2042
    %v2051 = vadd.f32 %v1983, %v2043
    %v2052 = vadd.f32 %v1984, %v2044
    %v2053 = vadd.f32 %v1985, %v2045
    %v2054 = vadd.f32 %v1986, %v2046
    %v2055 = vadd.f32 %v1987, %v2047
    %v2056 = vmul.f32 %v1032, %v1386
    %v2057 = vmul.f32 %v1035, %v1387
    %v2058 = vmul.f32 %v1040, %v1388
    %v2059 = vmul.f32 %v1043, %v1389
    %v2060 = vmul.f32 %v1048, %v1390
    %v2061 = vmul.f32 %v1051, %v1391
    %v2062 = vmul.f32 %v1056, %v1392
    %v2063 = vmul.f32 %v1059, %v1393
    %v2064 = vlaneseq
    %v2065 = vshrl.u32 %v2064, 7
    %v2066 = vsub.s32 4, %v2065
    %v2067 = vrot.slane %v1119, %v2066
    %v2068 = vmul.f32 %v2056, %v2067
    %v2069 = vmul.f32 %v2057, %v2067
    %v2070 = vmul.f32 %v2058, %v2067
    %v2071 = vmul.f32 %v2059, %v2067
    %v2072 = vmul.f32 %v2060, %v2067
    %v2073 = vmul.f32 %v2061, %v2067
    %v2074 = vmul.f32 %v2062, %v2067
    %v2075 = vmul.f32 %v2063, %v2067
    %v2076 = vadd.f32 %v2048, %v2068
    %v2077 = vadd.f32 %v2049, %v2069
    %v2078 = vadd.f32 %v2050, %v2070
    %v2079 = vadd.f32 %v2051, %v2071
    %v2080 = vadd.f32 %v2052, %v2072
    %v2081 = vadd.f32 %v2053, %v2073
    %v2082 = vadd.f32 %v2054, %v2074
    %v2083 = vadd.f32 %v2055, %v2075
    %2085 = vset.pattern.permute.xlu0 0
    %2086 = vperm.xlu0 %2085, %v1442
    %v2087 = vpop.permute.xlu0 %2086
    %2090 = vset.pattern.permute.xlu0 0
    %2091 = vperm.xlu0 %2090, %v1443
    %v2092 = vpop.permute.xlu0 %2091
    %2095 = vset.pattern.permute.xlu0 0
    %2096 = vperm.xlu0 %2095, %v1444
    %v2097 = vpop.permute.xlu0 %2096
    %2100 = vset.pattern.permute.xlu0 0
    %2101 = vperm.xlu0 %2100, %v1445
    %v2102 = vpop.permute.xlu0 %2101
    %2105 = vset.pattern.permute.xlu0 0
    %2106 = vperm.xlu0 %2105, %v1446
    %v2107 = vpop.permute.xlu0 %2106
    %2110 = vset.pattern.permute.xlu0 0
    %2111 = vperm.xlu0 %2110, %v1447
    %v2112 = vpop.permute.xlu0 %2111
    %2115 = vset.pattern.permute.xlu0 0
    %2116 = vperm.xlu0 %2115, %v1448
    %v2117 = vpop.permute.xlu0 %2116
    %2120 = vset.pattern.permute.xlu0 0
    %2121 = vperm.xlu0 %2120, %v1449
    %v2122 = vpop.permute.xlu0 %2121
    %v2124 = vmul.f32 %v1918, %v2087
    %v2125 = vmul.f32 %v1917, %v2092
    %v2126 = vmul.f32 %v1916, %v2097
    %v2127 = vmul.f32 %v1915, %v2102
    %v2128 = vmul.f32 %v1914, %v2107
    %v2129 = vmul.f32 %v1913, %v2112
    %v2130 = vmul.f32 %v1912, %v2117
    %v2131 = vmul.f32 %v1919, %v2122
    %v2132 = vlaneseq
    %v2133 = vshrl.u32 %v2132, 7
    %v2134 = vsub.s32 5, %v2133
    %v2135 = vrot.slane %v1119, %v2134
    %v2136 = vmul.f32 %v2124, %v2135
    %v2137 = vmul.f32 %v2125, %v2135
    %v2138 = vmul.f32 %v2126, %v2135
    %v2139 = vmul.f32 %v2127, %v2135
    %v2140 = vmul.f32 %v2128, %v2135
    %v2141 = vmul.f32 %v2129, %v2135
    %v2142 = vmul.f32 %v2130, %v2135
    %v2143 = vmul.f32 %v2131, %v2135
    %v2144 = vadd.f32 %v2076, %v2136
    %v2145 = vadd.f32 %v2077, %v2137
    %v2146 = vadd.f32 %v2078, %v2138
    %v2147 = vadd.f32 %v2079, %v2139
    %v2148 = vadd.f32 %v2080, %v2140
    %v2149 = vadd.f32 %v2081, %v2141
    %v2150 = vadd.f32 %v2082, %v2142
    %v2151 = vadd.f32 %v2083, %v2143
    %2153 = vset.pattern.permute.xlu0 0
    %2154 = vperm.xlu0 %2153, %v1498
    %v2155 = vpop.permute.xlu0 %2154
    %2158 = vset.pattern.permute.xlu0 0
    %2159 = vperm.xlu0 %2158, %v1499
    %v2160 = vpop.permute.xlu0 %2159
    %2163 = vset.pattern.permute.xlu0 0
    %2164 = vperm.xlu0 %2163, %v1500
    %v2165 = vpop.permute.xlu0 %2164
    %2168 = vset.pattern.permute.xlu0 0
    %2169 = vperm.xlu0 %2168, %v1501
    %v2170 = vpop.permute.xlu0 %2169
    %2173 = vset.pattern.permute.xlu0 0
    %2174 = vperm.xlu0 %2173, %v1502
    %v2175 = vpop.permute.xlu0 %2174
    %2178 = vset.pattern.permute.xlu0 0
    %2179 = vperm.xlu0 %2178, %v1503
    %v2180 = vpop.permute.xlu0 %2179
    %2183 = vset.pattern.permute.xlu0 0
    %2184 = vperm.xlu0 %2183, %v1504
    %v2185 = vpop.permute.xlu0 %2184
    %2188 = vset.pattern.permute.xlu0 0
    %2189 = vperm.xlu0 %2188, %v1505
    %v2190 = vpop.permute.xlu0 %2189
    %v2192 = vmul.f32 %v1805, %v2155
    %v2193 = vmul.f32 %v1804, %v2160
    %v2194 = vmul.f32 %v1803, %v2165
    %v2195 = vmul.f32 %v1802, %v2170
    %v2196 = vmul.f32 %v1801, %v2175
    %v2197 = vmul.f32 %v1800, %v2180
    %v2198 = vmul.f32 %v1799, %v2185
    %v2199 = vmul.f32 %v1806, %v2190
    %v2200 = vlaneseq
    %v2201 = vshrl.u32 %v2200, 7
    %v2202 = vsub.s32 6, %v2201
    %v2203 = vrot.slane %v1119, %v2202
    %v2204 = vmul.f32 %v2192, %v2203
    %v2205 = vmul.f32 %v2193, %v2203
    %v2206 = vmul.f32 %v2194, %v2203
    %v2207 = vmul.f32 %v2195, %v2203
    %v2208 = vmul.f32 %v2196, %v2203
    %v2209 = vmul.f32 %v2197, %v2203
    %v2210 = vmul.f32 %v2198, %v2203
    %v2211 = vmul.f32 %v2199, %v2203
    %v2212 = vadd.f32 %v2144, %v2204
    %v2213 = vadd.f32 %v2145, %v2205
    %v2214 = vadd.f32 %v2146, %v2206
    %v2215 = vadd.f32 %v2147, %v2207
    %v2216 = vadd.f32 %v2148, %v2208
    %v2217 = vadd.f32 %v2149, %v2209
    %v2218 = vadd.f32 %v2150, %v2210
    %v2219 = vadd.f32 %v2151, %v2211
    %v2220 = vmul.f32 %v1040, %v1541
    %v2221 = vmul.f32 %v1043, %v1542
    %v2222 = vmul.f32 %v1048, %v1543
    %v2223 = vmul.f32 %v1051, %v1544
    %v2224 = vmul.f32 %v1056, %v1545
    %v2225 = vmul.f32 %v1059, %v1546
    %v2226 = vmul.f32 %v1032, %v1547
    %v2227 = vlaneseq
    %v2228 = vshrl.u32 %v2227, 7
    %v2229 = vsub.s32 7, %v2228
    %v2230 = vrot.slane %v1119, %v2229
    %v2231 = vmul.f32 %v2057, %v2230
    %v2232 = vmul.f32 %v2220, %v2230
    %v2233 = vmul.f32 %v2221, %v2230
    %v2234 = vmul.f32 %v2222, %v2230
    %v2235 = vmul.f32 %v2223, %v2230
    %v2236 = vmul.f32 %v2224, %v2230
    %v2237 = vmul.f32 %v2225, %v2230
    %v2238 = vmul.f32 %v2226, %v2230
    %v2239 = vadd.f32 %v2212, %v2231
    %v2240 = vadd.f32 %v2213, %v2232
    %v2241 = vadd.f32 %v2214, %v2233
    %v2242 = vadd.f32 %v2215, %v2234
    %v2243 = vadd.f32 %v2216, %v2235
    %v2244 = vadd.f32 %v2217, %v2236
    %v2245 = vadd.f32 %v2218, %v2237
    %v2246 = vadd.f32 %v2219, %v2238
    %2248 = vset.pattern.permute.xlu0 0
    %2249 = vperm.xlu0 %2248, %v1596
    %v2250 = vpop.permute.xlu0 %2249
    %2253 = vset.pattern.permute.xlu0 0
    %2254 = vperm.xlu0 %2253, %v1597
    %v2255 = vpop.permute.xlu0 %2254
    %2258 = vset.pattern.permute.xlu0 0
    %2259 = vperm.xlu0 %2258, %v1598
    %v2260 = vpop.permute.xlu0 %2259
    %2263 = vset.pattern.permute.xlu0 0
    %2264 = vperm.xlu0 %2263, %v1599
    %v2265 = vpop.permute.xlu0 %2264
    %2268 = vset.pattern.permute.xlu0 0
    %2269 = vperm.xlu0 %2268, %v1600
    %v2270 = vpop.permute.xlu0 %2269
    %2273 = vset.pattern.permute.xlu0 0
    %2274 = vperm.xlu0 %2273, %v1601
    %v2275 = vpop.permute.xlu0 %2274
    %2278 = vset.pattern.permute.xlu0 0
    %2279 = vperm.xlu0 %2278, %v1602
    %v2280 = vpop.permute.xlu0 %2279
    %2283 = vset.pattern.permute.xlu0 0
    %2284 = vperm.xlu0 %2283, %v1603
    %v2285 = vpop.permute.xlu0 %2284
    %v2287 = vmul.f32 %v1917, %v2250
    %v2288 = vmul.f32 %v1916, %v2255
    %v2289 = vmul.f32 %v1915, %v2260
    %v2290 = vmul.f32 %v1914, %v2265
    %v2291 = vmul.f32 %v1913, %v2270
    %v2292 = vmul.f32 %v1912, %v2275
    %v2293 = vmul.f32 %v1919, %v2280
    %v2294 = vmul.f32 %v1918, %v2285
    %v2295 = vlaneseq
    %v2296 = vshrl.u32 %v2295, 7
    %v2297 = vsub.s32 0, %v2296
    %v2298 = vrot.slane %v1120, %v2297
    %v2299 = vmul.f32 %v2287, %v2298
    %v2300 = vmul.f32 %v2288, %v2298
    %v2301 = vmul.f32 %v2289, %v2298
    %v2302 = vmul.f32 %v2290, %v2298
    %v2303 = vmul.f32 %v2291, %v2298
    %v2304 = vmul.f32 %v2292, %v2298
    %v2305 = vmul.f32 %v2293, %v2298
    %v2306 = vmul.f32 %v2294, %v2298
    %v2307 = vadd.f32 %v2239, %v2299
    %v2308 = vadd.f32 %v2240, %v2300
    %v2309 = vadd.f32 %v2241, %v2301
    %v2310 = vadd.f32 %v2242, %v2302
    %v2311 = vadd.f32 %v2243, %v2303
    %v2312 = vadd.f32 %v2244, %v2304
    %v2313 = vadd.f32 %v2245, %v2305
    %v2314 = vadd.f32 %v2246, %v2306
    %v2316 = vsel %vm703, %v1786, 0
    %v2319 = vsel %vm703, %v1787, 0
    %v2322 = vsel %vm703, %v1788, 0
    %v2325 = vsel %vm703, %v1789, 0
    %2327 = vmatprep.subr.bf16.mxu0 0
    %2328 = vmatpush1.bf16.msra.mxu0 %v1604
    %2329 = vmatprep.subr.bf16.mxu0 0
    %2330 = vmatpush1.bf16.msra.mxu0 %v1605
    %2331 = vmatprep.subr.bf16.mxu0 0
    %2332 = vmatpush1.bf16.msra.mxu0 %v1606
    %2333 = vmatprep.subr.bf16.mxu0 0
    %2334 = vmatpush1.bf16.msra.mxu0 %v1607
    %2335 = vmatprep.subr.bf16.mxu0 0
    %2336 = vmatpush1.bf16.msra.mxu0 0
    %2337 = vmatprep.subr.bf16.mxu0 0
    %2338 = vmatpush1.bf16.msra.mxu0 0
    %2339 = vmatprep.subr.bf16.mxu0 0
    %2340 = vmatpush1.bf16.msra.mxu0 0
    %2341 = vmatprep.subr.bf16.mxu0 0
    %2342 = vmatpush1.bf16.msra.mxu0 0
    %2343 = vmatprep.subr.bf16.mxu0 0
    %2344 = vmatpush1.bf16.msra.mxu0 0
    %2345 = vmatprep.subr.bf16.mxu0 0
    %2346 = vmatpush1.bf16.msra.mxu0 0
    %2347 = vmatprep.subr.bf16.mxu0 0
    %2348 = vmatpush1.bf16.msra.mxu0 0
    %2349 = vmatprep.subr.bf16.mxu0 0
    %2350 = vmatpush1.bf16.msra.mxu0 0
    %2351 = vmatprep.subr.bf16.mxu0 0
    %2352 = vmatpush1.bf16.msra.mxu0 0
    %2353 = vmatprep.subr.bf16.mxu0 0
    %2354 = vmatpush1.bf16.msra.mxu0 0
    %2355 = vmatprep.subr.bf16.mxu0 0
    %2356 = vmatpush1.bf16.msra.mxu0 0
    %2357 = vmatprep.subr.bf16.mxu0 0
    %2358 = vmatpush1.bf16.msra.mxu0 0
    %2359 = vmatprep.mubr.bf16.mxu0 0
    %2360 = vmatmul.mubr.bf16.gmra.mrb[0].mxu0 %v2316
    %v2361 = vpop.f32.mrb[0].mxu0
    %v2362 = vadd.f32 %v2307, %v2361
    %v2363 = vpop.f32.mrb[0].mxu0
    %v2364 = vpop.f32.mrb[0].mxu0
    %v2365 = vadd.f32 %v2308, %v2364
    %v2366 = vpop.f32.mrb[0].mxu0
    %2367 = vmatprep.mubr.bf16.mxu0 0
    %2368 = vmatmul.mubr.bf16.gmra.mrb[0].mxu0 %v2319
    %v2369 = vpop.f32.mrb[0].mxu0
    %v2370 = vadd.f32 %v2309, %v2369
    %v2371 = vpop.f32.mrb[0].mxu0
    %v2372 = vpop.f32.mrb[0].mxu0
    %v2373 = vadd.f32 %v2310, %v2372
    %v2374 = vpop.f32.mrb[0].mxu0
    %2375 = vmatprep.mubr.bf16.mxu0 0
    %2376 = vmatmul.mubr.bf16.gmra.mrb[0].mxu0 %v2322
    %v2377 = vpop.f32.mrb[0].mxu0
    %v2378 = vadd.f32 %v2311, %v2377
    %v2379 = vpop.f32.mrb[0].mxu0
    %v2380 = vpop.f32.mrb[0].mxu0
    %v2381 = vadd.f32 %v2312, %v2380
    %v2382 = vpop.f32.mrb[0].mxu0
    %2383 = vmatprep.mubr.bf16.mxu0 0
    %2384 = vmatmul.mubr.bf16.gmra.mrb[0].mxu0 %v2325
    %v2385 = vpop.f32.mrb[0].mxu0
    %v2386 = vadd.f32 %v2313, %v2385
    %v2387 = vpop.f32.mrb[0].mxu0
    %v2388 = vpop.f32.mrb[0].mxu0
    %v2389 = vadd.f32 %v2314, %v2388
    %v2390 = vpop.f32.mrb[0].mxu0
    %2391 = vdwg.mxu0
    %v2392 = vpack.c.bf16 %v1067, %v1064
    %v2393 = vpack.c.bf16 %v1075, %v1072
    %v2394 = vpack.c.bf16 %v1083, %v1080
    %v2395 = vpack.c.bf16 %v1091, %v1088
    %v2397 = vsel %vm1608, %v1098, 0
    %v2400 = vsel %vm1608, %v1099, 0
    %v2403 = vsel %vm1608, %v1100, 0
    %v2406 = vsel %vm1608, %v1101, 0
    %v2409 = vsel %vm1608, %v1106, 0
    %v2412 = vsel %vm1608, %v1107, 0
    %v2415 = vsel %vm1608, %v1108, 0
    %v2418 = vsel %vm1608, %v1109, 0
    %2420 = vmatprep.subr.bf16.mxu0 0
    %2421 = vmatpush1.bf16.xpose.msra.mxu0 %v2409
    %2422 = vmatprep.subr.bf16.mxu0 0
    %2423 = vmatpush1.bf16.xpose.msra.mxu0 %v2412
    %2424 = vmatprep.subr.bf16.mxu0 0
    %2425 = vmatpush1.bf16.xpose.msra.mxu0 %v2415
    %2426 = vmatprep.subr.bf16.mxu0 0
    %2427 = vmatpush1.bf16.xpose.msra.mxu0 %v2418
    %2428 = vmatprep.subr.bf16.mxu0 0
    %2429 = vmatpush1.bf16.xpose.msra.mxu0 0
    %2430 = vmatprep.subr.bf16.mxu0 0
    %2431 = vmatpush1.bf16.xpose.msra.mxu0 0
    %2432 = vmatprep.subr.bf16.mxu0 0
    %2433 = vmatpush1.bf16.xpose.msra.mxu0 0
    %2434 = vmatprep.subr.bf16.mxu0 0
    %2435 = vmatpush1.bf16.xpose.msra.mxu0 0
    %2436 = vmatprep.subr.bf16.mxu0 0
    %2437 = vmatpush1.bf16.xpose.msra.mxu0 0
    %2438 = vmatprep.subr.bf16.mxu0 0
    %2439 = vmatpush1.bf16.xpose.msra.mxu0 0
    %2440 = vmatprep.subr.bf16.mxu0 0
    %2441 = vmatpush1.bf16.xpose.msra.mxu0 0
    %2442 = vmatprep.subr.bf16.mxu0 0
    %2443 = vmatpush1.bf16.xpose.msra.mxu0 0
    %2444 = vmatprep.subr.bf16.mxu0 0
    %2445 = vmatpush1.bf16.xpose.msra.mxu0 0
    %2446 = vmatprep.subr.bf16.mxu0 0
    %2447 = vmatpush1.bf16.xpose.msra.mxu0 0
    %2448 = vmatprep.subr.bf16.mxu0 0
    %2449 = vmatpush1.bf16.xpose.msra.mxu0 0
    %2450 = vmatprep.subr.bf16.mxu0 0
    %2451 = vmatpush1.bf16.xpose.msra.mxu0 0
    %2452 = vmatprep.mubr.bf16.mxu0 0
    %2453 = vmatmul.mubr.bf16.gmra.mrb[0].mxu0 %v2397
    %v2454 = vpop.f32.mrb[0].mxu0
    %v2455 = vadd.f32 0.0, %v2454
    %v2456 = vpop.f32.mrb[0].mxu0
    %v2457 = vpop.f32.mrb[0].mxu0
    %v2458 = vadd.f32 0.0, %v2457
    %v2459 = vpop.f32.mrb[0].mxu0
    %2460 = vmatprep.mubr.bf16.mxu0 0
    %2461 = vmatmul.mubr.bf16.gmra.mrb[0].mxu0 %v2400
    %v2462 = vpop.f32.mrb[0].mxu0
    %v2463 = vadd.f32 0.0, %v2462
    %v2464 = vpop.f32.mrb[0].mxu0
    %v2465 = vpop.f32.mrb[0].mxu0
    %v2466 = vadd.f32 0.0, %v2465
    %v2467 = vpop.f32.mrb[0].mxu0
    %2468 = vmatprep.mubr.bf16.mxu0 0
    %2469 = vmatmul.mubr.bf16.gmra.mrb[0].mxu0 %v2403
    %v2470 = vpop.f32.mrb[0].mxu0
    %v2471 = vadd.f32 0.0, %v2470
    %v2472 = vpop.f32.mrb[0].mxu0
    %v2473 = vpop.f32.mrb[0].mxu0
    %v2474 = vadd.f32 0.0, %v2473
    %v2475 = vpop.f32.mrb[0].mxu0
    %2476 = vmatprep.mubr.bf16.mxu0 0
    %2477 = vmatmul.mubr.bf16.gmra.mrb[0].mxu0 %v2406
    %v2478 = vpop.f32.mrb[0].mxu0
    %v2479 = vadd.f32 0.0, %v2478
    %v2480 = vpop.f32.mrb[0].mxu0
    %v2481 = vpop.f32.mrb[0].mxu0
    %v2482 = vadd.f32 0.0, %v2481
    %v2483 = vpop.f32.mrb[0].mxu0
    %2484 = vdwg.mxu0
    %v2485 = vsel %vm703, %v2455, -inf
    %2486 = vmax.xlane.f32.xlu0 %v2485
    %v2487 = vpop.xlane.xlu0 %2486
    %v2488 = vsel %vm703, %v2458, -inf
    %2489 = vmax.xlane.f32.xlu0 %v2488
    %v2490 = vpop.xlane.xlu0 %2489
    %v2491 = vsel %vm703, %v2463, -inf
    %2492 = vmax.xlane.f32.xlu0 %v2491
    %v2493 = vpop.xlane.xlu0 %2492
    %v2494 = vsel %vm703, %v2466, -inf
    %2495 = vmax.xlane.f32.xlu0 %v2494
    %v2496 = vpop.xlane.xlu0 %2495
    %v2497 = vsel %vm703, %v2471, -inf
    %2498 = vmax.xlane.f32.xlu0 %v2497
    %v2499 = vpop.xlane.xlu0 %2498
    %v2500 = vsel %vm703, %v2474, -inf
    %2501 = vmax.xlane.f32.xlu0 %v2500
    %v2502 = vpop.xlane.xlu0 %2501
    %v2503 = vsel %vm703, %v2479, -inf
    %2504 = vmax.xlane.f32.xlu0 %v2503
    %v2505 = vpop.xlane.xlu0 %2504
    %v2506 = vsel %vm703, %v2482, -inf
    %2507 = vmax.xlane.f32.xlu0 %v2506
    %v2508 = vpop.xlane.xlu0 %2507
    %v2509 = vsub.f32 %v2455, %v2487
    %v2510 = vsub.f32 %v2458, %v2490
    %v2511 = vsub.f32 %v2463, %v2493
    %v2512 = vsub.f32 %v2466, %v2496
    %v2513 = vsub.f32 %v2471, %v2499
    %v2514 = vsub.f32 %v2474, %v2502
    %v2515 = vsub.f32 %v2479, %v2505
    %v2516 = vsub.f32 %v2482, %v2508
    %v2517 = vmul.f32 %v2509, 1.442695
    %v2518 = vpow.pop %v2517
    %v2519 = vmul.f32 %v2510, 1.442695
    %v2520 = vpow.pop %v2519
    %v2521 = vmul.f32 %v2511, 1.442695
    %v2522 = vpow.pop %v2521
    %v2523 = vmul.f32 %v2512, 1.442695
    %v2524 = vpow.pop %v2523
    %v2525 = vmul.f32 %v2513, 1.442695
    %v2526 = vpow.pop %v2525
    %v2527 = vmul.f32 %v2514, 1.442695
    %v2528 = vpow.pop %v2527
    %v2529 = vmul.f32 %v2515, 1.442695
    %v2530 = vpow.pop %v2529
    %v2531 = vmul.f32 %v2516, 1.442695
    %v2532 = vpow.pop %v2531
    %v2533 = vsel %vm703, %v2518, 0.0
    %2534 = vadd.xlane.f32.xlu0 %v2533
    %v2535 = vpop.xlane.xlu0 %2534
    %v2536 = vsel %vm703, %v2520, 0.0
    %2537 = vadd.xlane.f32.xlu0 %v2536
    %v2538 = vpop.xlane.xlu0 %2537
    %v2539 = vsel %vm703, %v2522, 0.0
    %2540 = vadd.xlane.f32.xlu0 %v2539
    %v2541 = vpop.xlane.xlu0 %2540
    %v2542 = vsel %vm703, %v2524, 0.0
    %2543 = vadd.xlane.f32.xlu0 %v2542
    %v2544 = vpop.xlane.xlu0 %2543
    %v2545 = vsel %vm703, %v2526, 0.0
    %2546 = vadd.xlane.f32.xlu0 %v2545
    %v2547 = vpop.xlane.xlu0 %2546
    %v2548 = vsel %vm703, %v2528, 0.0
    %2549 = vadd.xlane.f32.xlu0 %v2548
    %v2550 = vpop.xlane.xlu0 %2549
    %v2551 = vsel %vm703, %v2530, 0.0
    %2552 = vadd.xlane.f32.xlu0 %v2551
    %v2553 = vpop.xlane.xlu0 %2552
    %v2554 = vsel %vm703, %v2532, 0.0
    %2555 = vadd.xlane.f32.xlu0 %v2554
    %v2556 = vpop.xlane.xlu0 %2555
    %v2557 = vrcp.pop %v2535
    %v2558 = vrcp.pop %v2538
    %v2559 = vrcp.pop %v2541
    %v2560 = vrcp.pop %v2544
    %v2561 = vrcp.pop %v2547
    %v2562 = vrcp.pop %v2550
    %v2563 = vrcp.pop %v2553
    %v2564 = vrcp.pop %v2556
    %v2565 = vmul.f32 %v2518, %v2557
    %v2566 = vmul.f32 %v2520, %v2558
    %v2567 = vmul.f32 %v2522, %v2559
    %v2568 = vmul.f32 %v2524, %v2560
    %v2569 = vmul.f32 %v2526, %v2561
    %v2570 = vmul.f32 %v2528, %v2562
    %v2571 = vmul.f32 %v2530, %v2563
    %v2572 = vmul.f32 %v2532, %v2564
    %v2573 = vpack.c.bf16 %v2566, %v2565
    %v2574 = vpack.c.bf16 %v2568, %v2567
    %v2575 = vpack.c.bf16 %v2570, %v2569
    %v2576 = vpack.c.bf16 %v2572, %v2571
    %v2577 = vrot.slane %v1064, 7
    %v2578 = vrot.slane %v1067, 7
    %v2579 = vrot.slane %v1072, 7
    %v2580 = vrot.slane %v1075, 7
    %v2581 = vrot.slane %v1080, 7
    %v2582 = vrot.slane %v1083, 7
    %v2583 = vrot.slane %v1088, 7
    %v2584 = vrot.slane %v1091, 7
    %v2585 = vsel %vm1798, %v2583, %v2584
    %v2586 = vsel %vm1798, %v2582, %v2583
    %v2587 = vsel %vm1798, %v2581, %v2582
    %v2588 = vsel %vm1798, %v2580, %v2581
    %v2589 = vsel %vm1798, %v2579, %v2580
    %v2590 = vsel %vm1798, %v2578, %v2579
    %v2591 = vsel %vm1798, %v2577, %v2578
    %v2592 = vsel %vm1798, %v2584, %v2577
    %v2593 = vmul.f32 %v2585, %v1810
    %v2594 = vmul.f32 %v2592, %v1815
    %v2595 = vmul.f32 %v2591, %v1820
    %v2596 = vmul.f32 %v2590, %v1825
    %v2597 = vmul.f32 %v2589, %v1830
    %v2598 = vmul.f32 %v2588, %v1835
    %v2599 = vmul.f32 %v2587, %v1840
    %v2600 = vmul.f32 %v2586, %v1845
    %v2601 = vmul.f32 %v2593, %v1858
    %v2602 = vmul.f32 %v2594, %v1858
    %v2603 = vmul.f32 %v2595, %v1858
    %v2604 = vmul.f32 %v2596, %v1858
    %v2605 = vmul.f32 %v2597, %v1858
    %v2606 = vmul.f32 %v2598, %v1858
    %v2607 = vmul.f32 %v2599, %v1858
    %v2608 = vmul.f32 %v2600, %v1858
    %v2609 = vadd.f32 %v2601, 0.0
    %v2610 = vadd.f32 %v2602, 0.0
    %v2611 = vadd.f32 %v2603, 0.0
    %v2612 = vadd.f32 %v2604, 0.0
    %v2613 = vadd.f32 %v2605, 0.0
    %v2614 = vadd.f32 %v2606, 0.0
    %v2615 = vadd.f32 %v2607, 0.0
    %v2616 = vadd.f32 %v2608, 0.0
    %v2617 = vmul.f32 %v1091, %v1234
    %v2618 = vmul.f32 %v1064, %v1235
    %v2619 = vmul.f32 %v1067, %v1236
    %v2620 = vmul.f32 %v1072, %v1237
    %v2621 = vmul.f32 %v1075, %v1238
    %v2622 = vmul.f32 %v1080, %v1239
    %v2623 = vmul.f32 %v1083, %v1240
    %v2624 = vmul.f32 %v1088, %v1241
    %v2625 = vmul.f32 %v2617, %v1886
    %v2626 = vmul.f32 %v2618, %v1886
    %v2627 = vmul.f32 %v2619, %v1886
    %v2628 = vmul.f32 %v2620, %v1886
    %v2629 = vmul.f32 %v2621, %v1886
    %v2630 = vmul.f32 %v2622, %v1886
    %v2631 = vmul.f32 %v2623, %v1886
    %v2632 = vmul.f32 %v2624, %v1886
    %v2633 = vadd.f32 %v2609, %v2625
    %v2634 = vadd.f32 %v2610, %v2626
    %v2635 = vadd.f32 %v2611, %v2627
    %v2636 = vadd.f32 %v2612, %v2628
    %v2637 = vadd.f32 %v2613, %v2629
    %v2638 = vadd.f32 %v2614, %v2630
    %v2639 = vadd.f32 %v2615, %v2631
    %v2640 = vadd.f32 %v2616, %v2632
    %v2641 = vrot.slane %v1064, 1
    %v2642 = vrot.slane %v1067, 1
    %v2643 = vrot.slane %v1072, 1
    %v2644 = vrot.slane %v1075, 1
    %v2645 = vrot.slane %v1080, 1
    %v2646 = vrot.slane %v1083, 1
    %v2647 = vrot.slane %v1088, 1
    %v2648 = vrot.slane %v1091, 1
    %v2649 = vsel %vm1911, %v2647, %v2648
    %v2650 = vsel %vm1911, %v2646, %v2647
    %v2651 = vsel %vm1911, %v2645, %v2646
    %v2652 = vsel %vm1911, %v2644, %v2645
    %v2653 = vsel %vm1911, %v2643, %v2644
    %v2654 = vsel %vm1911, %v2642, %v2643
    %v2655 = vsel %vm1911, %v2641, %v2642
    %v2656 = vsel %vm1911, %v2648, %v2641
    %v2657 = vmul.f32 %v2656, %v1923
    %v2658 = vmul.f32 %v2655, %v1928
    %v2659 = vmul.f32 %v2654, %v1933
    %v2660 = vmul.f32 %v2653, %v1938
    %v2661 = vmul.f32 %v2652, %v1943
    %v2662 = vmul.f32 %v2651, %v1948
    %v2663 = vmul.f32 %v2650, %v1953
    %v2664 = vmul.f32 %v2649, %v1958
    %v2665 = vmul.f32 %v2657, %v1971
    %v2666 = vmul.f32 %v2658, %v1971
    %v2667 = vmul.f32 %v2659, %v1971
    %v2668 = vmul.f32 %v2660, %v1971
    %v2669 = vmul.f32 %v2661, %v1971
    %v2670 = vmul.f32 %v2662, %v1971
    %v2671 = vmul.f32 %v2663, %v1971
    %v2672 = vmul.f32 %v2664, %v1971
    %v2673 = vadd.f32 %v2633, %v2665
    %v2674 = vadd.f32 %v2634, %v2666
    %v2675 = vadd.f32 %v2635, %v2667
    %v2676 = vadd.f32 %v2636, %v2668
    %v2677 = vadd.f32 %v2637, %v2669
    %v2678 = vadd.f32 %v2638, %v2670
    %v2679 = vadd.f32 %v2639, %v2671
    %v2680 = vadd.f32 %v2640, %v2672
    %v2681 = vmul.f32 %v2592, %v1991
    %v2682 = vmul.f32 %v2591, %v1996
    %v2683 = vmul.f32 %v2590, %v2001
    %v2684 = vmul.f32 %v2589, %v2006
    %v2685 = vmul.f32 %v2588, %v2011
    %v2686 = vmul.f32 %v2587, %v2016
    %v2687 = vmul.f32 %v2586, %v2021
    %v2688 = vmul.f32 %v2585, %v2026
    %v2689 = vmul.f32 %v2681, %v2039
    %v2690 = vmul.f32 %v2682, %v2039
    %v2691 = vmul.f32 %v2683, %v2039
    %v2692 = vmul.f32 %v2684, %v2039
    %v2693 = vmul.f32 %v2685, %v2039
    %v2694 = vmul.f32 %v2686, %v2039
    %v2695 = vmul.f32 %v2687, %v2039
    %v2696 = vmul.f32 %v2688, %v2039
    %v2697 = vadd.f32 %v2673, %v2689
    %v2698 = vadd.f32 %v2674, %v2690
    %v2699 = vadd.f32 %v2675, %v2691
    %v2700 = vadd.f32 %v2676, %v2692
    %v2701 = vadd.f32 %v2677, %v2693
    %v2702 = vadd.f32 %v2678, %v2694
    %v2703 = vadd.f32 %v2679, %v2695
    %v2704 = vadd.f32 %v2680, %v2696
    %v2705 = vmul.f32 %v1064, %v1386
    %v2706 = vmul.f32 %v1067, %v1387
    %v2707 = vmul.f32 %v1072, %v1388
    %v2708 = vmul.f32 %v1075, %v1389
    %v2709 = vmul.f32 %v1080, %v1390
    %v2710 = vmul.f32 %v1083, %v1391
    %v2711 = vmul.f32 %v1088, %v1392
    %v2712 = vmul.f32 %v1091, %v1393
    %v2713 = vmul.f32 %v2705, %v2067
    %v2714 = vmul.f32 %v2706, %v2067
    %v2715 = vmul.f32 %v2707, %v2067
    %v2716 = vmul.f32 %v2708, %v2067
    %v2717 = vmul.f32 %v2709, %v2067
    %v2718 = vmul.f32 %v2710, %v2067
    %v2719 = vmul.f32 %v2711, %v2067
    %v2720 = vmul.f32 %v2712, %v2067
    %v2721 = vadd.f32 %v2697, %v2713
    %v2722 = vadd.f32 %v2698, %v2714
    %v2723 = vadd.f32 %v2699, %v2715
    %v2724 = vadd.f32 %v2700, %v2716
    %v2725 = vadd.f32 %v2701, %v2717
    %v2726 = vadd.f32 %v2702, %v2718
    %v2727 = vadd.f32 %v2703, %v2719
    %v2728 = vadd.f32 %v2704, %v2720
    %v2729 = vmul.f32 %v2655, %v2087
    %v2730 = vmul.f32 %v2654, %v2092
    %v2731 = vmul.f32 %v2653, %v2097
    %v2732 = vmul.f32 %v2652, %v2102
    %v2733 = vmul.f32 %v2651, %v2107
    %v2734 = vmul.f32 %v2650, %v2112
    %v2735 = vmul.f32 %v2649, %v2117
    %v2736 = vmul.f32 %v2656, %v2122
    %v2737 = vmul.f32 %v2729, %v2135
    %v2738 = vmul.f32 %v2730, %v2135
    %v2739 = vmul.f32 %v2731, %v2135
    %v2740 = vmul.f32 %v2732, %v2135
    %v2741 = vmul.f32 %v2733, %v2135
    %v2742 = vmul.f32 %v2734, %v2135
    %v2743 = vmul.f32 %v2735, %v2135
    %v2744 = vmul.f32 %v2736, %v2135
    %v2745 = vadd.f32 %v2721, %v2737
    %v2746 = vadd.f32 %v2722, %v2738
    %v2747 = vadd.f32 %v2723, %v2739
    %v2748 = vadd.f32 %v2724, %v2740
    %v2749 = vadd.f32 %v2725, %v2741
    %v2750 = vadd.f32 %v2726, %v2742
    %v2751 = vadd.f32 %v2727, %v2743
    %v2752 = vadd.f32 %v2728, %v2744
    %v2753 = vmul.f32 %v2591, %v2155
    %v2754 = vmul.f32 %v2590, %v2160
    %v2755 = vmul.f32 %v2589, %v2165
    %v2756 = vmul.f32 %v2588, %v2170
    %v2757 = vmul.f32 %v2587, %v2175
    %v2758 = vmul.f32 %v2586, %v2180
    %v2759 = vmul.f32 %v2585, %v2185
    %v2760 = vmul.f32 %v2592, %v2190
    %v2761 = vmul.f32 %v2753, %v2203
    %v2762 = vmul.f32 %v2754, %v2203
    %v2763 = vmul.f32 %v2755, %v2203
    %v2764 = vmul.f32 %v2756, %v2203
    %v2765 = vmul.f32 %v2757, %v2203
    %v2766 = vmul.f32 %v2758, %v2203
    %v2767 = vmul.f32 %v2759, %v2203
    %v2768 = vmul.f32 %v2760, %v2203
    %v2769 = vadd.f32 %v2745, %v2761
    %v2770 = vadd.f32 %v2746, %v2762
    %v2771 = vadd.f32 %v2747, %v2763
    %v2772 = vadd.f32 %v2748, %v2764
    %v2773 = vadd.f32 %v2749, %v2765
    %v2774 = vadd.f32 %v2750, %v2766
    %v2775 = vadd.f32 %v2751, %v2767
    %v2776 = vadd.f32 %v2752, %v2768
    %v2777 = vmul.f32 %v1072, %v1541
    %v2778 = vmul.f32 %v1075, %v1542
    %v2779 = vmul.f32 %v1080, %v1543
    %v2780 = vmul.f32 %v1083, %v1544
    %v2781 = vmul.f32 %v1088, %v1545
    %v2782 = vmul.f32 %v1091, %v1546
    %v2783 = vmul.f32 %v1064, %v1547
    %v2784 = vmul.f32 %v2706, %v2230
    %v2785 = vmul.f32 %v2777, %v2230
    %v2786 = vmul.f32 %v2778, %v2230
    %v2787 = vmul.f32 %v2779, %v2230
    %v2788 = vmul.f32 %v2780, %v2230
    %v2789 = vmul.f32 %v2781, %v2230
    %v2790 = vmul.f32 %v2782, %v2230
    %v2791 = vmul.f32 %v2783, %v2230
    %v2792 = vadd.f32 %v2769, %v2784
    %v2793 = vadd.f32 %v2770, %v2785
    %v2794 = vadd.f32 %v2771, %v2786
    %v2795 = vadd.f32 %v2772, %v2787
    %v2796 = vadd.f32 %v2773, %v2788
    %v2797 = vadd.f32 %v2774, %v2789
    %v2798 = vadd.f32 %v2775, %v2790
    %v2799 = vadd.f32 %v2776, %v2791
    %v2800 = vmul.f32 %v2654, %v2250
    %v2801 = vmul.f32 %v2653, %v2255
    %v2802 = vmul.f32 %v2652, %v2260
    %v2803 = vmul.f32 %v2651, %v2265
    %v2804 = vmul.f32 %v2650, %v2270
    %v2805 = vmul.f32 %v2649, %v2275
    %v2806 = vmul.f32 %v2656, %v2280
    %v2807 = vmul.f32 %v2655, %v2285
    %v2808 = vmul.f32 %v2800, %v2298
    %v2809 = vmul.f32 %v2801, %v2298
    %v2810 = vmul.f32 %v2802, %v2298
    %v2811 = vmul.f32 %v2803, %v2298
    %v2812 = vmul.f32 %v2804, %v2298
    %v2813 = vmul.f32 %v2805, %v2298
    %v2814 = vmul.f32 %v2806, %v2298
    %v2815 = vmul.f32 %v2807, %v2298
    %v2816 = vadd.f32 %v2792, %v2808
    %v2817 = vadd.f32 %v2793, %v2809
    %v2818 = vadd.f32 %v2794, %v2810
    %v2819 = vadd.f32 %v2795, %v2811
    %v2820 = vadd.f32 %v2796, %v2812
    %v2821 = vadd.f32 %v2797, %v2813
    %v2822 = vadd.f32 %v2798, %v2814
    %v2823 = vadd.f32 %v2799, %v2815
    %v2825 = vsel %vm703, %v2573, 0
    %v2828 = vsel %vm703, %v2574, 0
    %v2831 = vsel %vm703, %v2575, 0
    %v2834 = vsel %vm703, %v2576, 0
    %2836 = vmatprep.subr.bf16.mxu0 0
    %2837 = vmatpush1.bf16.msra.mxu0 %v2392
    %2838 = vmatprep.subr.bf16.mxu0 0
    %2839 = vmatpush1.bf16.msra.mxu0 %v2393
    %2840 = vmatprep.subr.bf16.mxu0 0
    %2841 = vmatpush1.bf16.msra.mxu0 %v2394
    %2842 = vmatprep.subr.bf16.mxu0 0
    %2843 = vmatpush1.bf16.msra.mxu0 %v2395
    %2844 = vmatprep.subr.bf16.mxu0 0
    %2845 = vmatpush1.bf16.msra.mxu0 0
    %2846 = vmatprep.subr.bf16.mxu0 0
    %2847 = vmatpush1.bf16.msra.mxu0 0
    %2848 = vmatprep.subr.bf16.mxu0 0
    %2849 = vmatpush1.bf16.msra.mxu0 0
    %2850 = vmatprep.subr.bf16.mxu0 0
    %2851 = vmatpush1.bf16.msra.mxu0 0
    %2852 = vmatprep.subr.bf16.mxu0 0
    %2853 = vmatpush1.bf16.msra.mxu0 0
    %2854 = vmatprep.subr.bf16.mxu0 0
    %2855 = vmatpush1.bf16.msra.mxu0 0
    %2856 = vmatprep.subr.bf16.mxu0 0
    %2857 = vmatpush1.bf16.msra.mxu0 0
    %2858 = vmatprep.subr.bf16.mxu0 0
    %2859 = vmatpush1.bf16.msra.mxu0 0
    %2860 = vmatprep.subr.bf16.mxu0 0
    %2861 = vmatpush1.bf16.msra.mxu0 0
    %2862 = vmatprep.subr.bf16.mxu0 0
    %2863 = vmatpush1.bf16.msra.mxu0 0
    %2864 = vmatprep.subr.bf16.mxu0 0
    %2865 = vmatpush1.bf16.msra.mxu0 0
    %2866 = vmatprep.subr.bf16.mxu0 0
    %2867 = vmatpush1.bf16.msra.mxu0 0
    %2868 = vmatprep.mubr.bf16.mxu0 0
    %2869 = vmatmul.mubr.bf16.gmra.mrb[0].mxu0 %v2825
    %v2870 = vpop.f32.mrb[0].mxu0
    %v2871 = vadd.f32 %v2816, %v2870
    %v2872 = vpop.f32.mrb[0].mxu0
    %v2873 = vpop.f32.mrb[0].mxu0
    %v2874 = vadd.f32 %v2817, %v2873
    %v2875 = vpop.f32.mrb[0].mxu0
    %2876 = vmatprep.mubr.bf16.mxu0 0
    %2877 = vmatmul.mubr.bf16.gmra.mrb[0].mxu0 %v2828
    %v2878 = vpop.f32.mrb[0].mxu0
    %v2879 = vadd.f32 %v2818, %v2878
    %v2880 = vpop.f32.mrb[0].mxu0
    %v2881 = vpop.f32.mrb[0].mxu0
    %v2882 = vadd.f32 %v2819, %v2881
    %v2883 = vpop.f32.mrb[0].mxu0
    %2884 = vmatprep.mubr.bf16.mxu0 0
    %2885 = vmatmul.mubr.bf16.gmra.mrb[0].mxu0 %v2831
    %v2886 = vpop.f32.mrb[0].mxu0
    %v2887 = vadd.f32 %v2820, %v2886
    %v2888 = vpop.f32.mrb[0].mxu0
    %v2889 = vpop.f32.mrb[0].mxu0
    %v2890 = vadd.f32 %v2821, %v2889
    %v2891 = vpop.f32.mrb[0].mxu0
    %2892 = vmatprep.mubr.bf16.mxu0 0
    %2893 = vmatmul.mubr.bf16.gmra.mrb[0].mxu0 %v2834
    %v2894 = vpop.f32.mrb[0].mxu0
    %v2895 = vadd.f32 %v2822, %v2894
    %v2896 = vpop.f32.mrb[0].mxu0
    %v2897 = vpop.f32.mrb[0].mxu0
    %v2898 = vadd.f32 %v2823, %v2897
    %v2899 = vpop.f32.mrb[0].mxu0
    %2900 = vdwg.mxu0
    %v2901 = vld [vmem:[%s9 + $0x5] sm:$0x1]
    %v2902 = vlaneseq
    %v2903 = vshrl.u32 %v2902, 7
    %v2904 = vsub.s32 0, %v2903
    %v2905 = vrot.slane %v2901, %v2904
    %v2906 = vadd.f32 %v2362, %v2905
    %v2907 = vadd.f32 %v2365, %v2905
    %v2908 = vadd.f32 %v2370, %v2905
    %v2909 = vadd.f32 %v2373, %v2905
    %v2910 = vadd.f32 %v2378, %v2905
    %v2911 = vadd.f32 %v2381, %v2905
    %v2912 = vadd.f32 %v2386, %v2905
    %v2913 = vadd.f32 %v2389, %v2905
    %v2914 = vadd.f32 %v2871, %v2905
    %v2915 = vadd.f32 %v2874, %v2905
    %v2916 = vadd.f32 %v2879, %v2905
    %v2917 = vadd.f32 %v2882, %v2905
    %v2918 = vadd.f32 %v2887, %v2905
    %v2919 = vadd.f32 %v2890, %v2905
    %v2920 = vadd.f32 %v2895, %v2905
    %v2921 = vadd.f32 %v2898, %v2905
    %v2922 = vpack.c.bf16 %v2907, %v2906
    %v2923 = vpack.c.bf16 %v2909, %v2908
    %v2924 = vpack.c.bf16 %v2911, %v2910
    %v2925 = vpack.c.bf16 %v2913, %v2912
    %v2926 = vpack.c.bf16 %v2915, %v2914
    %v2927 = vpack.c.bf16 %v2917, %v2916
    %v2928 = vpack.c.bf16 %v2919, %v2918
    %v2929 = vpack.c.bf16 %v2921, %v2920
    %s2930 = scalar_lea.vmem %s3, 32
    %v2931 = vld [vmem:[%s2930] sm:$0xf]
    %v2932 = vld [vmem:[%s2930 + $0x4] sm:$0xf]
    %v2933 = vld [vmem:[%s2930 + $0x8] sm:$0xf]
    %v2934 = vld [vmem:[%s2930 + $0xc] sm:$0xf]
    %v2935 = vld [vmem:[%s2930 + $0x10] sm:$0xf]
    %v2936 = vld [vmem:[%s2930 + $0x14] sm:$0xf]
    %v2937 = vld [vmem:[%s2930 + $0x18] sm:$0xf]
    %v2938 = vld [vmem:[%s2930 + $0x1c] sm:$0xf]
    %v2939 = vld [vmem:[%s9 + $0x6] sm:$0x1]
    %v2940 = vlaneseq
    %v2941 = vshrl.u32 %v2940, 7
    %v2942 = vsub.s32 0, %v2941
    %v2943 = vrot.slane %v2939, %v2942
    %v2952 = vunpack.c.l.b16 %v2931
    %v2953 = vunpack.c.l.b16 %v2932
    %v2954 = vunpack.c.l.b16 %v2933
    %v2955 = vunpack.c.l.b16 %v2934
    %v2956 = vunpack.c.l.b16 %v2935
    %v2957 = vunpack.c.l.b16 %v2936
    %v2958 = vunpack.c.l.b16 %v2937
    %v2959 = vunpack.c.l.b16 %v2938
    %v2960 = vpack.c.b16 %v2953, %v2952
    %v2961 = vpack.c.b16 %v2955, %v2954
    %v2962 = vpack.c.b16 %v2957, %v2956
    %v2963 = vpack.c.b16 %v2959, %v2958
    %v2969 = vsel %vm703, %v2922, 0
    %v2972 = vsel %vm703, %v2923, 0
    %v2975 = vsel %vm703, %v2924, 0
    %v2978 = vsel %vm703, %v2925, 0
    %v2981 = vsel %vm703, %v2926, 0
    %v2984 = vsel %vm703, %v2927, 0
    %v2987 = vsel %vm703, %v2928, 0
    %v2990 = vsel %vm703, %v2929, 0
    %2992 = vmatprep.subr.bf16.mxu0 0
    %2993 = vmatpush1.bf16.msra.mxu0 %v2960
    %2994 = vmatprep.subr.bf16.mxu0 0
    %2995 = vmatpush1.bf16.msra.mxu0 %v2961
    %2996 = vmatprep.subr.bf16.mxu0 0
    %2997 = vmatpush1.bf16.msra.mxu0 %v2962
    %2998 = vmatprep.subr.bf16.mxu0 0
    %2999 = vmatpush1.bf16.msra.mxu0 %v2963
    %3000 = vmatprep.subr.bf16.mxu0 0
    %3001 = vmatpush1.bf16.msra.mxu0 0
    %3002 = vmatprep.subr.bf16.mxu0 0
    %3003 = vmatpush1.bf16.msra.mxu0 0
    %3004 = vmatprep.subr.bf16.mxu0 0
    %3005 = vmatpush1.bf16.msra.mxu0 0
    %3006 = vmatprep.subr.bf16.mxu0 0
    %3007 = vmatpush1.bf16.msra.mxu0 0
    %3008 = vmatprep.subr.bf16.mxu0 0
    %3009 = vmatpush1.bf16.msra.mxu0 0
    %3010 = vmatprep.subr.bf16.mxu0 0
    %3011 = vmatpush1.bf16.msra.mxu0 0
    %3012 = vmatprep.subr.bf16.mxu0 0
    %3013 = vmatpush1.bf16.msra.mxu0 0
    %3014 = vmatprep.subr.bf16.mxu0 0
    %3015 = vmatpush1.bf16.msra.mxu0 0
    %3016 = vmatprep.subr.bf16.mxu0 0
    %3017 = vmatpush1.bf16.msra.mxu0 0
    %3018 = vmatprep.subr.bf16.mxu0 0
    %3019 = vmatpush1.bf16.msra.mxu0 0
    %3020 = vmatprep.subr.bf16.mxu0 0
    %3021 = vmatpush1.bf16.msra.mxu0 0
    %3022 = vmatprep.subr.bf16.mxu0 0
    %3023 = vmatpush1.bf16.msra.mxu0 0
    %3024 = vmatprep.mubr.bf16.mxu0 0
    %3025 = vmatmul.mubr.bf16.gmra.mrb[0].mxu0 %v2969
    %v3026 = vpop.f32.mrb[0].mxu0
    %v3027 = vadd.f32 %v2943, %v3026
    %v3028 = vpop.f32.mrb[0].mxu0
    %v3029 = vpop.f32.mrb[0].mxu0
    %v3030 = vadd.f32 %v2943, %v3029
    %v3031 = vpop.f32.mrb[0].mxu0
    %3032 = vmatprep.mubr.bf16.mxu0 0
    %3033 = vmatmul.mubr.bf16.gmra.mrb[0].mxu0 %v2972
    %v3034 = vpop.f32.mrb[0].mxu0
    %v3035 = vadd.f32 %v2943, %v3034
    %v3036 = vpop.f32.mrb[0].mxu0
    %v3037 = vpop.f32.mrb[0].mxu0
    %v3038 = vadd.f32 %v2943, %v3037
    %v3039 = vpop.f32.mrb[0].mxu0
    %3040 = vmatprep.mubr.bf16.mxu0 0
    %3041 = vmatmul.mubr.bf16.gmra.mrb[0].mxu0 %v2975
    %v3042 = vpop.f32.mrb[0].mxu0
    %v3043 = vadd.f32 %v2943, %v3042
    %v3044 = vpop.f32.mrb[0].mxu0
    %v3045 = vpop.f32.mrb[0].mxu0
    %v3046 = vadd.f32 %v2943, %v3045
    %v3047 = vpop.f32.mrb[0].mxu0
    %3048 = vmatprep.mubr.bf16.mxu0 0
    %3049 = vmatmul.mubr.bf16.gmra.mrb[0].mxu0 %v2978
    %v3050 = vpop.f32.mrb[0].mxu0
    %v3051 = vadd.f32 %v2943, %v3050
    %v3052 = vpop.f32.mrb[0].mxu0
    %v3053 = vpop.f32.mrb[0].mxu0
    %v3054 = vadd.f32 %v2943, %v3053
    %v3055 = vpop.f32.mrb[0].mxu0
    %3056 = vmatprep.mubr.bf16.mxu0 0
    %3057 = vmatmul.mubr.bf16.gmra.mrb[0].mxu0 %v2981
    %v3058 = vpop.f32.mrb[0].mxu0
    %v3059 = vadd.f32 %v2943, %v3058
    %v3060 = vpop.f32.mrb[0].mxu0
    %v3061 = vpop.f32.mrb[0].mxu0
    %v3062 = vadd.f32 %v2943, %v3061
    %v3063 = vpop.f32.mrb[0].mxu0
    %3064 = vmatprep.mubr.bf16.mxu0 0
    %3065 = vmatmul.mubr.bf16.gmra.mrb[0].mxu0 %v2984
    %v3066 = vpop.f32.mrb[0].mxu0
    %v3067 = vadd.f32 %v2943, %v3066
    %v3068 = vpop.f32.mrb[0].mxu0
    %v3069 = vpop.f32.mrb[0].mxu0
    %v3070 = vadd.f32 %v2943, %v3069
    %v3071 = vpop.f32.mrb[0].mxu0
    %3072 = vmatprep.mubr.bf16.mxu0 0
    %3073 = vmatmul.mubr.bf16.gmra.mrb[0].mxu0 %v2987
    %v3074 = vpop.f32.mrb[0].mxu0
    %v3075 = vadd.f32 %v2943, %v3074
    %v3076 = vpop.f32.mrb[0].mxu0
    %v3077 = vpop.f32.mrb[0].mxu0
    %v3078 = vadd.f32 %v2943, %v3077
    %v3079 = vpop.f32.mrb[0].mxu0
    %3080 = vmatprep.mubr.bf16.mxu0 0
    %3081 = vmatmul.mubr.bf16.gmra.mrb[0].mxu0 %v2990
    %v3082 = vpop.f32.mrb[0].mxu0
    %v3083 = vadd.f32 %v2943, %v3082
    %v3084 = vpop.f32.mrb[0].mxu0
    %v3085 = vpop.f32.mrb[0].mxu0
    %v3086 = vadd.f32 %v2943, %v3085
    %v3087 = vpop.f32.mrb[0].mxu0
    %3088 = vdwg.mxu0
    %v3089 = vadd.f32 %v642, %v3027
    %v3090 = vadd.f32 %v643, %v3030
    %v3091 = vadd.f32 %v644, %v3035
    %v3092 = vadd.f32 %v645, %v3038
    %v3093 = vadd.f32 %v646, %v3043
    %v3094 = vadd.f32 %v647, %v3046
    %v3095 = vadd.f32 %v648, %v3051
    %v3096 = vadd.f32 %v649, %v3054
    %v3097 = vadd.f32 %v650, %v3059
    %v3098 = vadd.f32 %v651, %v3062
    %v3099 = vadd.f32 %v652, %v3067
    %v3100 = vadd.f32 %v653, %v3070
    %v3101 = vadd.f32 %v654, %v3075
    %v3102 = vadd.f32 %v655, %v3078
    %v3103 = vadd.f32 %v656, %v3083
    %v3104 = vadd.f32 %v657, %v3086
    %v3105 = vpack.c.bf16 %v3090, %v3089
    %v3106 = vpack.c.bf16 %v3092, %v3091
    %v3107 = vpack.c.bf16 %v3094, %v3093
    %v3108 = vpack.c.bf16 %v3096, %v3095
    %v3109 = vpack.c.bf16 %v3098, %v3097
    %v3110 = vpack.c.bf16 %v3100, %v3099
    %v3111 = vpack.c.bf16 %v3102, %v3101
    %v3112 = vpack.c.bf16 %v3104, %v3103
    %v3113 = vld [vmem:[%s4] sm:$0xf]
    %v3114 = vld [vmem:[%s4 + $0x4] sm:$0xf]
    %v3115 = vld [vmem:[%s4 + $0x8] sm:$0xf]
    %v3116 = vld [vmem:[%s4 + $0xc] sm:$0xf]
    %v3117 = vld [vmem:[%s4 + $0x10] sm:$0xf]
    %v3118 = vld [vmem:[%s4 + $0x14] sm:$0xf]
    %v3119 = vld [vmem:[%s4 + $0x18] sm:$0xf]
    %v3120 = vld [vmem:[%s4 + $0x1c] sm:$0xf]
    %v3121 = vld [vmem:[%s9 + $0x7] sm:$0x1]
    %v3122 = vlaneseq
    %v3123 = vshrl.u32 %v3122, 7
    %v3124 = vsub.s32 0, %v3123
    %v3125 = vrot.slane %v3121, %v3124
    %v3134 = vunpack.c.l.b16 %v3113
    %v3135 = vunpack.c.l.b16 %v3114
    %v3136 = vunpack.c.l.b16 %v3115
    %v3137 = vunpack.c.l.b16 %v3116
    %v3138 = vunpack.c.l.b16 %v3117
    %v3139 = vunpack.c.l.b16 %v3118
    %v3140 = vunpack.c.l.b16 %v3119
    %v3141 = vunpack.c.l.b16 %v3120
    %v3142 = vpack.c.b16 %v3135, %v3134
    %v3143 = vpack.c.b16 %v3137, %v3136
    %v3144 = vpack.c.b16 %v3139, %v3138
    %v3145 = vpack.c.b16 %v3141, %v3140
    %v3151 = vsel %vm703, %v3105, 0
    %v3154 = vsel %vm703, %v3106, 0
    %v3157 = vsel %vm703, %v3107, 0
    %v3160 = vsel %vm703, %v3108, 0
    %v3163 = vsel %vm703, %v3109, 0
    %v3166 = vsel %vm703, %v3110, 0
    %v3169 = vsel %vm703, %v3111, 0
    %v3172 = vsel %vm703, %v3112, 0
    %3174 = vmatprep.subr.bf16.mxu0 0
    %3175 = vmatpush1.bf16.msra.mxu0 %v3142
    %3176 = vmatprep.subr.bf16.mxu0 0
    %3177 = vmatpush1.bf16.msra.mxu0 %v3143
    %3178 = vmatprep.subr.bf16.mxu0 0
    %3179 = vmatpush1.bf16.msra.mxu0 %v3144
    %3180 = vmatprep.subr.bf16.mxu0 0
    %3181 = vmatpush1.bf16.msra.mxu0 %v3145
    %3182 = vmatprep.subr.bf16.mxu0 0
    %3183 = vmatpush1.bf16.msra.mxu0 0
    %3184 = vmatprep.subr.bf16.mxu0 0
    %3185 = vmatpush1.bf16.msra.mxu0 0
    %3186 = vmatprep.subr.bf16.mxu0 0
    %3187 = vmatpush1.bf16.msra.mxu0 0
    %3188 = vmatprep.subr.bf16.mxu0 0
    %3189 = vmatpush1.bf16.msra.mxu0 0
    %3190 = vmatprep.subr.bf16.mxu0 0
    %3191 = vmatpush1.bf16.msra.mxu0 0
    %3192 = vmatprep.subr.bf16.mxu0 0
    %3193 = vmatpush1.bf16.msra.mxu0 0
    %3194 = vmatprep.subr.bf16.mxu0 0
    %3195 = vmatpush1.bf16.msra.mxu0 0
    %3196 = vmatprep.subr.bf16.mxu0 0
    %3197 = vmatpush1.bf16.msra.mxu0 0
    %3198 = vmatprep.subr.bf16.mxu0 0
    %3199 = vmatpush1.bf16.msra.mxu0 0
    %3200 = vmatprep.subr.bf16.mxu0 0
    %3201 = vmatpush1.bf16.msra.mxu0 0
    %3202 = vmatprep.subr.bf16.mxu0 0
    %3203 = vmatpush1.bf16.msra.mxu0 0
    %3204 = vmatprep.subr.bf16.mxu0 0
    %3205 = vmatpush1.bf16.msra.mxu0 0
    %3206 = vmatprep.mubr.bf16.mxu0 0
    %3207 = vmatmul.mubr.bf16.gmra.mrb[0].mxu0 %v3151
    %v3208 = vpop.f32.mrb[0].mxu0
    %v3209 = vadd.f32 %v3125, %v3208
    %v3210 = vpop.f32.mrb[0].mxu0
    %v3211 = vpop.f32.mrb[0].mxu0
    %v3212 = vadd.f32 %v3125, %v3211
    %v3213 = vpop.f32.mrb[0].mxu0
    %3214 = vmatprep.mubr.bf16.mxu0 0
    %3215 = vmatmul.mubr.bf16.gmra.mrb[0].mxu0 %v3154
    %v3216 = vpop.f32.mrb[0].mxu0
    %v3217 = vadd.f32 %v3125, %v3216
    %v3218 = vpop.f32.mrb[0].mxu0
    %v3219 = vpop.f32.mrb[0].mxu0
    %v3220 = vadd.f32 %v3125, %v3219
    %v3221 = vpop.f32.mrb[0].mxu0
    %3222 = vmatprep.mubr.bf16.mxu0 0
    %3223 = vmatmul.mubr.bf16.gmra.mrb[0].mxu0 %v3157
    %v3224 = vpop.f32.mrb[0].mxu0
    %v3225 = vadd.f32 %v3125, %v3224
    %v3226 = vpop.f32.mrb[0].mxu0
    %v3227 = vpop.f32.mrb[0].mxu0
    %v3228 = vadd.f32 %v3125, %v3227
    %v3229 = vpop.f32.mrb[0].mxu0
    %3230 = vmatprep.mubr.bf16.mxu0 0
    %3231 = vmatmul.mubr.bf16.gmra.mrb[0].mxu0 %v3160
    %v3232 = vpop.f32.mrb[0].mxu0
    %v3233 = vadd.f32 %v3125, %v3232
    %v3234 = vpop.f32.mrb[0].mxu0
    %v3235 = vpop.f32.mrb[0].mxu0
    %v3236 = vadd.f32 %v3125, %v3235
    %v3237 = vpop.f32.mrb[0].mxu0
    %3238 = vmatprep.mubr.bf16.mxu0 0
    %3239 = vmatmul.mubr.bf16.gmra.mrb[0].mxu0 %v3163
    %v3240 = vpop.f32.mrb[0].mxu0
    %v3241 = vadd.f32 %v3125, %v3240
    %v3242 = vpop.f32.mrb[0].mxu0
    %v3243 = vpop.f32.mrb[0].mxu0
    %v3244 = vadd.f32 %v3125, %v3243
    %v3245 = vpop.f32.mrb[0].mxu0
    %3246 = vmatprep.mubr.bf16.mxu0 0
    %3247 = vmatmul.mubr.bf16.gmra.mrb[0].mxu0 %v3166
    %v3248 = vpop.f32.mrb[0].mxu0
    %v3249 = vadd.f32 %v3125, %v3248
    %v3250 = vpop.f32.mrb[0].mxu0
    %v3251 = vpop.f32.mrb[0].mxu0
    %v3252 = vadd.f32 %v3125, %v3251
    %v3253 = vpop.f32.mrb[0].mxu0
    %3254 = vmatprep.mubr.bf16.mxu0 0
    %3255 = vmatmul.mubr.bf16.gmra.mrb[0].mxu0 %v3169
    %v3256 = vpop.f32.mrb[0].mxu0
    %v3257 = vadd.f32 %v3125, %v3256
    %v3258 = vpop.f32.mrb[0].mxu0
    %v3259 = vpop.f32.mrb[0].mxu0
    %v3260 = vadd.f32 %v3125, %v3259
    %v3261 = vpop.f32.mrb[0].mxu0
    %3262 = vmatprep.mubr.bf16.mxu0 0
    %3263 = vmatmul.mubr.bf16.gmra.mrb[0].mxu0 %v3172
    %v3264 = vpop.f32.mrb[0].mxu0
    %v3265 = vadd.f32 %v3125, %v3264
    %v3266 = vpop.f32.mrb[0].mxu0
    %v3267 = vpop.f32.mrb[0].mxu0
    %v3268 = vadd.f32 %v3125, %v3267
    %v3269 = vpop.f32.mrb[0].mxu0
    %3270 = vdwg.mxu0
    %v3271 = vxor.u32 %v3209, 2147483648
    %v3272 = vxor.u32 %v3212, 2147483648
    %v3273 = vxor.u32 %v3217, 2147483648
    %v3274 = vxor.u32 %v3220, 2147483648
    %v3275 = vxor.u32 %v3225, 2147483648
    %v3276 = vxor.u32 %v3228, 2147483648
    %v3277 = vxor.u32 %v3233, 2147483648
    %v3278 = vxor.u32 %v3236, 2147483648
    %v3279 = vxor.u32 %v3241, 2147483648
    %v3280 = vxor.u32 %v3244, 2147483648
    %v3281 = vxor.u32 %v3249, 2147483648
    %v3282 = vxor.u32 %v3252, 2147483648
    %v3283 = vxor.u32 %v3257, 2147483648
    %v3284 = vxor.u32 %v3260, 2147483648
    %v3285 = vxor.u32 %v3265, 2147483648
    %v3286 = vxor.u32 %v3268, 2147483648
    %v3287 = vmul.f32 %v3271, 1.442695
    %v3288 = vpow.pop %v3287
    %v3289 = vmul.f32 %v3272, 1.442695
    %v3290 = vpow.pop %v3289
    %v3291 = vmul.f32 %v3273, 1.442695
    %v3292 = vpow.pop %v3291
    %v3293 = vmul.f32 %v3274, 1.442695
    %v3294 = vpow.pop %v3293
    %v3295 = vmul.f32 %v3275, 1.442695
    %v3296 = vpow.pop %v3295
    %v3297 = vmul.f32 %v3276, 1.442695
    %v3298 = vpow.pop %v3297
    %v3299 = vmul.f32 %v3277, 1.442695
    %v3300 = vpow.pop %v3299
    %v3301 = vmul.f32 %v3278, 1.442695
    %v3302 = vpow.pop %v3301
    %v3303 = vmul.f32 %v3279, 1.442695
    %v3304 = vpow.pop %v3303
    %v3305 = vmul.f32 %v3280, 1.442695
    %v3306 = vpow.pop %v3305
    %v3307 = vmul.f32 %v3281, 1.442695
    %v3308 = vpow.pop %v3307
    %v3309 = vmul.f32 %v3282, 1.442695
    %v3310 = vpow.pop %v3309
    %v3311 = vmul.f32 %v3283, 1.442695
    %v3312 = vpow.pop %v3311
    %v3313 = vmul.f32 %v3284, 1.442695
    %v3314 = vpow.pop %v3313
    %v3315 = vmul.f32 %v3285, 1.442695
    %v3316 = vpow.pop %v3315
    %v3317 = vmul.f32 %v3286, 1.442695
    %v3318 = vpow.pop %v3317
    %v3319 = vadd.f32 %v3288, 1.0
    %v3320 = vadd.f32 %v3290, 1.0
    %v3321 = vadd.f32 %v3292, 1.0
    %v3322 = vadd.f32 %v3294, 1.0
    %v3323 = vadd.f32 %v3296, 1.0
    %v3324 = vadd.f32 %v3298, 1.0
    %v3325 = vadd.f32 %v3300, 1.0
    %v3326 = vadd.f32 %v3302, 1.0
    %v3327 = vadd.f32 %v3304, 1.0
    %v3328 = vadd.f32 %v3306, 1.0
    %v3329 = vadd.f32 %v3308, 1.0
    %v3330 = vadd.f32 %v3310, 1.0
    %v3331 = vadd.f32 %v3312, 1.0
    %v3332 = vadd.f32 %v3314, 1.0
    %v3333 = vadd.f32 %v3316, 1.0
    %v3334 = vadd.f32 %v3318, 1.0
    %v3335 = vrcp.pop %v3319
    %v3336 = vmul.f32 1.0, %v3335
    %v3337 = vrcp.pop %v3320
    %v3338 = vmul.f32 1.0, %v3337
    %v3339 = vrcp.pop %v3321
    %v3340 = vmul.f32 1.0, %v3339
    %v3341 = vrcp.pop %v3322
    %v3342 = vmul.f32 1.0, %v3341
    %v3343 = vrcp.pop %v3323
    %v3344 = vmul.f32 1.0, %v3343
    %v3345 = vrcp.pop %v3324
    %v3346 = vmul.f32 1.0, %v3345
    %v3347 = vrcp.pop %v3325
    %v3348 = vmul.f32 1.0, %v3347
    %v3349 = vrcp.pop %v3326
    %v3350 = vmul.f32 1.0, %v3349
    %v3351 = vrcp.pop %v3327
    %v3352 = vmul.f32 1.0, %v3351
    %v3353 = vrcp.pop %v3328
    %v3354 = vmul.f32 1.0, %v3353
    %v3355 = vrcp.pop %v3329
    %v3356 = vmul.f32 1.0, %v3355
    %v3357 = vrcp.pop %v3330
    %v3358 = vmul.f32 1.0, %v3357
    %v3359 = vrcp.pop %v3331
    %v3360 = vmul.f32 1.0, %v3359
    %v3361 = vrcp.pop %v3332
    %v3362 = vmul.f32 1.0, %v3361
    %v3363 = vrcp.pop %v3333
    %v3364 = vmul.f32 1.0, %v3363
    %v3365 = vrcp.pop %v3334
    %v3366 = vmul.f32 1.0, %v3365
    %v3367 = vmul.f32 %v3209, %v3336
    %v3368 = vmul.f32 %v3212, %v3338
    %v3369 = vmul.f32 %v3217, %v3340
    %v3370 = vmul.f32 %v3220, %v3342
    %v3371 = vmul.f32 %v3225, %v3344
    %v3372 = vmul.f32 %v3228, %v3346
    %v3373 = vmul.f32 %v3233, %v3348
    %v3374 = vmul.f32 %v3236, %v3350
    %v3375 = vmul.f32 %v3241, %v3352
    %v3376 = vmul.f32 %v3244, %v3354
    %v3377 = vmul.f32 %v3249, %v3356
    %v3378 = vmul.f32 %v3252, %v3358
    %v3379 = vmul.f32 %v3257, %v3360
    %v3380 = vmul.f32 %v3260, %v3362
    %v3381 = vmul.f32 %v3265, %v3364
    %v3382 = vmul.f32 %v3268, %v3366
    %v3383 = vpack.c.bf16 %v3368, %v3367
    %v3384 = vpack.c.bf16 %v3370, %v3369
    %v3385 = vpack.c.bf16 %v3372, %v3371
    %v3386 = vpack.c.bf16 %v3374, %v3373
    %v3387 = vpack.c.bf16 %v3376, %v3375
    %v3388 = vpack.c.bf16 %v3378, %v3377
    %v3389 = vpack.c.bf16 %v3380, %v3379
    %v3390 = vpack.c.bf16 %v3382, %v3381
    %v3391 = vld [vmem:[%s5] sm:$0xf]
    %v3392 = vld [vmem:[%s5 + $0x4] sm:$0xf]
    %v3393 = vld [vmem:[%s5 + $0x8] sm:$0xf]
    %v3394 = vld [vmem:[%s5 + $0xc] sm:$0xf]
    %v3395 = vld [vmem:[%s5 + $0x10] sm:$0xf]
    %v3396 = vld [vmem:[%s5 + $0x14] sm:$0xf]
    %v3397 = vld [vmem:[%s5 + $0x18] sm:$0xf]
    %v3398 = vld [vmem:[%s5 + $0x1c] sm:$0xf]
    %v3399 = vld [vmem:[%s5 + $0x20] sm:$0xf]
    %v3400 = vld [vmem:[%s5 + $0x24] sm:$0xf]
    %v3401 = vld [vmem:[%s5 + $0x28] sm:$0xf]
    %v3402 = vld [vmem:[%s5 + $0x2c] sm:$0xf]
    %v3403 = vld [vmem:[%s5 + $0x30] sm:$0xf]
    %v3404 = vld [vmem:[%s5 + $0x34] sm:$0xf]
    %v3405 = vld [vmem:[%s5 + $0x38] sm:$0xf]
    %v3406 = vld [vmem:[%s5 + $0x3c] sm:$0xf]
    %v3407 = vld [vmem:[%s9 + $0x8] sm:$0x1]
    %v3408 = vlaneseq
    %v3409 = vshrl.u32 %v3408, 7
    %v3410 = vsub.s32 0, %v3409
    %v3411 = vrot.slane %v3407, %v3410
    %v3428 = vunpack.c.l.b16 %v3391
    %v3429 = vunpack.c.l.b16 %v3392
    %v3430 = vunpack.c.l.b16 %v3393
    %v3431 = vunpack.c.l.b16 %v3394
    %v3432 = vunpack.c.l.b16 %v3395
    %v3433 = vunpack.c.l.b16 %v3396
    %v3434 = vunpack.c.l.b16 %v3397
    %v3435 = vunpack.c.l.b16 %v3398
    %v3436 = vunpack.c.l.b16 %v3399
    %v3437 = vunpack.c.l.b16 %v3400
    %v3438 = vunpack.c.l.b16 %v3401
    %v3439 = vunpack.c.l.b16 %v3402
    %v3440 = vunpack.c.l.b16 %v3403
    %v3441 = vunpack.c.l.b16 %v3404
    %v3442 = vunpack.c.l.b16 %v3405
    %v3443 = vunpack.c.l.b16 %v3406
    %v3444 = vpack.c.b16 %v3429, %v3428
    %v3445 = vpack.c.b16 %v3431, %v3430
    %v3446 = vpack.c.b16 %v3433, %v3432
    %v3447 = vpack.c.b16 %v3435, %v3434
    %v3448 = vpack.c.b16 %v3437, %v3436
    %v3449 = vpack.c.b16 %v3439, %v3438
    %v3450 = vpack.c.b16 %v3441, %v3440
    %v3451 = vpack.c.b16 %v3443, %v3442
    %3460 = vmatprep.subr.bf16.mxu0 0
    %3461 = vmatpush1.bf16.msra.mxu0 %v3444
    %3462 = vmatprep.subr.bf16.mxu0 0
    %3463 = vmatpush1.bf16.msra.mxu0 %v3445
    %3464 = vmatprep.subr.bf16.mxu0 0
    %3465 = vmatpush1.bf16.msra.mxu0 %v3446
    %3466 = vmatprep.subr.bf16.mxu0 0
    %3467 = vmatpush1.bf16.msra.mxu0 %v3447
    %3468 = vmatprep.subr.bf16.mxu0 0
    %3469 = vmatpush1.bf16.msra.mxu0 %v3448
    %3470 = vmatprep.subr.bf16.mxu0 0
    %3471 = vmatpush1.bf16.msra.mxu0 %v3449
    %3472 = vmatprep.subr.bf16.mxu0 0
    %3473 = vmatpush1.bf16.msra.mxu0 %v3450
    %3474 = vmatprep.subr.bf16.mxu0 0
    %3475 = vmatpush1.bf16.msra.mxu0 %v3451
    %3476 = vmatprep.subr.bf16.mxu0 0
    %3477 = vmatpush1.bf16.msra.mxu0 0
    %3478 = vmatprep.subr.bf16.mxu0 0
    %3479 = vmatpush1.bf16.msra.mxu0 0
    %3480 = vmatprep.subr.bf16.mxu0 0
    %3481 = vmatpush1.bf16.msra.mxu0 0
    %3482 = vmatprep.subr.bf16.mxu0 0
    %3483 = vmatpush1.bf16.msra.mxu0 0
    %3484 = vmatprep.subr.bf16.mxu0 0
    %3485 = vmatpush1.bf16.msra.mxu0 0
    %3486 = vmatprep.subr.bf16.mxu0 0
    %3487 = vmatpush1.bf16.msra.mxu0 0
    %3488 = vmatprep.subr.bf16.mxu0 0
    %3489 = vmatpush1.bf16.msra.mxu0 0
    %3490 = vmatprep.subr.bf16.mxu0 0
    %3491 = vmatpush1.bf16.msra.mxu0 0
    %3492 = vmatprep.mubr.bf16.mxu0 0
    %3493 = vmatmul.mubr.bf16.gmra.mrb[0].mxu0 %v3383
    %v3494 = vpop.f32.mrb[0].mxu0
    %v3495 = vadd.f32 %v3411, %v3494
    %v3496 = vpop.f32.mrb[0].mxu0
    %v3497 = vpop.f32.mrb[0].mxu0
    %v3498 = vadd.f32 %v3411, %v3497
    %v3499 = vpop.f32.mrb[0].mxu0
    %3500 = vmatprep.mubr.bf16.mxu0 0
    %3501 = vmatmul.mubr.bf16.gmra.mrb[0].mxu0 %v3384
    %v3502 = vpop.f32.mrb[0].mxu0
    %v3503 = vadd.f32 %v3411, %v3502
    %v3504 = vpop.f32.mrb[0].mxu0
    %v3505 = vpop.f32.mrb[0].mxu0
    %v3506 = vadd.f32 %v3411, %v3505
    %v3507 = vpop.f32.mrb[0].mxu0
    %3508 = vmatprep.mubr.bf16.mxu0 0
    %3509 = vmatmul.mubr.bf16.gmra.mrb[0].mxu0 %v3385
    %v3510 = vpop.f32.mrb[0].mxu0
    %v3511 = vadd.f32 %v3411, %v3510
    %v3512 = vpop.f32.mrb[0].mxu0
    %v3513 = vpop.f32.mrb[0].mxu0
    %v3514 = vadd.f32 %v3411, %v3513
    %v3515 = vpop.f32.mrb[0].mxu0
    %3516 = vmatprep.mubr.bf16.mxu0 0
    %3517 = vmatmul.mubr.bf16.gmra.mrb[0].mxu0 %v3386
    %v3518 = vpop.f32.mrb[0].mxu0
    %v3519 = vadd.f32 %v3411, %v3518
    %v3520 = vpop.f32.mrb[0].mxu0
    %v3521 = vpop.f32.mrb[0].mxu0
    %v3522 = vadd.f32 %v3411, %v3521
    %v3523 = vpop.f32.mrb[0].mxu0
    %3524 = vmatprep.mubr.bf16.mxu0 0
    %3525 = vmatmul.mubr.bf16.gmra.mrb[0].mxu0 %v3387
    %v3526 = vpop.f32.mrb[0].mxu0
    %v3527 = vadd.f32 %v3411, %v3526
    %v3528 = vpop.f32.mrb[0].mxu0
    %v3529 = vpop.f32.mrb[0].mxu0
    %v3530 = vadd.f32 %v3411, %v3529
    %v3531 = vpop.f32.mrb[0].mxu0
    %3532 = vmatprep.mubr.bf16.mxu0 0
    %3533 = vmatmul.mubr.bf16.gmra.mrb[0].mxu0 %v3388
    %v3534 = vpop.f32.mrb[0].mxu0
    %v3535 = vadd.f32 %v3411, %v3534
    %v3536 = vpop.f32.mrb[0].mxu0
    %v3537 = vpop.f32.mrb[0].mxu0
    %v3538 = vadd.f32 %v3411, %v3537
    %v3539 = vpop.f32.mrb[0].mxu0
    %3540 = vmatprep.mubr.bf16.mxu0 0
    %3541 = vmatmul.mubr.bf16.gmra.mrb[0].mxu0 %v3389
    %v3542 = vpop.f32.mrb[0].mxu0
    %v3543 = vadd.f32 %v3411, %v3542
    %v3544 = vpop.f32.mrb[0].mxu0
    %v3545 = vpop.f32.mrb[0].mxu0
    %v3546 = vadd.f32 %v3411, %v3545
    %v3547 = vpop.f32.mrb[0].mxu0
    %3548 = vmatprep.mubr.bf16.mxu0 0
    %3549 = vmatmul.mubr.bf16.gmra.mrb[0].mxu0 %v3390
    %v3550 = vpop.f32.mrb[0].mxu0
    %v3551 = vadd.f32 %v3411, %v3550
    %v3552 = vpop.f32.mrb[0].mxu0
    %v3553 = vpop.f32.mrb[0].mxu0
    %v3554 = vadd.f32 %v3411, %v3553
    %v3555 = vpop.f32.mrb[0].mxu0
    %3556 = vdwg.mxu0
    %v3557 = vadd.f32 %v3089, %v3495
    %v3558 = vadd.f32 %v3090, %v3498
    %v3559 = vadd.f32 %v3091, %v3503
    %v3560 = vadd.f32 %v3092, %v3506
    %v3561 = vadd.f32 %v3093, %v3511
    %v3562 = vadd.f32 %v3094, %v3514
    %v3563 = vadd.f32 %v3095, %v3519
    %v3564 = vadd.f32 %v3096, %v3522
    %v3565 = vadd.f32 %v3097, %v3527
    %v3566 = vadd.f32 %v3098, %v3530
    %v3567 = vadd.f32 %v3099, %v3535
    %v3568 = vadd.f32 %v3100, %v3538
    %v3569 = vadd.f32 %v3101, %v3543
    %v3570 = vadd.f32 %v3102, %v3546
    %v3571 = vadd.f32 %v3103, %v3551
    %v3572 = vadd.f32 %v3104, %v3554
    %v3573 = vpack.c.bf16 %v364, %v363
    %v3574 = vpack.c.bf16 %v366, %v365
    %v3575 = vpack.c.bf16 %v368, %v367
    %v3576 = vpack.c.bf16 %v370, %v369
    %v3577 = vpack.c.bf16 %v372, %v371
    %v3578 = vpack.c.bf16 %v374, %v373
    %v3579 = vpack.c.bf16 %v376, %v375
    %v3580 = vpack.c.bf16 %v378, %v377
    %v3581 = vld [vmem:[%s6] sm:$0xf]
    %v3582 = vld [vmem:[%s6 + $0x4] sm:$0xf]
    %v3583 = vld [vmem:[%s6 + $0x8] sm:$0xf]
    %v3584 = vld [vmem:[%s6 + $0xc] sm:$0xf]
    %v3585 = vld [vmem:[%s6 + $0x10] sm:$0xf]
    %v3586 = vld [vmem:[%s6 + $0x14] sm:$0xf]
    %v3587 = vld [vmem:[%s6 + $0x18] sm:$0xf]
    %v3588 = vld [vmem:[%s6 + $0x1c] sm:$0xf]
    %v3589 = vpack.c.bf16 %v3558, %v3557
    %v3590 = vpack.c.bf16 %v3560, %v3559
    %v3591 = vpack.c.bf16 %v3562, %v3561
    %v3592 = vpack.c.bf16 %v3564, %v3563
    %v3593 = vpack.c.bf16 %v3566, %v3565
    %v3594 = vpack.c.bf16 %v3568, %v3567
    %v3595 = vpack.c.bf16 %v3570, %v3569
    %v3596 = vpack.c.bf16 %v3572, %v3571
    %s3597 = scalar_lea.vmem %s6, 32
    %v3598 = vld [vmem:[%s3597] sm:$0xf]
    %v3599 = vld [vmem:[%s3597 + $0x4] sm:$0xf]
    %v3600 = vld [vmem:[%s3597 + $0x8] sm:$0xf]
    %v3601 = vld [vmem:[%s3597 + $0xc] sm:$0xf]
    %v3602 = vld [vmem:[%s3597 + $0x10] sm:$0xf]
    %v3603 = vld [vmem:[%s3597 + $0x14] sm:$0xf]
    %v3604 = vld [vmem:[%s3597 + $0x18] sm:$0xf]
    %v3605 = vld [vmem:[%s3597 + $0x1c] sm:$0xf]
    %v3614 = vunpack.c.l.b16 %v3598
    %v3615 = vunpack.c.l.b16 %v3599
    %v3616 = vunpack.c.l.b16 %v3600
    %v3617 = vunpack.c.l.b16 %v3601
    %v3618 = vunpack.c.l.b16 %v3602
    %v3619 = vunpack.c.l.b16 %v3603
    %v3620 = vunpack.c.l.b16 %v3604
    %v3621 = vunpack.c.l.b16 %v3605
    %v3622 = vpack.c.b16 %v3615, %v3614
    %v3623 = vpack.c.b16 %v3617, %v3616
    %v3624 = vpack.c.b16 %v3619, %v3618
    %v3625 = vpack.c.b16 %v3621, %v3620
    %v3631 = vsel %vm703, %v3589, 0
    %v3634 = vsel %vm703, %v3590, 0
    %v3637 = vsel %vm703, %v3591, 0
    %v3640 = vsel %vm703, %v3592, 0
    %v3643 = vsel %vm703, %v3593, 0
    %v3646 = vsel %vm703, %v3594, 0
    %v3649 = vsel %vm703, %v3595, 0
    %v3652 = vsel %vm703, %v3596, 0
    %3654 = vmatprep.subr.bf16.mxu0 0
    %3655 = vmatpush1.bf16.msra.mxu0 %v3622
    %3656 = vmatprep.subr.bf16.mxu0 0
    %3657 = vmatpush1.bf16.msra.mxu0 %v3623
    %3658 = vmatprep.subr.bf16.mxu0 0
    %3659 = vmatpush1.bf16.msra.mxu0 %v3624
    %3660 = vmatprep.subr.bf16.mxu0 0
    %3661 = vmatpush1.bf16.msra.mxu0 %v3625
    %3662 = vmatprep.subr.bf16.mxu0 0
    %3663 = vmatpush1.bf16.msra.mxu0 0
    %3664 = vmatprep.subr.bf16.mxu0 0
    %3665 = vmatpush1.bf16.msra.mxu0 0
    %3666 = vmatprep.subr.bf16.mxu0 0
    %3667 = vmatpush1.bf16.msra.mxu0 0
    %3668 = vmatprep.subr.bf16.mxu0 0
    %3669 = vmatpush1.bf16.msra.mxu0 0
    %3670 = vmatprep.subr.bf16.mxu0 0
    %3671 = vmatpush1.bf16.msra.mxu0 0
    %3672 = vmatprep.subr.bf16.mxu0 0
    %3673 = vmatpush1.bf16.msra.mxu0 0
    %3674 = vmatprep.subr.bf16.mxu0 0
    %3675 = vmatpush1.bf16.msra.mxu0 0
    %3676 = vmatprep.subr.bf16.mxu0 0
    %3677 = vmatpush1.bf16.msra.mxu0 0
    %3678 = vmatprep.subr.bf16.mxu0 0
    %3679 = vmatpush1.bf16.msra.mxu0 0
    %3680 = vmatprep.subr.bf16.mxu0 0
    %3681 = vmatpush1.bf16.msra.mxu0 0
    %3682 = vmatprep.subr.bf16.mxu0 0
    %3683 = vmatpush1.bf16.msra.mxu0 0
    %3684 = vmatprep.subr.bf16.mxu0 0
    %3685 = vmatpush1.bf16.msra.mxu0 0
    %3686 = vmatprep.mubr.bf16.mxu0 0
    %3687 = vmatmul.mubr.bf16.gmra.mrb[0].mxu0 %v3631
    %v3688 = vpop.f32.mrb[0].mxu0
    %v3689 = vadd.f32 0.0, %v3688
    %v3690 = vpop.f32.mrb[0].mxu0
    %v3691 = vpop.f32.mrb[0].mxu0
    %v3692 = vadd.f32 0.0, %v3691
    %v3693 = vpop.f32.mrb[0].mxu0
    %3694 = vmatprep.mubr.bf16.mxu0 0
    %3695 = vmatmul.mubr.bf16.gmra.mrb[0].mxu0 %v3634
    %v3696 = vpop.f32.mrb[0].mxu0
    %v3697 = vadd.f32 0.0, %v3696
    %v3698 = vpop.f32.mrb[0].mxu0
    %v3699 = vpop.f32.mrb[0].mxu0
    %v3700 = vadd.f32 0.0, %v3699
    %v3701 = vpop.f32.mrb[0].mxu0
    %3702 = vmatprep.mubr.bf16.mxu0 0
    %3703 = vmatmul.mubr.bf16.gmra.mrb[0].mxu0 %v3637
    %v3704 = vpop.f32.mrb[0].mxu0
    %v3705 = vadd.f32 0.0, %v3704
    %v3706 = vpop.f32.mrb[0].mxu0
    %v3707 = vpop.f32.mrb[0].mxu0
    %v3708 = vadd.f32 0.0, %v3707
    %v3709 = vpop.f32.mrb[0].mxu0
    %3710 = vmatprep.mubr.bf16.mxu0 0
    %3711 = vmatmul.mubr.bf16.gmra.mrb[0].mxu0 %v3640
    %v3712 = vpop.f32.mrb[0].mxu0
    %v3713 = vadd.f32 0.0, %v3712
    %v3714 = vpop.f32.mrb[0].mxu0
    %v3715 = vpop.f32.mrb[0].mxu0
    %v3716 = vadd.f32 0.0, %v3715
    %v3717 = vpop.f32.mrb[0].mxu0
    %3718 = vmatprep.mubr.bf16.mxu0 0
    %3719 = vmatmul.mubr.bf16.gmra.mrb[0].mxu0 %v3643
    %v3720 = vpop.f32.mrb[0].mxu0
    %v3721 = vadd.f32 0.0, %v3720
    %v3722 = vpop.f32.mrb[0].mxu0
    %v3723 = vpop.f32.mrb[0].mxu0
    %v3724 = vadd.f32 0.0, %v3723
    %v3725 = vpop.f32.mrb[0].mxu0
    %3726 = vmatprep.mubr.bf16.mxu0 0
    %3727 = vmatmul.mubr.bf16.gmra.mrb[0].mxu0 %v3646
    %v3728 = vpop.f32.mrb[0].mxu0
    %v3729 = vadd.f32 0.0, %v3728
    %v3730 = vpop.f32.mrb[0].mxu0
    %v3731 = vpop.f32.mrb[0].mxu0
    %v3732 = vadd.f32 0.0, %v3731
    %v3733 = vpop.f32.mrb[0].mxu0
    %3734 = vmatprep.mubr.bf16.mxu0 0
    %3735 = vmatmul.mubr.bf16.gmra.mrb[0].mxu0 %v3649
    %v3736 = vpop.f32.mrb[0].mxu0
    %v3737 = vadd.f32 0.0, %v3736
    %v3738 = vpop.f32.mrb[0].mxu0
    %v3739 = vpop.f32.mrb[0].mxu0
    %v3740 = vadd.f32 0.0, %v3739
    %v3741 = vpop.f32.mrb[0].mxu0
    %3742 = vmatprep.mubr.bf16.mxu0 0
    %3743 = vmatmul.mubr.bf16.gmra.mrb[0].mxu0 %v3652
    %v3744 = vpop.f32.mrb[0].mxu0
    %v3745 = vadd.f32 0.0, %v3744
    %v3746 = vpop.f32.mrb[0].mxu0
    %v3747 = vpop.f32.mrb[0].mxu0
    %v3748 = vadd.f32 0.0, %v3747
    %v3749 = vpop.f32.mrb[0].mxu0
    %3750 = vdwg.mxu0
    %v3759 = vunpack.c.l.b16 %v3581
    %v3760 = vunpack.c.l.b16 %v3582
    %v3761 = vunpack.c.l.b16 %v3583
    %v3762 = vunpack.c.l.b16 %v3584
    %v3763 = vunpack.c.l.b16 %v3585
    %v3764 = vunpack.c.l.b16 %v3586
    %v3765 = vunpack.c.l.b16 %v3587
    %v3766 = vunpack.c.l.b16 %v3588
    %v3767 = vpack.c.b16 %v3760, %v3759
    %v3768 = vpack.c.b16 %v3762, %v3761
    %v3769 = vpack.c.b16 %v3764, %v3763
    %v3770 = vpack.c.b16 %v3766, %v3765
    %v3776 = vsel %vm703, %v3573, 0
    %v3779 = vsel %vm703, %v3574, 0
    %v3782 = vsel %vm703, %v3575, 0
    %v3785 = vsel %vm703, %v3576, 0
    %v3788 = vsel %vm703, %v3577, 0
    %v3791 = vsel %vm703, %v3578, 0
    %v3794 = vsel %vm703, %v3579, 0
    %v3797 = vsel %vm703, %v3580, 0
    %3799 = vmatprep.subr.bf16.mxu0 0
    %3800 = vmatpush1.bf16.msra.mxu0 %v3767
    %3801 = vmatprep.subr.bf16.mxu0 0
    %3802 = vmatpush1.bf16.msra.mxu0 %v3768
    %3803 = vmatprep.subr.bf16.mxu0 0
    %3804 = vmatpush1.bf16.msra.mxu0 %v3769
    %3805 = vmatprep.subr.bf16.mxu0 0
    %3806 = vmatpush1.bf16.msra.mxu0 %v3770
    %3807 = vmatprep.subr.bf16.mxu0 0
    %3808 = vmatpush1.bf16.msra.mxu0 0
    %3809 = vmatprep.subr.bf16.mxu0 0
    %3810 = vmatpush1.bf16.msra.mxu0 0
    %3811 = vmatprep.subr.bf16.mxu0 0
    %3812 = vmatpush1.bf16.msra.mxu0 0
    %3813 = vmatprep.subr.bf16.mxu0 0
    %3814 = vmatpush1.bf16.msra.mxu0 0
    %3815 = vmatprep.subr.bf16.mxu0 0
    %3816 = vmatpush1.bf16.msra.mxu0 0
    %3817 = vmatprep.subr.bf16.mxu0 0
    %3818 = vmatpush1.bf16.msra.mxu0 0
    %3819 = vmatprep.subr.bf16.mxu0 0
    %3820 = vmatpush1.bf16.msra.mxu0 0
    %3821 = vmatprep.subr.bf16.mxu0 0
    %3822 = vmatpush1.bf16.msra.mxu0 0
    %3823 = vmatprep.subr.bf16.mxu0 0
    %3824 = vmatpush1.bf16.msra.mxu0 0
    %3825 = vmatprep.subr.bf16.mxu0 0
    %3826 = vmatpush1.bf16.msra.mxu0 0
    %3827 = vmatprep.subr.bf16.mxu0 0
    %3828 = vmatpush1.bf16.msra.mxu0 0
    %3829 = vmatprep.subr.bf16.mxu0 0
    %3830 = vmatpush1.bf16.msra.mxu0 0
    %3831 = vmatprep.mubr.bf16.mxu0 0
    %3832 = vmatmul.mubr.bf16.gmra.mrb[0].mxu0 %v3776
    %v3833 = vpop.f32.mrb[0].mxu0
    %v3834 = vadd.f32 %v3689, %v3833
    %v3835 = vpop.f32.mrb[0].mxu0
    %v3836 = vpop.f32.mrb[0].mxu0
    %v3837 = vadd.f32 %v3692, %v3836
    %v3838 = vpop.f32.mrb[0].mxu0
    %3839 = vmatprep.mubr.bf16.mxu0 0
    %3840 = vmatmul.mubr.bf16.gmra.mrb[0].mxu0 %v3779
    %v3841 = vpop.f32.mrb[0].mxu0
    %v3842 = vadd.f32 %v3697, %v3841
    %v3843 = vpop.f32.mrb[0].mxu0
    %v3844 = vpop.f32.mrb[0].mxu0
    %v3845 = vadd.f32 %v3700, %v3844
    %v3846 = vpop.f32.mrb[0].mxu0
    %3847 = vmatprep.mubr.bf16.mxu0 0
    %3848 = vmatmul.mubr.bf16.gmra.mrb[0].mxu0 %v3782
    %v3849 = vpop.f32.mrb[0].mxu0
    %v3850 = vadd.f32 %v3705, %v3849
    %v3851 = vpop.f32.mrb[0].mxu0
    %v3852 = vpop.f32.mrb[0].mxu0
    %v3853 = vadd.f32 %v3708, %v3852
    %v3854 = vpop.f32.mrb[0].mxu0
    %3855 = vmatprep.mubr.bf16.mxu0 0
    %3856 = vmatmul.mubr.bf16.gmra.mrb[0].mxu0 %v3785
    %v3857 = vpop.f32.mrb[0].mxu0
    %v3858 = vadd.f32 %v3713, %v3857
    %v3859 = vpop.f32.mrb[0].mxu0
    %v3860 = vpop.f32.mrb[0].mxu0
    %v3861 = vadd.f32 %v3716, %v3860
    %v3862 = vpop.f32.mrb[0].mxu0
    %3863 = vmatprep.mubr.bf16.mxu0 0
    %3864 = vmatmul.mubr.bf16.gmra.mrb[0].mxu0 %v3788
    %v3865 = vpop.f32.mrb[0].mxu0
    %v3866 = vadd.f32 %v3721, %v3865
    %v3867 = vpop.f32.mrb[0].mxu0
    %v3868 = vpop.f32.mrb[0].mxu0
    %v3869 = vadd.f32 %v3724, %v3868
    %v3870 = vpop.f32.mrb[0].mxu0
    %3871 = vmatprep.mubr.bf16.mxu0 0
    %3872 = vmatmul.mubr.bf16.gmra.mrb[0].mxu0 %v3791
    %v3873 = vpop.f32.mrb[0].mxu0
    %v3874 = vadd.f32 %v3729, %v3873
    %v3875 = vpop.f32.mrb[0].mxu0
    %v3876 = vpop.f32.mrb[0].mxu0
    %v3877 = vadd.f32 %v3732, %v3876
    %v3878 = vpop.f32.mrb[0].mxu0
    %3879 = vmatprep.mubr.bf16.mxu0 0
    %3880 = vmatmul.mubr.bf16.gmra.mrb[0].mxu0 %v3794
    %v3881 = vpop.f32.mrb[0].mxu0
    %v3882 = vadd.f32 %v3737, %v3881
    %v3883 = vpop.f32.mrb[0].mxu0
    %v3884 = vpop.f32.mrb[0].mxu0
    %v3885 = vadd.f32 %v3740, %v3884
    %v3886 = vpop.f32.mrb[0].mxu0
    %3887 = vmatprep.mubr.bf16.mxu0 0
    %3888 = vmatmul.mubr.bf16.gmra.mrb[0].mxu0 %v3797
    %v3889 = vpop.f32.mrb[0].mxu0
    %v3890 = vadd.f32 %v3745, %v3889
    %v3891 = vpop.f32.mrb[0].mxu0
    %v3892 = vpop.f32.mrb[0].mxu0
    %v3893 = vadd.f32 %v3748, %v3892
    %v3894 = vpop.f32.mrb[0].mxu0
    %3895 = vdwg.mxu0
    %v3896 = vld [vmem:[%s9 + $0x9] sm:$0x1]
    %v3897 = vlaneseq
    %v3898 = vshrl.u32 %v3897, 7
    %v3899 = vsub.s32 0, %v3898
    %v3900 = vrot.slane %v3896, %v3899
    %v3901 = vadd.f32 %v3834, %v3900
    %v3902 = vadd.f32 %v3837, %v3900
    %v3903 = vadd.f32 %v3842, %v3900
    %v3904 = vadd.f32 %v3845, %v3900
    %v3905 = vadd.f32 %v3850, %v3900
    %v3906 = vadd.f32 %v3853, %v3900
    %v3907 = vadd.f32 %v3858, %v3900
    %v3908 = vadd.f32 %v3861, %v3900
    %v3909 = vadd.f32 %v3866, %v3900
    %v3910 = vadd.f32 %v3869, %v3900
    %v3911 = vadd.f32 %v3874, %v3900
    %v3912 = vadd.f32 %v3877, %v3900
    %v3913 = vadd.f32 %v3882, %v3900
    %v3914 = vadd.f32 %v3885, %v3900
    %v3915 = vadd.f32 %v3890, %v3900
    %v3916 = vadd.f32 %v3893, %v3900
    %v3917 = vxor.u32 %v3901, 2147483648
    %v3918 = vxor.u32 %v3902, 2147483648
    %v3919 = vxor.u32 %v3903, 2147483648
    %v3920 = vxor.u32 %v3904, 2147483648
    %v3921 = vxor.u32 %v3905, 2147483648
    %v3922 = vxor.u32 %v3906, 2147483648
    %v3923 = vxor.u32 %v3907, 2147483648
    %v3924 = vxor.u32 %v3908, 2147483648
    %v3925 = vxor.u32 %v3909, 2147483648
    %v3926 = vxor.u32 %v3910, 2147483648
    %v3927 = vxor.u32 %v3911, 2147483648
    %v3928 = vxor.u32 %v3912, 2147483648
    %v3929 = vxor.u32 %v3913, 2147483648
    %v3930 = vxor.u32 %v3914, 2147483648
    %v3931 = vxor.u32 %v3915, 2147483648
    %v3932 = vxor.u32 %v3916, 2147483648
    %v3933 = vmul.f32 %v3917, 1.442695
    %v3934 = vpow.pop %v3933
    %v3935 = vmul.f32 %v3918, 1.442695
    %v3936 = vpow.pop %v3935
    %v3937 = vmul.f32 %v3919, 1.442695
    %v3938 = vpow.pop %v3937
    %v3939 = vmul.f32 %v3920, 1.442695
    %v3940 = vpow.pop %v3939
    %v3941 = vmul.f32 %v3921, 1.442695
    %v3942 = vpow.pop %v3941
    %v3943 = vmul.f32 %v3922, 1.442695
    %v3944 = vpow.pop %v3943
    %v3945 = vmul.f32 %v3923, 1.442695
    %v3946 = vpow.pop %v3945
    %v3947 = vmul.f32 %v3924, 1.442695
    %v3948 = vpow.pop %v3947
    %v3949 = vmul.f32 %v3925, 1.442695
    %v3950 = vpow.pop %v3949
    %v3951 = vmul.f32 %v3926, 1.442695
    %v3952 = vpow.pop %v3951
    %v3953 = vmul.f32 %v3927, 1.442695
    %v3954 = vpow.pop %v3953
    %v3955 = vmul.f32 %v3928, 1.442695
    %v3956 = vpow.pop %v3955
    %v3957 = vmul.f32 %v3929, 1.442695
    %v3958 = vpow.pop %v3957
    %v3959 = vmul.f32 %v3930, 1.442695
    %v3960 = vpow.pop %v3959
    %v3961 = vmul.f32 %v3931, 1.442695
    %v3962 = vpow.pop %v3961
    %v3963 = vmul.f32 %v3932, 1.442695
    %v3964 = vpow.pop %v3963
    %v3965 = vadd.f32 %v3934, 1.0
    %v3966 = vadd.f32 %v3936, 1.0
    %v3967 = vadd.f32 %v3938, 1.0
    %v3968 = vadd.f32 %v3940, 1.0
    %v3969 = vadd.f32 %v3942, 1.0
    %v3970 = vadd.f32 %v3944, 1.0
    %v3971 = vadd.f32 %v3946, 1.0
    %v3972 = vadd.f32 %v3948, 1.0
    %v3973 = vadd.f32 %v3950, 1.0
    %v3974 = vadd.f32 %v3952, 1.0
    %v3975 = vadd.f32 %v3954, 1.0
    %v3976 = vadd.f32 %v3956, 1.0
    %v3977 = vadd.f32 %v3958, 1.0
    %v3978 = vadd.f32 %v3960, 1.0
    %v3979 = vadd.f32 %v3962, 1.0
    %v3980 = vadd.f32 %v3964, 1.0
    %v3981 = vrcp.pop %v3965
    %v3982 = vmul.f32 1.0, %v3981
    %v3983 = vrcp.pop %v3966
    %v3984 = vmul.f32 1.0, %v3983
    %v3985 = vrcp.pop %v3967
    %v3986 = vmul.f32 1.0, %v3985
    %v3987 = vrcp.pop %v3968
    %v3988 = vmul.f32 1.0, %v3987
    %v3989 = vrcp.pop %v3969
    %v3990 = vmul.f32 1.0, %v3989
    %v3991 = vrcp.pop %v3970
    %v3992 = vmul.f32 1.0, %v3991
    %v3993 = vrcp.pop %v3971
    %v3994 = vmul.f32 1.0, %v3993
    %v3995 = vrcp.pop %v3972
    %v3996 = vmul.f32 1.0, %v3995
    %v3997 = vrcp.pop %v3973
    %v3998 = vmul.f32 1.0, %v3997
    %v3999 = vrcp.pop %v3974
    %v4000 = vmul.f32 1.0, %v3999
    %v4001 = vrcp.pop %v3975
    %v4002 = vmul.f32 1.0, %v4001
    %v4003 = vrcp.pop %v3976
    %v4004 = vmul.f32 1.0, %v4003
    %v4005 = vrcp.pop %v3977
    %v4006 = vmul.f32 1.0, %v4005
    %v4007 = vrcp.pop %v3978
    %v4008 = vmul.f32 1.0, %v4007
    %v4009 = vrcp.pop %v3979
    %v4010 = vmul.f32 1.0, %v4009
    %v4011 = vrcp.pop %v3980
    %v4012 = vmul.f32 1.0, %v4011
    %v4013 = vmul.f32 %v3901, %v3982
    %v4014 = vmul.f32 %v3902, %v3984
    %v4015 = vmul.f32 %v3903, %v3986
    %v4016 = vmul.f32 %v3904, %v3988
    %v4017 = vmul.f32 %v3905, %v3990
    %v4018 = vmul.f32 %v3906, %v3992
    %v4019 = vmul.f32 %v3907, %v3994
    %v4020 = vmul.f32 %v3908, %v3996
    %v4021 = vmul.f32 %v3909, %v3998
    %v4022 = vmul.f32 %v3910, %v4000
    %v4023 = vmul.f32 %v3911, %v4002
    %v4024 = vmul.f32 %v3912, %v4004
    %v4025 = vmul.f32 %v3913, %v4006
    %v4026 = vmul.f32 %v3914, %v4008
    %v4027 = vmul.f32 %v3915, %v4010
    %v4028 = vmul.f32 %v3916, %v4012
    %4029 = vst [vmem:[#allocation2] sm:$0xff] %v4013
    %4030 = vst [vmem:[#allocation2 + $0x8] sm:$0xff] %v4014
    %4031 = vst [vmem:[#allocation2 + $0x10] sm:$0xff] %v4015
    %4032 = vst [vmem:[#allocation2 + $0x18] sm:$0xff] %v4016
    %4033 = vst [vmem:[#allocation2 + $0x20] sm:$0xff] %v4017
    %4034 = vst [vmem:[#allocation2 + $0x28] sm:$0xff] %v4018
    %4035 = vst [vmem:[#allocation2 + $0x30] sm:$0xff] %v4019
    %4036 = vst [vmem:[#allocation2 + $0x38] sm:$0xff] %v4020
    %4037 = vst [vmem:[#allocation2 + $0x40] sm:$0xff] %v4021
    %4038 = vst [vmem:[#allocation2 + $0x48] sm:$0xff] %v4022
    %4039 = vst [vmem:[#allocation2 + $0x50] sm:$0xff] %v4023
    %4040 = vst [vmem:[#allocation2 + $0x58] sm:$0xff] %v4024
    %4041 = vst [vmem:[#allocation2 + $0x60] sm:$0xff] %v4025
    %4042 = vst [vmem:[#allocation2 + $0x68] sm:$0xff] %v4026
    %4043 = vst [vmem:[#allocation2 + $0x70] sm:$0xff] %v4027
    %4044 = vst [vmem:[#allocation2 + $0x78] sm:$0xff] %v4028
    // Predicated region
    $region42: #{psa_forward.1} parent=1 // pred_check
      _
    $region43: #{psa_forward.1} parent=1 // pred_check_branch
      %4046 = sbr.rel (0) target = $region45
    $region44: #{psa_forward.1} parent=1 // pred_region
      %s4048 = ssub.s32 2048, 2048
      %4049 = vsyncadd [#allocation3], %s4048
      %s4050 = sshll.u32 [#allocation2], 4
      %s4051 = int_to_ptr.vmem [resolvable:$true] %s4050
      %4056 = dma.vmem_to_hbm [thread:$0]  %s4051, 2048, %s10, [#allocation3], 128, 128, 8
    $region45: #{psa_forward.1} parent=1 // pred_fallthru
      _
    // Predicated region
    $region46: #{psa_forward.1} parent=1 // pred_check
      _
    $region47: #{psa_forward.1} parent=1 // pred_check_branch
      %4058 = sbr.rel (0) target = $region49
    $region48: #{psa_forward.1} parent=1 // pred_region
      %4059 = dma.done [#allocation3], 2048
    $region49: #{psa_forward.1} parent=1 // pred_fallthru
      _
    %4060 = vsyncpa [#allocation3], 1

</llo_original>
